<compile_context>
chip_gen: v7x
topology: tpu7x:2x2x1
jax: 0.10.0
libtpu: 0.0.40
codegen_flags: <defaults>
</compile_context>

<pallas_src>
import math

import jax
import jax.numpy as jnp
import numpy as np
from jax.experimental import pallas as pl
from jax.experimental.pallas import tpu as pltpu

EPS = 1e-5
DILS = (1, 3, 5)          # conv1 / conv2 / conv3 dilations (padding == dilation)


def _adaptive_bins(length, s):
    """PyTorch AdaptiveAvg/MaxPool2d bin boundaries."""
    return [(int(math.floor(i * length / s)),
             int(math.ceil((i + 1) * length / s))) for i in range(s)]


# ------------------------------ Pallas kernel ------------------------------ #
def _make_kernel(*, N, Cin, Wp, HpWp, L, MARG, n_bins, m_valid):
    """Builds the fused MSCAF kernel with all shape constants closed over."""

    def kernel(x_ref, wfull_ref, g_cat_ref, b_cat_ref, wout_ref, g_out_ref,
               b_out_ref, vmask_ref, pmt_ref, pml_ref, icnt_ref, bmask_ref,
               q1w_ref, bq1_ref, q2w_ref, bq2_ref, k1w_ref, k1b_ref,
               k2w_ref, k2b_ref, o_ref, stk_ref):
        vmask = vmask_ref[...]                                    # (1, L) f32
        inv_m = 1.0 / m_valid

        def bn_relu(y, g, b):
            # Train-mode BatchNorm2d (biased batch stats) restricted to valid
            # lanes; masked value computed once, var clamped at 0, EUP rsqrt.
            ym = y * vmask
            s1 = jnp.sum(ym, axis=1, keepdims=True)
            s2 = jnp.sum(ym * y, axis=1, keepdims=True)
            mean = s1 * inv_m
            var = jnp.maximum(s2 * inv_m - mean * mean, 0.0)
            scale = g * jax.lax.rsqrt(var + EPS)
            shift = b - mean * scale
            return jnp.maximum(y * scale + shift, 0.0)

        # --- conv1/conv2/conv3: stack 27 shifted taps once, then ONE GEMM ----
        idx = 0
        for dil in DILS:
            for dh in range(3):
                for dw in range(3):
                    off = MARG + (dh - 1) * dil * Wp + (dw - 1) * dil
                    stk_ref[idx * Cin:(idx + 1) * Cin, :] = x_ref[:, off:off + L]
                    idx += 1
        acc = jnp.dot(wfull_ref[...], stk_ref[...],
                      preferred_element_type=jnp.float32)         # (Cout, L)
        # Each conv owns disjoint output rows (and disjoint K columns), so one
        # BN+ReLU pass over the shared result equals per-conv BN+ReLU + concat.
        cat = bn_relu(acc, g_cat_ref[...], b_cat_ref[...])        # (Cout, L)
        cat_bf = cat.astype(jnp.bfloat16)

        # --- ACA: adaptive AVG pooling as a single GEMM ----------------------
        av_all = jnp.dot(cat_bf, pmt_ref[...],
                         preferred_element_type=jnp.float32) * icnt_ref[...]
        # av_all: (Cout, N*n_bins), column r = b*n_bins + bin

        # --- ACA: q head (max pool per batch on per-batch slices) ------------
        q1w_max = q1w_ref[0:n_bins, :]                            # (n_bins, Hq)
        q1w_avg = q1w_ref[n_bins:2 * n_bins, :]
        qv_cols = []
        for b in range(N):
            cat_b = cat[:, b * HpWp:(b + 1) * HpWp]               # (Cout, HpWp)
            av_b = av_all[:, b * n_bins:(b + 1) * n_bins]         # (Cout, n_bins)
            q1 = jnp.dot(av_b, q1w_avg,
                         preferred_element_type=jnp.float32) + bq1_ref[...]
            for j in range(n_bins):
                row = pml_ref[j:j + 1, :]                         # (1, HpWp)
                # cat >= 0 after ReLU, so masked multiply + max == masked max
                mx = jnp.max(cat_b * row, axis=1, keepdims=True)  # (Cout, 1)
                q1 = q1 + mx * q1w_max[j:j + 1, :]
            q1 = jnp.maximum(q1, 0.0)                             # (Cout, Hq)
            qv_cols.append(jnp.sum(q1 * q2w_ref[...], axis=1, keepdims=True)
                           + bq2_ref[...])                        # (Cout, 1)
        qv_all = jnp.concatenate(qv_cols, axis=1)                 # (Cout, N)

        # --- ACA: k head batched over N (bf16 GEMMs, f32 accumulate) ---------
        k1 = jnp.maximum(
            jnp.dot(k1w_ref[...], qv_all.astype(jnp.bfloat16),
                    preferred_element_type=jnp.float32) + k1b_ref[...], 0.0)
        k2 = jax.nn.sigmoid(
            jnp.dot(k2w_ref[...], k1.astype(jnp.bfloat16),
                    preferred_element_type=jnp.float32) + k2b_ref[...])
        # apply attention once: (1+k2) broadcast to lanes via a (Cout,N)x(N,L)
        # GEMM against the one-hot batch mask, then a single elementwise mul.
        scale_map = jnp.dot((1.0 + k2).astype(jnp.bfloat16), bmask_ref[...],
                            preferred_element_type=jnp.float32)   # (Cout, L)
        aca = cat * scale_map

        # --- 1x1 fuse conv -> BN -> ReLU (Dropout: identity) -----------------
        z = jnp.dot(wout_ref[...], aca.astype(jnp.bfloat16),
                    preferred_element_type=jnp.float32)           # (Cout, L)
        o_ref[...] = bn_relu(z, g_out_ref[...], b_out_ref[...])

    return kernel


# --------------------------------- wrapper --------------------------------- #
def mscaf_forward(x_nchw, params):
    """MSCAF forward (train-mode BN, identity Dropout) via one fused kernel."""
    N, Cin, H, W = x_nchw.shape
    Cout = params["bno_g"].shape[0]
    S = int(math.log2(Cout))
    n_bins = S * S
    Hq = n_bins // 2
    P = max(DILS)                        # one shared zero-pad covers all convs
    Hp, Wp = H + 2 * P, W + 2 * P
    HpWp = Hp * Wp
    Mp = N * HpWp                        # flattened padded positions
    L = ((Mp + 127) // 128) * 128        # lane-dense, 128-aligned flat extent
    MARG = P * Wp + P                    # largest |tap shift| in flat coords

    # ---- constant masks (numpy at trace time -> folded as XLA constants) ---
    valid = np.zeros((N, Hp, Wp), np.float32)
    valid[:, P:P + H, P:P + W] = 1.0
    vmask = np.zeros((1, L), np.float32)
    vmask[0, :Mp] = valid.reshape(Mp)

    hbins, wbins = _adaptive_bins(H, S), _adaptive_bins(W, S)
    counts = [float((h1 - h0) * (w1 - w0))
              for (h0, h1) in hbins for (w0, w1) in wbins]
    # per-image bin masks (local padded coords) for the max pool
    pm_loc = np.zeros((n_bins, Hp, Wp), np.float32)
    for bi, (h0, h1) in enumerate(hbins):
        for bj, (w0, w1) in enumerate(wbins):
            pm_loc[bi * S + bj, P + h0:P + h1, P + w0:P + w1] = 1.0
    pmask_loc = pm_loc.reshape(n_bins, HpWp)
    # transposed (L, N*n_bins) bin mask for the avg-pool GEMM (bf16, 0/1 exact)
    pmask_t = np.zeros((L, N * n_bins), np.float32)
    for b in range(N):
        pmask_t[b * HpWp:(b + 1) * HpWp,
                b * n_bins:(b + 1) * n_bins] = pmask_loc.T
    inv_cnt = np.tile(1.0 / np.asarray(counts, np.float32),
                      N).reshape(1, N * n_bins)
    # one-hot batch mask (bf16) used for the attention-apply GEMM
    bmask = np.zeros((N, L), np.float32)
    for b in range(N):
        bmask[b, b * HpWp:(b + 1) * HpWp] = 1.0

    # ---- input: bf16 channels x zero-padded flattened positions (+ margin) -
    xp = jnp.pad(jnp.transpose(x_nchw, (1, 0, 2, 3)),
                 ((0, 0), (0, 0), (P, P), (P, P)))               # (Cin,N,Hp,Wp)
    x_big = jnp.pad(xp.reshape(Cin, Mp),
                    ((0, 0), (MARG, MARG + (L - Mp)))).astype(jnp.bfloat16)

    # ---- stacked conv weight (Cout, 27*Cin): each conv gets its own row
    # block and its own 9*Cin K-column block (matching the stacked RHS). -----
    row_off = [0, Cout // 2, Cout // 2 + Cout // 4]
    w_full = jnp.zeros((Cout, 27 * Cin), jnp.float32)
    for c, name in enumerate(["conv1_w", "conv2_w", "conv3_w"]):
        w = params[name]
        rc = w.shape[0]
        wt = jnp.transpose(w, (0, 2, 3, 1)).reshape(rc, 9 * Cin)
        w_full = w_full.at[row_off[c]:row_off[c] + rc,
                           c * 9 * Cin:(c + 1) * 9 * Cin].set(wt)
    w_full = w_full.astype(jnp.bfloat16)

    f32, bf16 = jnp.float32, jnp.bfloat16
    g_cat = jnp.concatenate([params["bn1_g"], params["bn2_g"],
                             params["bn3_g"]]).reshape(Cout, 1).astype(f32)
    b_cat = jnp.concatenate([params["bn1_b"], params["bn2_b"],
                             params["bn3_b"]]).reshape(Cout, 1).astype(f32)
    wout = params["out_w"].reshape(Cout, Cout).astype(bf16)
    g_out = params["bno_g"].reshape(Cout, 1).astype(f32)
    b_out = params["bno_b"].reshape(Cout, 1).astype(f32)
    q1w = jnp.transpose(params["q1_w"]).astype(f32)              # (2*S*S, Hq)
    bq1 = params["q1_b"].reshape(1, Hq).astype(f32)
    q2w = params["q2_w"].reshape(1, Hq).astype(f32)
    bq2 = params["q2_b"].reshape(1, 1).astype(f32)
    k1w = params["k1_w"].reshape(Cout // 4, Cout).astype(bf16)
    k1b = params["k1_b"].reshape(Cout // 4, 1).astype(f32)
    k2w = params["k2_w"].reshape(Cout, Cout // 4).astype(bf16)
    k2b = params["k2_b"].reshape(Cout, 1).astype(f32)

    kernel = _make_kernel(N=N, Cin=Cin, Wp=Wp, HpWp=HpWp, L=L, MARG=MARG,
                          n_bins=n_bins, m_valid=float(N * H * W))

    # ---- shape-derived, generation-aware VMEM budget ------------------------
    est = (Cin * (L + 2 * MARG) * 2            # x_big (bf16)
           + 27 * Cin * L * 2                  # stacked-tap scratch (bf16)
           + 6 * Cout * L * 4                  # acc/cat/aca/scale/z/out (f32)
           + L * max(128, N * n_bins) * 2      # pmask_t (bf16, lane-padded)
           + N * L * 2 + n_bins * HpWp * 4     # bmask, pmask_loc
           + (1 << 20))                        # weights / misc headroom
    try:
        cap = pltpu.get_tpu_info().vmem_capacity_bytes
    except Exception:                          # pragma: no cover
        cap = 128 * 1024 * 1024
    vmem_limit = int(min(max(32 * 1024 * 1024, 2 * est),
                         cap - 8 * 1024 * 1024))

    vspec = pl.BlockSpec(memory_space=pltpu.MemorySpace.VMEM)
    out_flat = pl.pallas_call(
        kernel,
        out_shape=jax.ShapeDtypeStruct((Cout, L), jnp.float32),
        in_specs=[vspec] * 20,
        out_specs=vspec,
        scratch_shapes=[pltpu.VMEM((27 * Cin, L), jnp.bfloat16)],
        compiler_params=pltpu.CompilerParams(vmem_limit_bytes=vmem_limit),
    )(x_big, w_full, g_cat, b_cat, wout, g_out, b_out,
      jnp.asarray(vmask), jnp.asarray(pmask_t, bf16), jnp.asarray(pmask_loc),
      jnp.asarray(inv_cnt), jnp.asarray(bmask, bf16),
      q1w, bq1, q2w, bq2, k1w, k1b, k2w, k2b)

    out = out_flat[:, :Mp].reshape(Cout, N, Hp, Wp)[:, :, P:P + H, P:P + W]
    return jnp.transpose(out, (1, 0, 2, 3))                      # (N,Cout,H,W)


# --------------------------------- params ---------------------------------- #
def init_params(key, in_channels, out_channels):
    S = int(math.log2(out_channels))
    Hq = (S * S) // 2
    ks = jax.random.split(key, 20)
    n = jax.random.normal
    it = iter(range(20))

    def bn(kk, c):
        g = 1.0 + 0.1 * n(kk, (c,), jnp.float32)
        b = 0.05 * n(jax.random.fold_in(kk, 1), (c,), jnp.float32)
        return g, b

    p = {}
    p["conv1_w"] = 0.1 * n(ks[next(it)],
                           (out_channels // 2, in_channels, 3, 3), jnp.float32)
    p["bn1_g"], p["bn1_b"] = bn(ks[next(it)], out_channels // 2)
    p["conv2_w"] = 0.1 * n(ks[next(it)],
                           (out_channels // 4, in_channels, 3, 3), jnp.float32)
    p["bn2_g"], p["bn2_b"] = bn(ks[next(it)], out_channels // 4)
    p["conv3_w"] = 0.1 * n(ks[next(it)],
                           (out_channels // 4, in_channels, 3, 3), jnp.float32)
    p["bn3_g"], p["bn3_b"] = bn(ks[next(it)], out_channels // 4)
    # ACA
    p["q1_w"] = 0.3 * n(ks[next(it)], (Hq, 2 * S * S), jnp.float32)
    p["q1_b"] = 0.05 * n(ks[next(it)], (Hq,), jnp.float32)
    p["q2_w"] = 0.3 * n(ks[next(it)], (1, Hq), jnp.float32)
    p["q2_b"] = 0.05 * n(ks[next(it)], (1,), jnp.float32)
    p["k1_w"] = 0.3 * n(ks[next(it)], (out_channels // 4, out_channels),
                        jnp.float32)
    p["k1_b"] = 0.05 * n(ks[next(it)], (out_channels // 4,), jnp.float32)
    p["k2_w"] = 0.3 * n(ks[next(it)], (out_channels, out_channels // 4),
                        jnp.float32)
    p["k2_b"] = 0.05 * n(ks[next(it)], (out_channels,), jnp.float32)
    # 1x1 fuse conv + BN
    p["out_w"] = 0.1 * n(ks[next(it)],
                         (out_channels, out_channels, 1, 1), jnp.float32)
    p["bno_g"], p["bno_b"] = bn(ks[next(it)], out_channels)
    return p


if __name__ == "__main__":
    key = jax.random.PRNGKey(0)
    N, Cin, Cout, H, W = 2, 4, 8, 16, 16
    kx, kp = jax.random.split(key)
    x = jax.random.normal(kx, (N, Cin, H, W), jnp.float32)
    params = init_params(kp, Cin, Cout)

    out = jax.jit(mscaf_forward)(x, params)
    out = jax.block_until_ready(out)
    assert out.shape == (N, Cout, H, W), out.shape
    assert bool(jnp.all(jnp.isfinite(out)))
    print("KERNEL_OK")
</pallas_src>

<mosaic_0001>
module attributes {stable_mosaic.version = 11 : i64} {
  func.func @kernel(%arg0: memref<4x1678xbf16, #tpu.memory_space<vmem>>, %arg1: memref<8x108xbf16, #tpu.memory_space<vmem>>, %arg2: memref<8x1xf32, #tpu.memory_space<vmem>>, %arg3: memref<8x1xf32, #tpu.memory_space<vmem>>, %arg4: memref<8x8xbf16, #tpu.memory_space<vmem>>, %arg5: memref<8x1xf32, #tpu.memory_space<vmem>>, %arg6: memref<8x1xf32, #tpu.memory_space<vmem>>, %arg7: memref<1x1408xf32, #tpu.memory_space<vmem>>, %arg8: memref<1408x18xbf16, #tpu.memory_space<vmem>>, %arg9: memref<9x676xf32, #tpu.memory_space<vmem>>, %arg10: memref<1x18xf32, #tpu.memory_space<vmem>>, %arg11: memref<2x1408xbf16, #tpu.memory_space<vmem>>, %arg12: memref<18x4xf32, #tpu.memory_space<vmem>>, %arg13: memref<1x4xf32, #tpu.memory_space<vmem>>, %arg14: memref<1x4xf32, #tpu.memory_space<vmem>>, %arg15: memref<1x1xf32, #tpu.memory_space<vmem>>, %arg16: memref<2x8xbf16, #tpu.memory_space<vmem>>, %arg17: memref<2x1xf32, #tpu.memory_space<vmem>>, %arg18: memref<8x2xbf16, #tpu.memory_space<vmem>>, %arg19: memref<8x1xf32, #tpu.memory_space<vmem>>, %arg20: memref<8x1408xf32, #tpu.memory_space<vmem>>, %arg21: memref<108x1408xbf16, #tpu.memory_space<vmem>>) attributes {dimension_semantics = [], scalar_prefetch = 0 : i64, scratch_operands = 1 : i64, tpu.core_type = #tpu.core_type<tc>} {
    %c0 = arith.constant 0 : index
    %c0_0 = arith.constant 0 : index
    %0 = vector.load %arg7[%c0, %c0_0] : memref<1x1408xf32, #tpu.memory_space<vmem>>, vector<1x1408xf32>
    %c0_1 = arith.constant 0 : index
    %c108 = arith.constant 108 : index
    %1 = vector.load %arg0[%c0_1, %c108] : memref<4x1678xbf16, #tpu.memory_space<vmem>>, vector<4x1408xbf16>
    %c0_2 = arith.constant 0 : index
    %c0_3 = arith.constant 0 : index
    %2 = vector.load %arg21[%c0_2, %c0_3] : memref<108x1408xbf16, #tpu.memory_space<vmem>>, vector<4x1408xbf16>
    tpu.vector_store %arg21[%c0_2, %c0_3], %1 {strides = array<i32>} : memref<108x1408xbf16, #tpu.memory_space<vmem>>, vector<4x1408xbf16>,
    %c0_4 = arith.constant 0 : index
    %c109 = arith.constant 109 : index
    %3 = vector.load %arg0[%c0_4, %c109] : memref<4x1678xbf16, #tpu.memory_space<vmem>>, vector<4x1408xbf16>
    %c4 = arith.constant 4 : index
    %c0_5 = arith.constant 0 : index
    %4 = vector.load %arg21[%c4, %c0_5] : memref<108x1408xbf16, #tpu.memory_space<vmem>>, vector<4x1408xbf16>
    tpu.vector_store %arg21[%c4, %c0_5], %3 {strides = array<i32>} : memref<108x1408xbf16, #tpu.memory_space<vmem>>, vector<4x1408xbf16>,
    %c0_6 = arith.constant 0 : index
    %c110 = arith.constant 110 : index
    %5 = vector.load %arg0[%c0_6, %c110] : memref<4x1678xbf16, #tpu.memory_space<vmem>>, vector<4x1408xbf16>
    %c8 = arith.constant 8 : index
    %c0_7 = arith.constant 0 : index
    %6 = vector.load %arg21[%c8, %c0_7] : memref<108x1408xbf16, #tpu.memory_space<vmem>>, vector<4x1408xbf16>
    tpu.vector_store %arg21[%c8, %c0_7], %5 {strides = array<i32>} : memref<108x1408xbf16, #tpu.memory_space<vmem>>, vector<4x1408xbf16>,
    %c0_8 = arith.constant 0 : index
    %c134 = arith.constant 134 : index
    %7 = vector.load %arg0[%c0_8, %c134] : memref<4x1678xbf16, #tpu.memory_space<vmem>>, vector<4x1408xbf16>
    %c12 = arith.constant 12 : index
    %c0_9 = arith.constant 0 : index
    %8 = vector.load %arg21[%c12, %c0_9] : memref<108x1408xbf16, #tpu.memory_space<vmem>>, vector<4x1408xbf16>
    tpu.vector_store %arg21[%c12, %c0_9], %7 {strides = array<i32>} : memref<108x1408xbf16, #tpu.memory_space<vmem>>, vector<4x1408xbf16>,
    %c0_10 = arith.constant 0 : index
    %c135 = arith.constant 135 : index
    %9 = vector.load %arg0[%c0_10, %c135] : memref<4x1678xbf16, #tpu.memory_space<vmem>>, vector<4x1408xbf16>
    %c16 = arith.constant 16 : index
    %c0_11 = arith.constant 0 : index
    %10 = vector.load %arg21[%c16, %c0_11] : memref<108x1408xbf16, #tpu.memory_space<vmem>>, vector<4x1408xbf16>
    tpu.vector_store %arg21[%c16, %c0_11], %9 {strides = array<i32>} : memref<108x1408xbf16, #tpu.memory_space<vmem>>, vector<4x1408xbf16>,
    %c0_12 = arith.constant 0 : index
    %c136 = arith.constant 136 : index
    %11 = vector.load %arg0[%c0_12, %c136] : memref<4x1678xbf16, #tpu.memory_space<vmem>>, vector<4x1408xbf16>
    %c20 = arith.constant 20 : index
    %c0_13 = arith.constant 0 : index
    %12 = vector.load %arg21[%c20, %c0_13] : memref<108x1408xbf16, #tpu.memory_space<vmem>>, vector<4x1408xbf16>
    tpu.vector_store %arg21[%c20, %c0_13], %11 {strides = array<i32>} : memref<108x1408xbf16, #tpu.memory_space<vmem>>, vector<4x1408xbf16>,
    %c0_14 = arith.constant 0 : index
    %c160 = arith.constant 160 : index
    %13 = vector.load %arg0[%c0_14, %c160] : memref<4x1678xbf16, #tpu.memory_space<vmem>>, vector<4x1408xbf16>
    %c24 = arith.constant 24 : index
    %c0_15 = arith.constant 0 : index
    %14 = vector.load %arg21[%c24, %c0_15] : memref<108x1408xbf16, #tpu.memory_space<vmem>>, vector<4x1408xbf16>
    tpu.vector_store %arg21[%c24, %c0_15], %13 {strides = array<i32>} : memref<108x1408xbf16, #tpu.memory_space<vmem>>, vector<4x1408xbf16>,
    %c0_16 = arith.constant 0 : index
    %c161 = arith.constant 161 : index
    %15 = vector.load %arg0[%c0_16, %c161] : memref<4x1678xbf16, #tpu.memory_space<vmem>>, vector<4x1408xbf16>
    %c28 = arith.constant 28 : index
    %c0_17 = arith.constant 0 : index
    %16 = vector.load %arg21[%c28, %c0_17] : memref<108x1408xbf16, #tpu.memory_space<vmem>>, vector<4x1408xbf16>
    tpu.vector_store %arg21[%c28, %c0_17], %15 {strides = array<i32>} : memref<108x1408xbf16, #tpu.memory_space<vmem>>, vector<4x1408xbf16>,
    %c0_18 = arith.constant 0 : index
    %c162 = arith.constant 162 : index
    %17 = vector.load %arg0[%c0_18, %c162] : memref<4x1678xbf16, #tpu.memory_space<vmem>>, vector<4x1408xbf16>
    %c32 = arith.constant 32 : index
    %c0_19 = arith.constant 0 : index
    %18 = vector.load %arg21[%c32, %c0_19] : memref<108x1408xbf16, #tpu.memory_space<vmem>>, vector<4x1408xbf16>
    tpu.vector_store %arg21[%c32, %c0_19], %17 {strides = array<i32>} : memref<108x1408xbf16, #tpu.memory_space<vmem>>, vector<4x1408xbf16>,
    %c0_20 = arith.constant 0 : index
    %c54 = arith.constant 54 : index
    %19 = vector.load %arg0[%c0_20, %c54] : memref<4x1678xbf16, #tpu.memory_space<vmem>>, vector<4x1408xbf16>
    %c36 = arith.constant 36 : index
    %c0_21 = arith.constant 0 : index
    %20 = vector.load %arg21[%c36, %c0_21] : memref<108x1408xbf16, #tpu.memory_space<vmem>>, vector<4x1408xbf16>
    tpu.vector_store %arg21[%c36, %c0_21], %19 {strides = array<i32>} : memref<108x1408xbf16, #tpu.memory_space<vmem>>, vector<4x1408xbf16>,
    %c0_22 = arith.constant 0 : index
    %c57 = arith.constant 57 : index
    %21 = vector.load %arg0[%c0_22, %c57] : memref<4x1678xbf16, #tpu.memory_space<vmem>>, vector<4x1408xbf16>
    %c40 = arith.constant 40 : index
    %c0_23 = arith.constant 0 : index
    %22 = vector.load %arg21[%c40, %c0_23] : memref<108x1408xbf16, #tpu.memory_space<vmem>>, vector<4x1408xbf16>
    tpu.vector_store %arg21[%c40, %c0_23], %21 {strides = array<i32>} : memref<108x1408xbf16, #tpu.memory_space<vmem>>, vector<4x1408xbf16>,
    %c0_24 = arith.constant 0 : index
    %c60 = arith.constant 60 : index
    %23 = vector.load %arg0[%c0_24, %c60] : memref<4x1678xbf16, #tpu.memory_space<vmem>>, vector<4x1408xbf16>
    %c44 = arith.constant 44 : index
    %c0_25 = arith.constant 0 : index
    %24 = vector.load %arg21[%c44, %c0_25] : memref<108x1408xbf16, #tpu.memory_space<vmem>>, vector<4x1408xbf16>
    tpu.vector_store %arg21[%c44, %c0_25], %23 {strides = array<i32>} : memref<108x1408xbf16, #tpu.memory_space<vmem>>, vector<4x1408xbf16>,
    %c0_26 = arith.constant 0 : index
    %c132 = arith.constant 132 : index
    %25 = vector.load %arg0[%c0_26, %c132] : memref<4x1678xbf16, #tpu.memory_space<vmem>>, vector<4x1408xbf16>
    %c48 = arith.constant 48 : index
    %c0_27 = arith.constant 0 : index
    %26 = vector.load %arg21[%c48, %c0_27] : memref<108x1408xbf16, #tpu.memory_space<vmem>>, vector<4x1408xbf16>
    tpu.vector_store %arg21[%c48, %c0_27], %25 {strides = array<i32>} : memref<108x1408xbf16, #tpu.memory_space<vmem>>, vector<4x1408xbf16>,
    %c0_28 = arith.constant 0 : index
    %c135_29 = arith.constant 135 : index
    %27 = vector.load %arg0[%c0_28, %c135_29] : memref<4x1678xbf16, #tpu.memory_space<vmem>>, vector<4x1408xbf16>
    %c52 = arith.constant 52 : index
    %c0_30 = arith.constant 0 : index
    %28 = vector.load %arg21[%c52, %c0_30] : memref<108x1408xbf16, #tpu.memory_space<vmem>>, vector<4x1408xbf16>
    tpu.vector_store %arg21[%c52, %c0_30], %27 {strides = array<i32>} : memref<108x1408xbf16, #tpu.memory_space<vmem>>, vector<4x1408xbf16>,
    %c0_31 = arith.constant 0 : index
    %c138 = arith.constant 138 : index
    %29 = vector.load %arg0[%c0_31, %c138] : memref<4x1678xbf16, #tpu.memory_space<vmem>>, vector<4x1408xbf16>
    %c56 = arith.constant 56 : index
    %c0_32 = arith.constant 0 : index
    %30 = vector.load %arg21[%c56, %c0_32] : memref<108x1408xbf16, #tpu.memory_space<vmem>>, vector<4x1408xbf16>
    tpu.vector_store %arg21[%c56, %c0_32], %29 {strides = array<i32>} : memref<108x1408xbf16, #tpu.memory_space<vmem>>, vector<4x1408xbf16>,
    %c0_33 = arith.constant 0 : index
    %c210 = arith.constant 210 : index
    %31 = vector.load %arg0[%c0_33, %c210] : memref<4x1678xbf16, #tpu.memory_space<vmem>>, vector<4x1408xbf16>
    %c60_34 = arith.constant 60 : index
    %c0_35 = arith.constant 0 : index
    %32 = vector.load %arg21[%c60_34, %c0_35] : memref<108x1408xbf16, #tpu.memory_space<vmem>>, vector<4x1408xbf16>
    tpu.vector_store %arg21[%c60_34, %c0_35], %31 {strides = array<i32>} : memref<108x1408xbf16, #tpu.memory_space<vmem>>, vector<4x1408xbf16>,
    %c0_36 = arith.constant 0 : index
    %c213 = arith.constant 213 : index
    %33 = vector.load %arg0[%c0_36, %c213] : memref<4x1678xbf16, #tpu.memory_space<vmem>>, vector<4x1408xbf16>
    %c64 = arith.constant 64 : index
    %c0_37 = arith.constant 0 : index
    %34 = vector.load %arg21[%c64, %c0_37] : memref<108x1408xbf16, #tpu.memory_space<vmem>>, vector<4x1408xbf16>
    tpu.vector_store %arg21[%c64, %c0_37], %33 {strides = array<i32>} : memref<108x1408xbf16, #tpu.memory_space<vmem>>, vector<4x1408xbf16>,
    %c0_38 = arith.constant 0 : index
    %c216 = arith.constant 216 : index
    %35 = vector.load %arg0[%c0_38, %c216] : memref<4x1678xbf16, #tpu.memory_space<vmem>>, vector<4x1408xbf16>
    %c68 = arith.constant 68 : index
    %c0_39 = arith.constant 0 : index
    %36 = vector.load %arg21[%c68, %c0_39] : memref<108x1408xbf16, #tpu.memory_space<vmem>>, vector<4x1408xbf16>
    tpu.vector_store %arg21[%c68, %c0_39], %35 {strides = array<i32>} : memref<108x1408xbf16, #tpu.memory_space<vmem>>, vector<4x1408xbf16>,
    %c0_40 = arith.constant 0 : index
    %c0_41 = arith.constant 0 : index
    %37 = vector.load %arg0[%c0_40, %c0_41] : memref<4x1678xbf16, #tpu.memory_space<vmem>>, vector<4x1408xbf16>
    %c72 = arith.constant 72 : index
    %c0_42 = arith.constant 0 : index
    %38 = vector.load %arg21[%c72, %c0_42] : memref<108x1408xbf16, #tpu.memory_space<vmem>>, vector<4x1408xbf16>
    tpu.vector_store %arg21[%c72, %c0_42], %37 {strides = array<i32>} : memref<108x1408xbf16, #tpu.memory_space<vmem>>, vector<4x1408xbf16>,
    %c0_43 = arith.constant 0 : index
    %c5 = arith.constant 5 : index
    %39 = vector.load %arg0[%c0_43, %c5] : memref<4x1678xbf16, #tpu.memory_space<vmem>>, vector<4x1408xbf16>
    %c76 = arith.constant 76 : index
    %c0_44 = arith.constant 0 : index
    %40 = vector.load %arg21[%c76, %c0_44] : memref<108x1408xbf16, #tpu.memory_space<vmem>>, vector<4x1408xbf16>
    tpu.vector_store %arg21[%c76, %c0_44], %39 {strides = array<i32>} : memref<108x1408xbf16, #tpu.memory_space<vmem>>, vector<4x1408xbf16>,
    %c0_45 = arith.constant 0 : index
    %c10 = arith.constant 10 : index
    %41 = vector.load %arg0[%c0_45, %c10] : memref<4x1678xbf16, #tpu.memory_space<vmem>>, vector<4x1408xbf16>
    %c80 = arith.constant 80 : index
    %c0_46 = arith.constant 0 : index
    %42 = vector.load %arg21[%c80, %c0_46] : memref<108x1408xbf16, #tpu.memory_space<vmem>>, vector<4x1408xbf16>
    tpu.vector_store %arg21[%c80, %c0_46], %41 {strides = array<i32>} : memref<108x1408xbf16, #tpu.memory_space<vmem>>, vector<4x1408xbf16>,
    %c0_47 = arith.constant 0 : index
    %c130 = arith.constant 130 : index
    %43 = vector.load %arg0[%c0_47, %c130] : memref<4x1678xbf16, #tpu.memory_space<vmem>>, vector<4x1408xbf16>
    %c84 = arith.constant 84 : index
    %c0_48 = arith.constant 0 : index
    %44 = vector.load %arg21[%c84, %c0_48] : memref<108x1408xbf16, #tpu.memory_space<vmem>>, vector<4x1408xbf16>
    tpu.vector_store %arg21[%c84, %c0_48], %43 {strides = array<i32>} : memref<108x1408xbf16, #tpu.memory_space<vmem>>, vector<4x1408xbf16>,
    %c0_49 = arith.constant 0 : index
    %c135_50 = arith.constant 135 : index
    %45 = vector.load %arg0[%c0_49, %c135_50] : memref<4x1678xbf16, #tpu.memory_space<vmem>>, vector<4x1408xbf16>
    %c88 = arith.constant 88 : index
    %c0_51 = arith.constant 0 : index
    %46 = vector.load %arg21[%c88, %c0_51] : memref<108x1408xbf16, #tpu.memory_space<vmem>>, vector<4x1408xbf16>
    tpu.vector_store %arg21[%c88, %c0_51], %45 {strides = array<i32>} : memref<108x1408xbf16, #tpu.memory_space<vmem>>, vector<4x1408xbf16>,
    %c0_52 = arith.constant 0 : index
    %c140 = arith.constant 140 : index
    %47 = vector.load %arg0[%c0_52, %c140] : memref<4x1678xbf16, #tpu.memory_space<vmem>>, vector<4x1408xbf16>
    %c92 = arith.constant 92 : index
    %c0_53 = arith.constant 0 : index
    %48 = vector.load %arg21[%c92, %c0_53] : memref<108x1408xbf16, #tpu.memory_space<vmem>>, vector<4x1408xbf16>
    tpu.vector_store %arg21[%c92, %c0_53], %47 {strides = array<i32>} : memref<108x1408xbf16, #tpu.memory_space<vmem>>, vector<4x1408xbf16>,
    %c0_54 = arith.constant 0 : index
    %c260 = arith.constant 260 : index
    %49 = vector.load %arg0[%c0_54, %c260] : memref<4x1678xbf16, #tpu.memory_space<vmem>>, vector<4x1408xbf16>
    %c96 = arith.constant 96 : index
    %c0_55 = arith.constant 0 : index
    %50 = vector.load %arg21[%c96, %c0_55] : memref<108x1408xbf16, #tpu.memory_space<vmem>>, vector<4x1408xbf16>
    tpu.vector_store %arg21[%c96, %c0_55], %49 {strides = array<i32>} : memref<108x1408xbf16, #tpu.memory_space<vmem>>, vector<4x1408xbf16>,
    %c0_56 = arith.constant 0 : index
    %c265 = arith.constant 265 : index
    %51 = vector.load %arg0[%c0_56, %c265] : memref<4x1678xbf16, #tpu.memory_space<vmem>>, vector<4x1408xbf16>
    %c100 = arith.constant 100 : index
    %c0_57 = arith.constant 0 : index
    %52 = vector.load %arg21[%c100, %c0_57] : memref<108x1408xbf16, #tpu.memory_space<vmem>>, vector<4x1408xbf16>
    tpu.vector_store %arg21[%c100, %c0_57], %51 {strides = array<i32>} : memref<108x1408xbf16, #tpu.memory_space<vmem>>, vector<4x1408xbf16>,
    %c0_58 = arith.constant 0 : index
    %c270 = arith.constant 270 : index
    %53 = vector.load %arg0[%c0_58, %c270] : memref<4x1678xbf16, #tpu.memory_space<vmem>>, vector<4x1408xbf16>
    %c104 = arith.constant 104 : index
    %c0_59 = arith.constant 0 : index
    %54 = vector.load %arg21[%c104, %c0_59] : memref<108x1408xbf16, #tpu.memory_space<vmem>>, vector<4x1408xbf16>
    tpu.vector_store %arg21[%c104, %c0_59], %53 {strides = array<i32>} : memref<108x1408xbf16, #tpu.memory_space<vmem>>, vector<4x1408xbf16>,
    %c0_60 = arith.constant 0 : index
    %c0_61 = arith.constant 0 : index
    %55 = vector.load %arg1[%c0_60, %c0_61] : memref<8x108xbf16, #tpu.memory_space<vmem>>, vector<8x108xbf16>
    %c0_62 = arith.constant 0 : index
    %c0_63 = arith.constant 0 : index
    %56 = vector.load %arg21[%c0_62, %c0_63] : memref<108x1408xbf16, #tpu.memory_space<vmem>>, vector<108x1408xbf16>
    %cst = arith.constant dense<0.000000e+00> : vector<8x1408xf32>
    %57 = tpu.matmul %55, %56, %cst {dimension_numbers = #tpu.dot_dimension_numbers<[1], [0], [0], [1], [0, 0, 1, 1], [], []>} : vector<8x108xbf16>, vector<108x1408xbf16>, vector<8x1408xf32> -> vector<8x1408xf32>
    %c0_64 = arith.constant 0 : index
    %c0_65 = arith.constant 0 : index
    %58 = vector.load %arg2[%c0_64, %c0_65] : memref<8x1xf32, #tpu.memory_space<vmem>>, vector<8x1xf32>
    %c0_66 = arith.constant 0 : index
    %c0_67 = arith.constant 0 : index
    %59 = vector.load %arg3[%c0_66, %c0_67] : memref<8x1xf32, #tpu.memory_space<vmem>>, vector<8x1xf32>
    %60 = vector.broadcast %0 : vector<1x1408xf32> to vector<8x1408xf32>
    %61 = arith.mulf %57, %60 : vector<8x1408xf32>
    %cst_68 = arith.constant dense<0.000000e+00> : vector<8xf32>
    %62 = vector.multi_reduction <add>, %61, %cst_68 [1] : vector<8x1408xf32> to vector<8xf32>
    %63 = vector.shape_cast %62 : vector<8xf32> to vector<8x1xf32>
    %64 = arith.mulf %61, %57 : vector<8x1408xf32>
    %cst_69 = arith.constant dense<0.000000e+00> : vector<8xf32>
    %65 = vector.multi_reduction <add>, %64, %cst_69 [1] : vector<8x1408xf32> to vector<8xf32>
    %66 = vector.shape_cast %65 : vector<8xf32> to vector<8x1xf32>
    %cst_70 = arith.constant 0.001953125 : f32
    %67 = vector.broadcast %cst_70 : f32 to vector<8x1xf32>
    %68 = arith.mulf %63, %67 : vector<8x1xf32>
    %cst_71 = arith.constant 0.001953125 : f32
    %69 = vector.broadcast %cst_71 : f32 to vector<8x1xf32>
    %70 = arith.mulf %66, %69 : vector<8x1xf32>
    %71 = arith.mulf %68, %68 : vector<8x1xf32>
    %72 = arith.subf %70, %71 : vector<8x1xf32>
    %cst_72 = arith.constant 0.000000e+00 : f32
    %73 = vector.broadcast %cst_72 : f32 to vector<8x1xf32>
    %74 = arith.maximumf %72, %73 : vector<8x1xf32>
    %cst_73 = arith.constant 9.99999974E-6 : f32
    %75 = vector.broadcast %cst_73 : f32 to vector<8x1xf32>
    %76 = arith.addf %74, %75 : vector<8x1xf32>
    %77 = math.rsqrt %76 : vector<8x1xf32>
    %78 = arith.mulf %58, %77 : vector<8x1xf32>
    %79 = arith.mulf %68, %78 : vector<8x1xf32>
    %80 = arith.subf %59, %79 : vector<8x1xf32>
    %81 = vector.broadcast %78 : vector<8x1xf32> to vector<8x1408xf32>
    %82 = arith.mulf %57, %81 : vector<8x1408xf32>
    %83 = vector.broadcast %80 : vector<8x1xf32> to vector<8x1408xf32>
    %84 = arith.addf %82, %83 : vector<8x1408xf32>
    %cst_74 = arith.constant 0.000000e+00 : f32
    %85 = vector.broadcast %cst_74 : f32 to vector<8x1408xf32>
    %86 = arith.maximumf %84, %85 : vector<8x1408xf32>
    %87 = arith.truncf %86 : vector<8x1408xf32> to vector<8x1408xbf16>
    %c0_75 = arith.constant 0 : index
    %c0_76 = arith.constant 0 : index
    %88 = vector.load %arg8[%c0_75, %c0_76] : memref<1408x18xbf16, #tpu.memory_space<vmem>>, vector<1408x18xbf16>
    %cst_77 = arith.constant dense<0.000000e+00> : vector<8x18xf32>
    %89 = tpu.matmul %87, %88, %cst_77 {dimension_numbers = #tpu.dot_dimension_numbers<[1], [0], [0], [1], [0, 0, 1, 1], [], []>} : vector<8x1408xbf16>, vector<1408x18xbf16>, vector<8x18xf32> -> vector<8x18xf32>
    %c0_78 = arith.constant 0 : index
    %c0_79 = arith.constant 0 : index
    %90 = vector.load %arg10[%c0_78, %c0_79] : memref<1x18xf32, #tpu.memory_space<vmem>>, vector<1x18xf32>
    %91 = vector.broadcast %90 : vector<1x18xf32> to vector<8x18xf32>
    %92 = arith.mulf %89, %91 : vector<8x18xf32>
    %c0_80 = arith.constant 0 : index
    %c0_81 = arith.constant 0 : index
    %93 = vector.load %arg12[%c0_80, %c0_81] : memref<18x4xf32, #tpu.memory_space<vmem>>, vector<9x4xf32>
    %c9 = arith.constant 9 : index
    %c0_82 = arith.constant 0 : index
    %94 = vector.load %arg12[%c9, %c0_82] : memref<18x4xf32, #tpu.memory_space<vmem>>, vector<9x4xf32>
    %95 = vector.extract_strided_slice %86 {offsets = [0, 0], sizes = [8, 676], strides = [1, 1]} : vector<8x1408xf32> to vector<8x676xf32>
    %96 = vector.extract_strided_slice %92 {offsets = [0, 0], sizes = [8, 9], strides = [1, 1]} : vector<8x18xf32> to vector<8x9xf32>
    %cst_83 = arith.constant dense<0.000000e+00> : vector<8x4xf32>
    %97 = tpu.matmul %96, %94, %cst_83 {dimension_numbers = #tpu.dot_dimension_numbers<[1], [0], [0], [1], [0, 0, 1, 1], [], []>} : vector<8x9xf32>, vector<9x4xf32>, vector<8x4xf32> -> vector<8x4xf32>
    %c0_84 = arith.constant 0 : index
    %c0_85 = arith.constant 0 : index
    %98 = vector.load %arg13[%c0_84, %c0_85] : memref<1x4xf32, #tpu.memory_space<vmem>>, vector<1x4xf32>
    %99 = vector.broadcast %98 : vector<1x4xf32> to vector<8x4xf32>
    %100 = arith.addf %97, %99 : vector<8x4xf32>
    %c0_86 = arith.constant 0 : index
    %c0_87 = arith.constant 0 : index
    %101 = vector.load %arg9[%c0_86, %c0_87] : memref<9x676xf32, #tpu.memory_space<vmem>>, vector<1x676xf32>
    %102 = vector.broadcast %101 : vector<1x676xf32> to vector<8x676xf32>
    %103 = arith.mulf %95, %102 : vector<8x676xf32>
    %cst_88 = arith.constant dense<0xFF800000> : vector<8xf32>
    %104 = vector.multi_reduction <maximumf>, %103, %cst_88 [1] : vector<8x676xf32> to vector<8xf32>
    %105 = vector.shape_cast %104 : vector<8xf32> to vector<8x1xf32>
    %106 = vector.extract_strided_slice %93 {offsets = [0, 0], sizes = [1, 4], strides = [1, 1]} : vector<9x4xf32> to vector<1x4xf32>
    %107 = vector.broadcast %105 : vector<8x1xf32> to vector<8x4xf32>
    %108 = vector.broadcast %106 : vector<1x4xf32> to vector<8x4xf32>
    %109 = arith.mulf %107, %108 : vector<8x4xf32>
    %110 = arith.addf %100, %109 : vector<8x4xf32>
    %c1 = arith.constant 1 : index
    %c0_89 = arith.constant 0 : index
    %111 = vector.load %arg9[%c1, %c0_89] : memref<9x676xf32, #tpu.memory_space<vmem>>, vector<1x676xf32>
    %112 = vector.broadcast %111 : vector<1x676xf32> to vector<8x676xf32>
    %113 = arith.mulf %95, %112 : vector<8x676xf32>
    %cst_90 = arith.constant dense<0xFF800000> : vector<8xf32>
    %114 = vector.multi_reduction <maximumf>, %113, %cst_90 [1] : vector<8x676xf32> to vector<8xf32>
    %115 = vector.shape_cast %114 : vector<8xf32> to vector<8x1xf32>
    %116 = vector.extract_strided_slice %93 {offsets = [1, 0], sizes = [1, 4], strides = [1, 1]} : vector<9x4xf32> to vector<1x4xf32>
    %117 = vector.broadcast %115 : vector<8x1xf32> to vector<8x4xf32>
    %118 = vector.broadcast %116 : vector<1x4xf32> to vector<8x4xf32>
    %119 = arith.mulf %117, %118 : vector<8x4xf32>
    %120 = arith.addf %110, %119 : vector<8x4xf32>
    %c2 = arith.constant 2 : index
    %c0_91 = arith.constant 0 : index
    %121 = vector.load %arg9[%c2, %c0_91] : memref<9x676xf32, #tpu.memory_space<vmem>>, vector<1x676xf32>
    %122 = vector.broadcast %121 : vector<1x676xf32> to vector<8x676xf32>
    %123 = arith.mulf %95, %122 : vector<8x676xf32>
    %cst_92 = arith.constant dense<0xFF800000> : vector<8xf32>
    %124 = vector.multi_reduction <maximumf>, %123, %cst_92 [1] : vector<8x676xf32> to vector<8xf32>
    %125 = vector.shape_cast %124 : vector<8xf32> to vector<8x1xf32>
    %126 = vector.extract_strided_slice %93 {offsets = [2, 0], sizes = [1, 4], strides = [1, 1]} : vector<9x4xf32> to vector<1x4xf32>
    %127 = vector.broadcast %125 : vector<8x1xf32> to vector<8x4xf32>
    %128 = vector.broadcast %126 : vector<1x4xf32> to vector<8x4xf32>
    %129 = arith.mulf %127, %128 : vector<8x4xf32>
    %130 = arith.addf %120, %129 : vector<8x4xf32>
    %c3 = arith.constant 3 : index
    %c0_93 = arith.constant 0 : index
    %131 = vector.load %arg9[%c3, %c0_93] : memref<9x676xf32, #tpu.memory_space<vmem>>, vector<1x676xf32>
    %132 = vector.broadcast %131 : vector<1x676xf32> to vector<8x676xf32>
    %133 = arith.mulf %95, %132 : vector<8x676xf32>
    %cst_94 = arith.constant dense<0xFF800000> : vector<8xf32>
    %134 = vector.multi_reduction <maximumf>, %133, %cst_94 [1] : vector<8x676xf32> to vector<8xf32>
    %135 = vector.shape_cast %134 : vector<8xf32> to vector<8x1xf32>
    %136 = vector.extract_strided_slice %93 {offsets = [3, 0], sizes = [1, 4], strides = [1, 1]} : vector<9x4xf32> to vector<1x4xf32>
    %137 = vector.broadcast %135 : vector<8x1xf32> to vector<8x4xf32>
    %138 = vector.broadcast %136 : vector<1x4xf32> to vector<8x4xf32>
    %139 = arith.mulf %137, %138 : vector<8x4xf32>
    %140 = arith.addf %130, %139 : vector<8x4xf32>
    %c4_95 = arith.constant 4 : index
    %c0_96 = arith.constant 0 : index
    %141 = vector.load %arg9[%c4_95, %c0_96] : memref<9x676xf32, #tpu.memory_space<vmem>>, vector<1x676xf32>
    %142 = vector.broadcast %141 : vector<1x676xf32> to vector<8x676xf32>
    %143 = arith.mulf %95, %142 : vector<8x676xf32>
    %cst_97 = arith.constant dense<0xFF800000> : vector<8xf32>
    %144 = vector.multi_reduction <maximumf>, %143, %cst_97 [1] : vector<8x676xf32> to vector<8xf32>
    %145 = vector.shape_cast %144 : vector<8xf32> to vector<8x1xf32>
    %146 = vector.extract_strided_slice %93 {offsets = [4, 0], sizes = [1, 4], strides = [1, 1]} : vector<9x4xf32> to vector<1x4xf32>
    %147 = vector.broadcast %145 : vector<8x1xf32> to vector<8x4xf32>
    %148 = vector.broadcast %146 : vector<1x4xf32> to vector<8x4xf32>
    %149 = arith.mulf %147, %148 : vector<8x4xf32>
    %150 = arith.addf %140, %149 : vector<8x4xf32>
    %c5_98 = arith.constant 5 : index
    %c0_99 = arith.constant 0 : index
    %151 = vector.load %arg9[%c5_98, %c0_99] : memref<9x676xf32, #tpu.memory_space<vmem>>, vector<1x676xf32>
    %152 = vector.broadcast %151 : vector<1x676xf32> to vector<8x676xf32>
    %153 = arith.mulf %95, %152 : vector<8x676xf32>
    %cst_100 = arith.constant dense<0xFF800000> : vector<8xf32>
    %154 = vector.multi_reduction <maximumf>, %153, %cst_100 [1] : vector<8x676xf32> to vector<8xf32>
    %155 = vector.shape_cast %154 : vector<8xf32> to vector<8x1xf32>
    %156 = vector.extract_strided_slice %93 {offsets = [5, 0], sizes = [1, 4], strides = [1, 1]} : vector<9x4xf32> to vector<1x4xf32>
    %157 = vector.broadcast %155 : vector<8x1xf32> to vector<8x4xf32>
    %158 = vector.broadcast %156 : vector<1x4xf32> to vector<8x4xf32>
    %159 = arith.mulf %157, %158 : vector<8x4xf32>
    %160 = arith.addf %150, %159 : vector<8x4xf32>
    %c6 = arith.constant 6 : index
    %c0_101 = arith.constant 0 : index
    %161 = vector.load %arg9[%c6, %c0_101] : memref<9x676xf32, #tpu.memory_space<vmem>>, vector<1x676xf32>
    %162 = vector.broadcast %161 : vector<1x676xf32> to vector<8x676xf32>
    %163 = arith.mulf %95, %162 : vector<8x676xf32>
    %cst_102 = arith.constant dense<0xFF800000> : vector<8xf32>
    %164 = vector.multi_reduction <maximumf>, %163, %cst_102 [1] : vector<8x676xf32> to vector<8xf32>
    %165 = vector.shape_cast %164 : vector<8xf32> to vector<8x1xf32>
    %166 = vector.extract_strided_slice %93 {offsets = [6, 0], sizes = [1, 4], strides = [1, 1]} : vector<9x4xf32> to vector<1x4xf32>
    %167 = vector.broadcast %165 : vector<8x1xf32> to vector<8x4xf32>
    %168 = vector.broadcast %166 : vector<1x4xf32> to vector<8x4xf32>
    %169 = arith.mulf %167, %168 : vector<8x4xf32>
    %170 = arith.addf %160, %169 : vector<8x4xf32>
    %c7 = arith.constant 7 : index
    %c0_103 = arith.constant 0 : index
    %171 = vector.load %arg9[%c7, %c0_103] : memref<9x676xf32, #tpu.memory_space<vmem>>, vector<1x676xf32>
    %172 = vector.broadcast %171 : vector<1x676xf32> to vector<8x676xf32>
    %173 = arith.mulf %95, %172 : vector<8x676xf32>
    %cst_104 = arith.constant dense<0xFF800000> : vector<8xf32>
    %174 = vector.multi_reduction <maximumf>, %173, %cst_104 [1] : vector<8x676xf32> to vector<8xf32>
    %175 = vector.shape_cast %174 : vector<8xf32> to vector<8x1xf32>
    %176 = vector.extract_strided_slice %93 {offsets = [7, 0], sizes = [1, 4], strides = [1, 1]} : vector<9x4xf32> to vector<1x4xf32>
    %177 = vector.broadcast %175 : vector<8x1xf32> to vector<8x4xf32>
    %178 = vector.broadcast %176 : vector<1x4xf32> to vector<8x4xf32>
    %179 = arith.mulf %177, %178 : vector<8x4xf32>
    %180 = arith.addf %170, %179 : vector<8x4xf32>
    %c8_105 = arith.constant 8 : index
    %c0_106 = arith.constant 0 : index
    %181 = vector.load %arg9[%c8_105, %c0_106] : memref<9x676xf32, #tpu.memory_space<vmem>>, vector<1x676xf32>
    %182 = vector.broadcast %181 : vector<1x676xf32> to vector<8x676xf32>
    %183 = arith.mulf %95, %182 : vector<8x676xf32>
    %cst_107 = arith.constant dense<0xFF800000> : vector<8xf32>
    %184 = vector.multi_reduction <maximumf>, %183, %cst_107 [1] : vector<8x676xf32> to vector<8xf32>
    %185 = vector.shape_cast %184 : vector<8xf32> to vector<8x1xf32>
    %186 = vector.extract_strided_slice %93 {offsets = [8, 0], sizes = [1, 4], strides = [1, 1]} : vector<9x4xf32> to vector<1x4xf32>
    %187 = vector.broadcast %185 : vector<8x1xf32> to vector<8x4xf32>
    %188 = vector.broadcast %186 : vector<1x4xf32> to vector<8x4xf32>
    %189 = arith.mulf %187, %188 : vector<8x4xf32>
    %190 = arith.addf %180, %189 : vector<8x4xf32>
    %cst_108 = arith.constant 0.000000e+00 : f32
    %191 = vector.broadcast %cst_108 : f32 to vector<8x4xf32>
    %192 = arith.maximumf %190, %191 : vector<8x4xf32>
    %c0_109 = arith.constant 0 : index
    %c0_110 = arith.constant 0 : index
    %193 = vector.load %arg14[%c0_109, %c0_110] : memref<1x4xf32, #tpu.memory_space<vmem>>, vector<1x4xf32>
    %194 = vector.broadcast %193 : vector<1x4xf32> to vector<8x4xf32>
    %195 = arith.mulf %192, %194 : vector<8x4xf32>
    %cst_111 = arith.constant dense<0.000000e+00> : vector<8xf32>
    %196 = vector.multi_reduction <add>, %195, %cst_111 [1] : vector<8x4xf32> to vector<8xf32>
    %197 = vector.shape_cast %196 : vector<8xf32> to vector<8x1xf32>
    %c0_112 = arith.constant 0 : index
    %c0_113 = arith.constant 0 : index
    %198 = vector.load %arg15[%c0_112, %c0_113] : memref<1x1xf32, #tpu.memory_space<vmem>>, vector<1x1xf32>
    %199 = vector.broadcast %198 : vector<1x1xf32> to vector<8x1xf32>
    %200 = arith.addf %197, %199 : vector<8x1xf32>
    %201 = vector.extract_strided_slice %86 {offsets = [0, 676], sizes = [8, 676], strides = [1, 1]} : vector<8x1408xf32> to vector<8x676xf32>
    %202 = vector.extract_strided_slice %92 {offsets = [0, 9], sizes = [8, 9], strides = [1, 1]} : vector<8x18xf32> to vector<8x9xf32>
    %cst_114 = arith.constant dense<0.000000e+00> : vector<8x4xf32>
    %203 = tpu.matmul %202, %94, %cst_114 {dimension_numbers = #tpu.dot_dimension_numbers<[1], [0], [0], [1], [0, 0, 1, 1], [], []>} : vector<8x9xf32>, vector<9x4xf32>, vector<8x4xf32> -> vector<8x4xf32>
    %c0_115 = arith.constant 0 : index
    %c0_116 = arith.constant 0 : index
    %204 = vector.load %arg13[%c0_115, %c0_116] : memref<1x4xf32, #tpu.memory_space<vmem>>, vector<1x4xf32>
    %205 = vector.broadcast %204 : vector<1x4xf32> to vector<8x4xf32>
    %206 = arith.addf %203, %205 : vector<8x4xf32>
    %c0_117 = arith.constant 0 : index
    %c0_118 = arith.constant 0 : index
    %207 = vector.load %arg9[%c0_117, %c0_118] : memref<9x676xf32, #tpu.memory_space<vmem>>, vector<1x676xf32>
    %208 = vector.broadcast %207 : vector<1x676xf32> to vector<8x676xf32>
    %209 = arith.mulf %201, %208 : vector<8x676xf32>
    %cst_119 = arith.constant dense<0xFF800000> : vector<8xf32>
    %210 = vector.multi_reduction <maximumf>, %209, %cst_119 [1] : vector<8x676xf32> to vector<8xf32>
    %211 = vector.shape_cast %210 : vector<8xf32> to vector<8x1xf32>
    %212 = vector.extract_strided_slice %93 {offsets = [0, 0], sizes = [1, 4], strides = [1, 1]} : vector<9x4xf32> to vector<1x4xf32>
    %213 = vector.broadcast %211 : vector<8x1xf32> to vector<8x4xf32>
    %214 = vector.broadcast %212 : vector<1x4xf32> to vector<8x4xf32>
    %215 = arith.mulf %213, %214 : vector<8x4xf32>
    %216 = arith.addf %206, %215 : vector<8x4xf32>
    %c1_120 = arith.constant 1 : index
    %c0_121 = arith.constant 0 : index
    %217 = vector.load %arg9[%c1_120, %c0_121] : memref<9x676xf32, #tpu.memory_space<vmem>>, vector<1x676xf32>
    %218 = vector.broadcast %217 : vector<1x676xf32> to vector<8x676xf32>
    %219 = arith.mulf %201, %218 : vector<8x676xf32>
    %cst_122 = arith.constant dense<0xFF800000> : vector<8xf32>
    %220 = vector.multi_reduction <maximumf>, %219, %cst_122 [1] : vector<8x676xf32> to vector<8xf32>
    %221 = vector.shape_cast %220 : vector<8xf32> to vector<8x1xf32>
    %222 = vector.extract_strided_slice %93 {offsets = [1, 0], sizes = [1, 4], strides = [1, 1]} : vector<9x4xf32> to vector<1x4xf32>
    %223 = vector.broadcast %221 : vector<8x1xf32> to vector<8x4xf32>
    %224 = vector.broadcast %222 : vector<1x4xf32> to vector<8x4xf32>
    %225 = arith.mulf %223, %224 : vector<8x4xf32>
    %226 = arith.addf %216, %225 : vector<8x4xf32>
    %c2_123 = arith.constant 2 : index
    %c0_124 = arith.constant 0 : index
    %227 = vector.load %arg9[%c2_123, %c0_124] : memref<9x676xf32, #tpu.memory_space<vmem>>, vector<1x676xf32>
    %228 = vector.broadcast %227 : vector<1x676xf32> to vector<8x676xf32>
    %229 = arith.mulf %201, %228 : vector<8x676xf32>
    %cst_125 = arith.constant dense<0xFF800000> : vector<8xf32>
    %230 = vector.multi_reduction <maximumf>, %229, %cst_125 [1] : vector<8x676xf32> to vector<8xf32>
    %231 = vector.shape_cast %230 : vector<8xf32> to vector<8x1xf32>
    %232 = vector.extract_strided_slice %93 {offsets = [2, 0], sizes = [1, 4], strides = [1, 1]} : vector<9x4xf32> to vector<1x4xf32>
    %233 = vector.broadcast %231 : vector<8x1xf32> to vector<8x4xf32>
    %234 = vector.broadcast %232 : vector<1x4xf32> to vector<8x4xf32>
    %235 = arith.mulf %233, %234 : vector<8x4xf32>
    %236 = arith.addf %226, %235 : vector<8x4xf32>
    %c3_126 = arith.constant 3 : index
    %c0_127 = arith.constant 0 : index
    %237 = vector.load %arg9[%c3_126, %c0_127] : memref<9x676xf32, #tpu.memory_space<vmem>>, vector<1x676xf32>
    %238 = vector.broadcast %237 : vector<1x676xf32> to vector<8x676xf32>
    %239 = arith.mulf %201, %238 : vector<8x676xf32>
    %cst_128 = arith.constant dense<0xFF800000> : vector<8xf32>
    %240 = vector.multi_reduction <maximumf>, %239, %cst_128 [1] : vector<8x676xf32> to vector<8xf32>
    %241 = vector.shape_cast %240 : vector<8xf32> to vector<8x1xf32>
    %242 = vector.extract_strided_slice %93 {offsets = [3, 0], sizes = [1, 4], strides = [1, 1]} : vector<9x4xf32> to vector<1x4xf32>
    %243 = vector.broadcast %241 : vector<8x1xf32> to vector<8x4xf32>
    %244 = vector.broadcast %242 : vector<1x4xf32> to vector<8x4xf32>
    %245 = arith.mulf %243, %244 : vector<8x4xf32>
    %246 = arith.addf %236, %245 : vector<8x4xf32>
    %c4_129 = arith.constant 4 : index
    %c0_130 = arith.constant 0 : index
    %247 = vector.load %arg9[%c4_129, %c0_130] : memref<9x676xf32, #tpu.memory_space<vmem>>, vector<1x676xf32>
    %248 = vector.broadcast %247 : vector<1x676xf32> to vector<8x676xf32>
    %249 = arith.mulf %201, %248 : vector<8x676xf32>
    %cst_131 = arith.constant dense<0xFF800000> : vector<8xf32>
    %250 = vector.multi_reduction <maximumf>, %249, %cst_131 [1] : vector<8x676xf32> to vector<8xf32>
    %251 = vector.shape_cast %250 : vector<8xf32> to vector<8x1xf32>
    %252 = vector.extract_strided_slice %93 {offsets = [4, 0], sizes = [1, 4], strides = [1, 1]} : vector<9x4xf32> to vector<1x4xf32>
    %253 = vector.broadcast %251 : vector<8x1xf32> to vector<8x4xf32>
    %254 = vector.broadcast %252 : vector<1x4xf32> to vector<8x4xf32>
    %255 = arith.mulf %253, %254 : vector<8x4xf32>
    %256 = arith.addf %246, %255 : vector<8x4xf32>
    %c5_132 = arith.constant 5 : index
    %c0_133 = arith.constant 0 : index
    %257 = vector.load %arg9[%c5_132, %c0_133] : memref<9x676xf32, #tpu.memory_space<vmem>>, vector<1x676xf32>
    %258 = vector.broadcast %257 : vector<1x676xf32> to vector<8x676xf32>
    %259 = arith.mulf %201, %258 : vector<8x676xf32>
    %cst_134 = arith.constant dense<0xFF800000> : vector<8xf32>
    %260 = vector.multi_reduction <maximumf>, %259, %cst_134 [1] : vector<8x676xf32> to vector<8xf32>
    %261 = vector.shape_cast %260 : vector<8xf32> to vector<8x1xf32>
    %262 = vector.extract_strided_slice %93 {offsets = [5, 0], sizes = [1, 4], strides = [1, 1]} : vector<9x4xf32> to vector<1x4xf32>
    %263 = vector.broadcast %261 : vector<8x1xf32> to vector<8x4xf32>
    %264 = vector.broadcast %262 : vector<1x4xf32> to vector<8x4xf32>
    %265 = arith.mulf %263, %264 : vector<8x4xf32>
    %266 = arith.addf %256, %265 : vector<8x4xf32>
    %c6_135 = arith.constant 6 : index
    %c0_136 = arith.constant 0 : index
    %267 = vector.load %arg9[%c6_135, %c0_136] : memref<9x676xf32, #tpu.memory_space<vmem>>, vector<1x676xf32>
    %268 = vector.broadcast %267 : vector<1x676xf32> to vector<8x676xf32>
    %269 = arith.mulf %201, %268 : vector<8x676xf32>
    %cst_137 = arith.constant dense<0xFF800000> : vector<8xf32>
    %270 = vector.multi_reduction <maximumf>, %269, %cst_137 [1] : vector<8x676xf32> to vector<8xf32>
    %271 = vector.shape_cast %270 : vector<8xf32> to vector<8x1xf32>
    %272 = vector.extract_strided_slice %93 {offsets = [6, 0], sizes = [1, 4], strides = [1, 1]} : vector<9x4xf32> to vector<1x4xf32>
    %273 = vector.broadcast %271 : vector<8x1xf32> to vector<8x4xf32>
    %274 = vector.broadcast %272 : vector<1x4xf32> to vector<8x4xf32>
    %275 = arith.mulf %273, %274 : vector<8x4xf32>
    %276 = arith.addf %266, %275 : vector<8x4xf32>
    %c7_138 = arith.constant 7 : index
    %c0_139 = arith.constant 0 : index
    %277 = vector.load %arg9[%c7_138, %c0_139] : memref<9x676xf32, #tpu.memory_space<vmem>>, vector<1x676xf32>
    %278 = vector.broadcast %277 : vector<1x676xf32> to vector<8x676xf32>
    %279 = arith.mulf %201, %278 : vector<8x676xf32>
    %cst_140 = arith.constant dense<0xFF800000> : vector<8xf32>
    %280 = vector.multi_reduction <maximumf>, %279, %cst_140 [1] : vector<8x676xf32> to vector<8xf32>
    %281 = vector.shape_cast %280 : vector<8xf32> to vector<8x1xf32>
    %282 = vector.extract_strided_slice %93 {offsets = [7, 0], sizes = [1, 4], strides = [1, 1]} : vector<9x4xf32> to vector<1x4xf32>
    %283 = vector.broadcast %281 : vector<8x1xf32> to vector<8x4xf32>
    %284 = vector.broadcast %282 : vector<1x4xf32> to vector<8x4xf32>
    %285 = arith.mulf %283, %284 : vector<8x4xf32>
    %286 = arith.addf %276, %285 : vector<8x4xf32>
    %c8_141 = arith.constant 8 : index
    %c0_142 = arith.constant 0 : index
    %287 = vector.load %arg9[%c8_141, %c0_142] : memref<9x676xf32, #tpu.memory_space<vmem>>, vector<1x676xf32>
    %288 = vector.broadcast %287 : vector<1x676xf32> to vector<8x676xf32>
    %289 = arith.mulf %201, %288 : vector<8x676xf32>
    %cst_143 = arith.constant dense<0xFF800000> : vector<8xf32>
    %290 = vector.multi_reduction <maximumf>, %289, %cst_143 [1] : vector<8x676xf32> to vector<8xf32>
    %291 = vector.shape_cast %290 : vector<8xf32> to vector<8x1xf32>
    %292 = vector.extract_strided_slice %93 {offsets = [8, 0], sizes = [1, 4], strides = [1, 1]} : vector<9x4xf32> to vector<1x4xf32>
    %293 = vector.broadcast %291 : vector<8x1xf32> to vector<8x4xf32>
    %294 = vector.broadcast %292 : vector<1x4xf32> to vector<8x4xf32>
    %295 = arith.mulf %293, %294 : vector<8x4xf32>
    %296 = arith.addf %286, %295 : vector<8x4xf32>
    %cst_144 = arith.constant 0.000000e+00 : f32
    %297 = vector.broadcast %cst_144 : f32 to vector<8x4xf32>
    %298 = arith.maximumf %296, %297 : vector<8x4xf32>
    %c0_145 = arith.constant 0 : index
    %c0_146 = arith.constant 0 : index
    %299 = vector.load %arg14[%c0_145, %c0_146] : memref<1x4xf32, #tpu.memory_space<vmem>>, vector<1x4xf32>
    %300 = vector.broadcast %299 : vector<1x4xf32> to vector<8x4xf32>
    %301 = arith.mulf %298, %300 : vector<8x4xf32>
    %cst_147 = arith.constant dense<0.000000e+00> : vector<8xf32>
    %302 = vector.multi_reduction <add>, %301, %cst_147 [1] : vector<8x4xf32> to vector<8xf32>
    %303 = vector.shape_cast %302 : vector<8xf32> to vector<8x1xf32>
    %c0_148 = arith.constant 0 : index
    %c0_149 = arith.constant 0 : index
    %304 = vector.load %arg15[%c0_148, %c0_149] : memref<1x1xf32, #tpu.memory_space<vmem>>, vector<1x1xf32>
    %305 = vector.broadcast %304 : vector<1x1xf32> to vector<8x1xf32>
    %306 = arith.addf %303, %305 : vector<8x1xf32>
    %307 = tpu.concatenate %200, %306 in 1 : vector<8x1xf32>, vector<8x1xf32> -> vector<8x2xf32>
    %c0_150 = arith.constant 0 : index
    %c0_151 = arith.constant 0 : index
    %308 = vector.load %arg16[%c0_150, %c0_151] : memref<2x8xbf16, #tpu.memory_space<vmem>>, vector<2x8xbf16>
    %309 = arith.truncf %307 : vector<8x2xf32> to vector<8x2xbf16>
    %cst_152 = arith.constant dense<0.000000e+00> : vector<2x2xf32>
    %310 = tpu.matmul %308, %309, %cst_152 {dimension_numbers = #tpu.dot_dimension_numbers<[1], [0], [0], [1], [0, 0, 1, 1], [], []>} : vector<2x8xbf16>, vector<8x2xbf16>, vector<2x2xf32> -> vector<2x2xf32>
    %c0_153 = arith.constant 0 : index
    %c0_154 = arith.constant 0 : index
    %311 = vector.load %arg17[%c0_153, %c0_154] : memref<2x1xf32, #tpu.memory_space<vmem>>, vector<2x1xf32>
    %312 = vector.broadcast %311 : vector<2x1xf32> to vector<2x2xf32>
    %313 = arith.addf %310, %312 : vector<2x2xf32>
    %cst_155 = arith.constant 0.000000e+00 : f32
    %314 = vector.broadcast %cst_155 : f32 to vector<2x2xf32>
    %315 = arith.maximumf %313, %314 : vector<2x2xf32>
    %c0_156 = arith.constant 0 : index
    %c0_157 = arith.constant 0 : index
    %316 = vector.load %arg18[%c0_156, %c0_157] : memref<8x2xbf16, #tpu.memory_space<vmem>>, vector<8x2xbf16>
    %317 = arith.truncf %315 : vector<2x2xf32> to vector<2x2xbf16>
    %cst_158 = arith.constant dense<0.000000e+00> : vector<8x2xf32>
    %318 = tpu.matmul %316, %317, %cst_158 {dimension_numbers = #tpu.dot_dimension_numbers<[1], [0], [0], [1], [0, 0, 1, 1], [], []>} : vector<8x2xbf16>, vector<2x2xbf16>, vector<8x2xf32> -> vector<8x2xf32>
    %c0_159 = arith.constant 0 : index
    %c0_160 = arith.constant 0 : index
    %319 = vector.load %arg19[%c0_159, %c0_160] : memref<8x1xf32, #tpu.memory_space<vmem>>, vector<8x1xf32>
    %320 = vector.broadcast %319 : vector<8x1xf32> to vector<8x2xf32>
    %321 = arith.addf %318, %320 : vector<8x2xf32>
    %322 = arith.negf %321 : vector<8x2xf32>
    %323 = math.exp %322 : vector<8x2xf32>
    %cst_161 = arith.constant 1.000000e+00 : f32
    %324 = vector.broadcast %cst_161 : f32 to vector<8x2xf32>
    %325 = arith.addf %324, %323 : vector<8x2xf32>
    %326 = arith.divf %324, %325 : vector<8x2xf32>
    %cst_162 = arith.constant 1.000000e+00 : f32
    %327 = vector.broadcast %cst_162 : f32 to vector<8x2xf32>
    %328 = arith.addf %327, %326 : vector<8x2xf32>
    %329 = arith.truncf %328 : vector<8x2xf32> to vector<8x2xbf16>
    %c0_163 = arith.constant 0 : index
    %c0_164 = arith.constant 0 : index
    %330 = vector.load %arg11[%c0_163, %c0_164] : memref<2x1408xbf16, #tpu.memory_space<vmem>>, vector<2x1408xbf16>
    %cst_165 = arith.constant dense<0.000000e+00> : vector<8x1408xf32>
    %331 = tpu.matmul %329, %330, %cst_165 {dimension_numbers = #tpu.dot_dimension_numbers<[1], [0], [0], [1], [0, 0, 1, 1], [], []>} : vector<8x2xbf16>, vector<2x1408xbf16>, vector<8x1408xf32> -> vector<8x1408xf32>
    %332 = arith.mulf %86, %331 : vector<8x1408xf32>
    %c0_166 = arith.constant 0 : index
    %c0_167 = arith.constant 0 : index
    %333 = vector.load %arg4[%c0_166, %c0_167] : memref<8x8xbf16, #tpu.memory_space<vmem>>, vector<8x8xbf16>
    %334 = arith.truncf %332 : vector<8x1408xf32> to vector<8x1408xbf16>
    %cst_168 = arith.constant dense<0.000000e+00> : vector<8x1408xf32>
    %335 = tpu.matmul %333, %334, %cst_168 {dimension_numbers = #tpu.dot_dimension_numbers<[1], [0], [0], [1], [0, 0, 1, 1], [], []>} : vector<8x8xbf16>, vector<8x1408xbf16>, vector<8x1408xf32> -> vector<8x1408xf32>
    %c0_169 = arith.constant 0 : index
    %c0_170 = arith.constant 0 : index
    %336 = vector.load %arg5[%c0_169, %c0_170] : memref<8x1xf32, #tpu.memory_space<vmem>>, vector<8x1xf32>
    %c0_171 = arith.constant 0 : index
    %c0_172 = arith.constant 0 : index
    %337 = vector.load %arg6[%c0_171, %c0_172] : memref<8x1xf32, #tpu.memory_space<vmem>>, vector<8x1xf32>
    %338 = vector.broadcast %0 : vector<1x1408xf32> to vector<8x1408xf32>
    %339 = arith.mulf %335, %338 : vector<8x1408xf32>
    %cst_173 = arith.constant dense<0.000000e+00> : vector<8xf32>
    %340 = vector.multi_reduction <add>, %339, %cst_173 [1] : vector<8x1408xf32> to vector<8xf32>
    %341 = vector.shape_cast %340 : vector<8xf32> to vector<8x1xf32>
    %342 = arith.mulf %339, %335 : vector<8x1408xf32>
    %cst_174 = arith.constant dense<0.000000e+00> : vector<8xf32>
    %343 = vector.multi_reduction <add>, %342, %cst_174 [1] : vector<8x1408xf32> to vector<8xf32>
    %344 = vector.shape_cast %343 : vector<8xf32> to vector<8x1xf32>
    %cst_175 = arith.constant 0.001953125 : f32
    %345 = vector.broadcast %cst_175 : f32 to vector<8x1xf32>
    %346 = arith.mulf %341, %345 : vector<8x1xf32>
    %cst_176 = arith.constant 0.001953125 : f32
    %347 = vector.broadcast %cst_176 : f32 to vector<8x1xf32>
    %348 = arith.mulf %344, %347 : vector<8x1xf32>
    %349 = arith.mulf %346, %346 : vector<8x1xf32>
    %350 = arith.subf %348, %349 : vector<8x1xf32>
    %cst_177 = arith.constant 0.000000e+00 : f32
    %351 = vector.broadcast %cst_177 : f32 to vector<8x1xf32>
    %352 = arith.maximumf %350, %351 : vector<8x1xf32>
    %cst_178 = arith.constant 9.99999974E-6 : f32
    %353 = vector.broadcast %cst_178 : f32 to vector<8x1xf32>
    %354 = arith.addf %352, %353 : vector<8x1xf32>
    %355 = math.rsqrt %354 : vector<8x1xf32>
    %356 = arith.mulf %336, %355 : vector<8x1xf32>
    %357 = arith.mulf %346, %356 : vector<8x1xf32>
    %358 = arith.subf %337, %357 : vector<8x1xf32>
    %359 = vector.broadcast %356 : vector<8x1xf32> to vector<8x1408xf32>
    %360 = arith.mulf %335, %359 : vector<8x1408xf32>
    %361 = vector.broadcast %358 : vector<8x1xf32> to vector<8x1408xf32>
    %362 = arith.addf %360, %361 : vector<8x1408xf32>
    %cst_179 = arith.constant 0.000000e+00 : f32
    %363 = vector.broadcast %cst_179 : f32 to vector<8x1408xf32>
    %364 = arith.maximumf %362, %363 : vector<8x1408xf32>
    %c0_180 = arith.constant 0 : index
    %c0_181 = arith.constant 0 : index
    %365 = vector.load %arg20[%c0_180, %c0_181] : memref<8x1408xf32, #tpu.memory_space<vmem>>, vector<8x1408xf32>
    tpu.vector_store %arg20[%c0_180, %c0_181], %364 {strides = array<i32>} : memref<8x1408xf32, #tpu.memory_space<vmem>>, vector<8x1408xf32>,
    return
  }
}

</mosaic_0001>

<llo_original>
// kernel: mscaf_forward.1
$region0: #{mscaf_forward.1}
  #allocation0 [shape = 'u32[]', space=smem, size = 0x4, offset = 0x4, fixed_abs, tag = 'smem constant byte address 0x4 - core index']
  #allocation1 [shape = 'u32[144,128]{1,0:T(1,128)}', space=vmem, size = 0x12000, scoped, tag = 'internal scratch']
  #allocation2 [shape = 'bf16[108,1408]{1,0:T(8,128)(2,1)}', space=vmem, size = 0x4d000, scoped, tag = 'scratch operand']
  #allocation3 [shape = 'f32[1,1]{1,0:T(1,128)S(1)}', space=vmem, size = 0x200, scoped, tag = 'scoped memory for mscaf_forward.1']
  %s0 = inlined_call_operand.vmem [shape: bf16[4,1678], index: 0, kind: input, shape index: {}]
  %s1 = inlined_call_operand.vmem [shape: bf16[8,108], index: 1, kind: input, shape index: {}]
  %s2 = inlined_call_operand.vmem [shape: f32[8,1], index: 2, kind: input, shape index: {}]
  %s3 = inlined_call_operand.vmem [shape: f32[8,1], index: 3, kind: input, shape index: {}]
  %s4 = inlined_call_operand.vmem [shape: bf16[8,8], index: 4, kind: input, shape index: {}]
  %s5 = inlined_call_operand.vmem [shape: f32[8,1], index: 5, kind: input, shape index: {}]
  %s6 = inlined_call_operand.vmem [shape: f32[8,1], index: 6, kind: input, shape index: {}]
  %s7 = inlined_call_operand.vmem [shape: f32[1,1408], index: 7, kind: input, shape index: {}]
  %s8 = inlined_call_operand.vmem [shape: bf16[1408,18], index: 8, kind: input, shape index: {}]
  %s9 = inlined_call_operand.vmem [shape: f32[9,676], index: 9, kind: input, shape index: {}]
  %s10 = inlined_call_operand.vmem [shape: f32[1,18], index: 10, kind: input, shape index: {}]
  %s11 = inlined_call_operand.vmem [shape: bf16[2,1408], index: 11, kind: input, shape index: {}]
  %s12 = inlined_call_operand.vmem [shape: f32[18,4], index: 12, kind: input, shape index: {}]
  %s13 = inlined_call_operand.vmem [shape: f32[1,4], index: 13, kind: input, shape index: {}]
  %s14 = inlined_call_operand.vmem [shape: f32[1,4], index: 14, kind: input, shape index: {}]
  %s15 = inlined_call_operand.<no memory space> [shape: f32[1,1], index: 15, kind: input, shape index: {}]
  %s16 = inlined_call_operand.vmem [shape: bf16[2,8], index: 16, kind: input, shape index: {}]
  %s17 = inlined_call_operand.vmem [shape: f32[2,1], index: 17, kind: input, shape index: {}]
  %s18 = inlined_call_operand.vmem [shape: bf16[8,2], index: 18, kind: input, shape index: {}]
  %s19 = inlined_call_operand.vmem [shape: f32[8,1], index: 19, kind: input, shape index: {}]
  %s20 = inlined_call_operand.vmem [shape: f32[8,1408], index: 20, kind: output, shape index: {}]
  %s21 = sld [smem:[#allocation0]]
  $region90: #{mscaf_forward.1} parent=0
    _
  %s23 = ssub.s32 1, %s21
  %s24 = scalar_select 0, %s23, %s21
  %v25 = vstv %s15
  %26 = vst [vmem:[#allocation3] sm:$0x1] %v25
  // Predicated region
  $region2: #{mscaf_forward.1} parent=0 // pred_check
    _
  $region3: #{mscaf_forward.1} parent=0 // pred_check_branch
    %28 = sbr.rel (0) target = $region5
  $region4: #{mscaf_forward.1} parent=0 // pred_region
    _
  $region5: #{mscaf_forward.1} parent=0 // pred_fallthru
    _
  // Predicated region
  $region6: #{mscaf_forward.1} parent=0 // pred_check
    _
  $region7: #{mscaf_forward.1} parent=0 // pred_check_branch
    %30 = sbr.rel (0) target = $region9
  $region8: #{mscaf_forward.1} parent=0 // pred_region
    _
  $region9: #{mscaf_forward.1} parent=0 // pred_fallthru
    _
  // Predicated region
  $region10: #{mscaf_forward.1} parent=0 // pred_check
    _
  $region11: #{mscaf_forward.1} parent=0 // pred_check_branch
    %32 = sbr.rel (0) target = $region13
  $region12: #{mscaf_forward.1} parent=0 // pred_region
    _
  $region13: #{mscaf_forward.1} parent=0 // pred_fallthru
    _
  // Predicated region
  $region14: #{mscaf_forward.1} parent=0 // pred_check
    _
  $region15: #{mscaf_forward.1} parent=0 // pred_check_branch
    %34 = sbr.rel (0) target = $region17
  $region16: #{mscaf_forward.1} parent=0 // pred_region
    _
  $region17: #{mscaf_forward.1} parent=0 // pred_fallthru
    _
  // Predicated region
  $region18: #{mscaf_forward.1} parent=0 // pred_check
    _
  $region19: #{mscaf_forward.1} parent=0 // pred_check_branch
    %36 = sbr.rel (0) target = $region21
  $region20: #{mscaf_forward.1} parent=0 // pred_region
    _
  $region21: #{mscaf_forward.1} parent=0 // pred_fallthru
    _
  // Predicated region
  $region22: #{mscaf_forward.1} parent=0 // pred_check
    _
  $region23: #{mscaf_forward.1} parent=0 // pred_check_branch
    %38 = sbr.rel (0) target = $region25
  $region24: #{mscaf_forward.1} parent=0 // pred_region
    _
  $region25: #{mscaf_forward.1} parent=0 // pred_fallthru
    _
  // Predicated region
  $region26: #{mscaf_forward.1} parent=0 // pred_check
    _
  $region27: #{mscaf_forward.1} parent=0 // pred_check_branch
    %40 = sbr.rel (0) target = $region29
  $region28: #{mscaf_forward.1} parent=0 // pred_region
    _
  $region29: #{mscaf_forward.1} parent=0 // pred_fallthru
    _
  // Predicated region
  $region30: #{mscaf_forward.1} parent=0 // pred_check
    _
  $region31: #{mscaf_forward.1} parent=0 // pred_check_branch
    %42 = sbr.rel (0) target = $region33
  $region32: #{mscaf_forward.1} parent=0 // pred_region
    _
  $region33: #{mscaf_forward.1} parent=0 // pred_fallthru
    _
  // Predicated region
  $region34: #{mscaf_forward.1} parent=0 // pred_check
    _
  $region35: #{mscaf_forward.1} parent=0 // pred_check_branch
    %44 = sbr.rel (0) target = $region37
  $region36: #{mscaf_forward.1} parent=0 // pred_region
    _
  $region37: #{mscaf_forward.1} parent=0 // pred_fallthru
    _
  // Predicated region
  $region38: #{mscaf_forward.1} parent=0 // pred_check
    _
  $region39: #{mscaf_forward.1} parent=0 // pred_check_branch
    %46 = sbr.rel (0) target = $region41
  $region40: #{mscaf_forward.1} parent=0 // pred_region
    _
  $region41: #{mscaf_forward.1} parent=0 // pred_fallthru
    _
  // Predicated region
  $region42: #{mscaf_forward.1} parent=0 // pred_check
    _
  $region43: #{mscaf_forward.1} parent=0 // pred_check_branch
    %48 = sbr.rel (0) target = $region45
  $region44: #{mscaf_forward.1} parent=0 // pred_region
    _
  $region45: #{mscaf_forward.1} parent=0 // pred_fallthru
    _
  // Predicated region
  $region46: #{mscaf_forward.1} parent=0 // pred_check
    _
  $region47: #{mscaf_forward.1} parent=0 // pred_check_branch
    %50 = sbr.rel (0) target = $region49
  $region48: #{mscaf_forward.1} parent=0 // pred_region
    _
  $region49: #{mscaf_forward.1} parent=0 // pred_fallthru
    _
  // Predicated region
  $region50: #{mscaf_forward.1} parent=0 // pred_check
    _
  $region51: #{mscaf_forward.1} parent=0 // pred_check_branch
    %52 = sbr.rel (0) target = $region53
  $region52: #{mscaf_forward.1} parent=0 // pred_region
    _
  $region53: #{mscaf_forward.1} parent=0 // pred_fallthru
    _
  // Predicated region
  $region54: #{mscaf_forward.1} parent=0 // pred_check
    _
  $region55: #{mscaf_forward.1} parent=0 // pred_check_branch
    %54 = sbr.rel (0) target = $region57
  $region56: #{mscaf_forward.1} parent=0 // pred_region
    _
  $region57: #{mscaf_forward.1} parent=0 // pred_fallthru
    _
  // Predicated region
  $region58: #{mscaf_forward.1} parent=0 // pred_check
    _
  $region59: #{mscaf_forward.1} parent=0 // pred_check_branch
    %56 = sbr.rel (0) target = $region61
  $region60: #{mscaf_forward.1} parent=0 // pred_region
    _
  $region61: #{mscaf_forward.1} parent=0 // pred_fallthru
    _
  // Predicated region
  $region62: #{mscaf_forward.1} parent=0 // pred_check
    _
  $region63: #{mscaf_forward.1} parent=0 // pred_check_branch
    %58 = sbr.rel (0) target = $region65
  $region64: #{mscaf_forward.1} parent=0 // pred_region
    _
  $region65: #{mscaf_forward.1} parent=0 // pred_fallthru
    _
  // Predicated region
  $region66: #{mscaf_forward.1} parent=0 // pred_check
    _
  $region67: #{mscaf_forward.1} parent=0 // pred_check_branch
    %60 = sbr.rel (0) target = $region69
  $region68: #{mscaf_forward.1} parent=0 // pred_region
    _
  $region69: #{mscaf_forward.1} parent=0 // pred_fallthru
    _
  // Predicated region
  $region70: #{mscaf_forward.1} parent=0 // pred_check
    _
  $region71: #{mscaf_forward.1} parent=0 // pred_check_branch
    %62 = sbr.rel (0) target = $region73
  $region72: #{mscaf_forward.1} parent=0 // pred_region
    _
  $region73: #{mscaf_forward.1} parent=0 // pred_fallthru
    _
  // Predicated region
  $region74: #{mscaf_forward.1} parent=0 // pred_check
    _
  $region75: #{mscaf_forward.1} parent=0 // pred_check_branch
    %64 = sbr.rel (0) target = $region77
  $region76: #{mscaf_forward.1} parent=0 // pred_region
    _
  $region77: #{mscaf_forward.1} parent=0 // pred_fallthru
    _
  // Predicated region
  $region78: #{mscaf_forward.1} parent=0 // pred_check
    _
  $region79: #{mscaf_forward.1} parent=0 // pred_check_branch
    %66 = sbr.rel (0) target = $region81
  $region80: #{mscaf_forward.1} parent=0 // pred_region
    _
  $region81: #{mscaf_forward.1} parent=0 // pred_fallthru
    _
  %v68 = vld [vmem:[%s7] sm:$0xff]
  %v69 = vld [vmem:[%s7 + $0x8] sm:$0x7]
  %v70 = vld [vmem:[%s0] sm:$0xff]
  %v71 = vld [vmem:[%s0 + $0x8] sm:$0xff]
  %v72 = vld [vmem:[%s0 + $0x10] sm:$0xff]
  %v76 = vcombine.high %v70, %v70
  %v78 = vunpack.c.l.s4 1983009808
  %v79 = vunpack.c.0.s8 %v78
  %v80 = vlaneseq
  %v81 = vshrl.u32 %v80, 7
  %v82 = vsub.s32 %v79, %v81
  %v83 = vrot.slane %v70, %v82
  %v85 = vunpack.c.l.s4 1983009808
  %v86 = vunpack.c.0.s8 %v85
  %v87 = vlaneseq
  %v88 = vshrl.u32 %v87, 7
  %v89 = vsub.s32 %v86, %v88
  %v90 = vrot.slane %v76, %v89
  %v91 = vcombine.high %v71, %v71
  %v93 = vunpack.c.l.s4 1983009808
  %v94 = vunpack.c.0.s8 %v93
  %v95 = vlaneseq
  %v96 = vshrl.u32 %v95, 7
  %v97 = vsub.s32 %v94, %v96
  %v98 = vrot.slane %v71, %v97
  %v100 = vunpack.c.l.s4 1983009808
  %v101 = vunpack.c.0.s8 %v100
  %v102 = vlaneseq
  %v103 = vshrl.u32 %v102, 7
  %v104 = vsub.s32 %v101, %v103
  %v105 = vrot.slane %v91, %v104
  %v106 = vcombine.high %v72, %v72
  %v108 = vunpack.c.l.s4 1983009808
  %v109 = vunpack.c.0.s8 %v108
  %v110 = vlaneseq
  %v111 = vshrl.u32 %v110, 7
  %v112 = vsub.s32 %v109, %v111
  %v113 = vrot.slane %v72, %v112
  %v115 = vunpack.c.l.s4 1983009808
  %v116 = vunpack.c.0.s8 %v115
  %v117 = vlaneseq
  %v118 = vshrl.u32 %v117, 7
  %v119 = vsub.s32 %v116, %v118
  %v120 = vrot.slane %v106, %v119
  %121 = vrot.lane.b32.xlu0 %v83, 20
  %v122 = vpop.permute.xlu0 %121
  %123 = vrot.lane.b32.xlu0 %v90, 20
  %v124 = vpop.permute.xlu0 %123
  %125 = vrot.lane.b32.xlu0 %v98, 20
  %v126 = vpop.permute.xlu0 %125
  %127 = vrot.lane.b32.xlu0 %v105, 20
  %v128 = vpop.permute.xlu0 %127
  %129 = vrot.lane.b32.xlu0 %v113, 20
  %v130 = vpop.permute.xlu0 %129
  %131 = vrot.lane.b32.xlu0 %v120, 20
  %v132 = vpop.permute.xlu0 %131
  %v133 = vrot.slane %v122, 4
  %v134 = vrot.slane %v124, 4
  %v135 = vrot.slane %v126, 4
  %v136 = vrot.slane %v128, 4
  %v137 = vrot.slane %v130, 4
  %v138 = vrot.slane %v132, 4
  %vm139 = vcmask 1043456
  %v140 = vsel %vm139, %v133, %v134
  %vm141 = vcmask 162816
  %v142 = vsel %vm141, %v122, %v140
  %v143 = vsel %vm139, %v134, %v135
  %v144 = vsel %vm141, %v124, %v143
  %v145 = vsel %vm139, %v135, %v136
  %v146 = vsel %vm141, %v126, %v145
  %v147 = vsel %vm139, %v136, %v137
  %v148 = vsel %vm141, %v128, %v147
  %v149 = vsel %vm139, %v137, %v138
  %v150 = vsel %vm141, %v130, %v149
  %v151 = vsel %vm141, %v132, %v138
  %158 = vst [vmem:[#allocation2] sm:$0x33] %v142
  %159 = vst [vmem:[#allocation2 + $0x8] sm:$0x33] %v144
  %160 = vst [vmem:[#allocation2 + $0x10] sm:$0x33] %v146
  %161 = vst [vmem:[#allocation2 + $0x18] sm:$0x33] %v148
  %162 = vst [vmem:[#allocation2 + $0x20] sm:$0x33] %v150
  %163 = vst [vmem:[#allocation2 + $0x28] sm:$0x3] %v151
  %v164 = vld [vmem:[%s0] sm:$0xff]
  %v165 = vld [vmem:[%s0 + $0x8] sm:$0xff]
  %v166 = vld [vmem:[%s0 + $0x10] sm:$0xff]
  %v170 = vcombine.low %v164, %v164
  %v172 = vunpack.c.l.s4 1983009808
  %v173 = vunpack.c.0.s8 %v172
  %v174 = vlaneseq
  %v175 = vshrl.u32 %v174, 7
  %v176 = vsub.s32 %v173, %v175
  %v177 = vrot.slane %v170, %v176
  %v179 = vunpack.c.l.s4 1983009808
  %v180 = vunpack.c.0.s8 %v179
  %v181 = vlaneseq
  %v182 = vshrl.u32 %v181, 7
  %v183 = vsub.s32 %v180, %v182
  %v184 = vrot.slane %v164, %v183
  %v185 = vcombine.low %v165, %v165
  %v187 = vunpack.c.l.s4 1983009808
  %v188 = vunpack.c.0.s8 %v187
  %v189 = vlaneseq
  %v190 = vshrl.u32 %v189, 7
  %v191 = vsub.s32 %v188, %v190
  %v192 = vrot.slane %v185, %v191
  %v194 = vunpack.c.l.s4 1983009808
  %v195 = vunpack.c.0.s8 %v194
  %v196 = vlaneseq
  %v197 = vshrl.u32 %v196, 7
  %v198 = vsub.s32 %v195, %v197
  %v199 = vrot.slane %v165, %v198
  %v200 = vcombine.low %v166, %v166
  %v202 = vunpack.c.l.s4 1983009808
  %v203 = vunpack.c.0.s8 %v202
  %v204 = vlaneseq
  %v205 = vshrl.u32 %v204, 7
  %v206 = vsub.s32 %v203, %v205
  %v207 = vrot.slane %v200, %v206
  %v209 = vunpack.c.l.s4 1983009808
  %v210 = vunpack.c.0.s8 %v209
  %v211 = vlaneseq
  %v212 = vshrl.u32 %v211, 7
  %v213 = vsub.s32 %v210, %v212
  %v214 = vrot.slane %v166, %v213
  %215 = vrot.lane.b32.xlu0 %v177, 19
  %v216 = vpop.permute.xlu0 %215
  %217 = vrot.lane.b32.xlu0 %v184, 19
  %v218 = vpop.permute.xlu0 %217
  %219 = vrot.lane.b32.xlu0 %v192, 19
  %v220 = vpop.permute.xlu0 %219
  %221 = vrot.lane.b32.xlu0 %v199, 19
  %v222 = vpop.permute.xlu0 %221
  %223 = vrot.lane.b32.xlu0 %v207, 19
  %v224 = vpop.permute.xlu0 %223
  %225 = vrot.lane.b32.xlu0 %v214, 19
  %v226 = vpop.permute.xlu0 %225
  %v227 = vrot.slane %v216, 4
  %v228 = vrot.slane %v218, 4
  %v229 = vrot.slane %v220, 4
  %v230 = vrot.slane %v222, 4
  %v231 = vrot.slane %v224, 4
  %v232 = vrot.slane %v226, 4
  %v233 = vsel %vm139, %v227, %v228
  %vm234 = vcmask 154624
  %v235 = vsel %vm234, %v216, %v233
  %v236 = vsel %vm139, %v228, %v229
  %v237 = vsel %vm234, %v218, %v236
  %v238 = vsel %vm139, %v229, %v230
  %v239 = vsel %vm234, %v220, %v238
  %v240 = vsel %vm139, %v230, %v231
  %v241 = vsel %vm234, %v222, %v240
  %v242 = vsel %vm139, %v231, %v232
  %v243 = vsel %vm234, %v224, %v242
  %v244 = vsel %vm234, %v226, %v232
  %251 = vst [vmem:[#allocation2] sm:$0xcc] %v235
  %252 = vst [vmem:[#allocation2 + $0x8] sm:$0xcc] %v237
  %253 = vst [vmem:[#allocation2 + $0x10] sm:$0xcc] %v239
  %254 = vst [vmem:[#allocation2 + $0x18] sm:$0xcc] %v241
  %255 = vst [vmem:[#allocation2 + $0x20] sm:$0xcc] %v243
  %256 = vst [vmem:[#allocation2 + $0x28] sm:$0xc] %v244
  %v257 = vld [vmem:[%s0] sm:$0xff]
  %v258 = vld [vmem:[%s0 + $0x8] sm:$0xff]
  %v259 = vld [vmem:[%s0 + $0x10] sm:$0xff]
  %v263 = vcombine.high %v257, %v257
  %v265 = vunpack.c.l.s4 1983009808
  %v266 = vunpack.c.0.s8 %v265
  %v267 = vlaneseq
  %v268 = vshrl.u32 %v267, 7
  %v269 = vsub.s32 %v266, %v268
  %v270 = vrot.slane %v257, %v269
  %v272 = vunpack.c.l.s4 1983009808
  %v273 = vunpack.c.0.s8 %v272
  %v274 = vlaneseq
  %v275 = vshrl.u32 %v274, 7
  %v276 = vsub.s32 %v273, %v275
  %v277 = vrot.slane %v263, %v276
  %v278 = vcombine.high %v258, %v258
  %v280 = vunpack.c.l.s4 1983009808
  %v281 = vunpack.c.0.s8 %v280
  %v282 = vlaneseq
  %v283 = vshrl.u32 %v282, 7
  %v284 = vsub.s32 %v281, %v283
  %v285 = vrot.slane %v258, %v284
  %v287 = vunpack.c.l.s4 1983009808
  %v288 = vunpack.c.0.s8 %v287
  %v289 = vlaneseq
  %v290 = vshrl.u32 %v289, 7
  %v291 = vsub.s32 %v288, %v290
  %v292 = vrot.slane %v278, %v291
  %v293 = vcombine.high %v259, %v259
  %v295 = vunpack.c.l.s4 1983009808
  %v296 = vunpack.c.0.s8 %v295
  %v297 = vlaneseq
  %v298 = vshrl.u32 %v297, 7
  %v299 = vsub.s32 %v296, %v298
  %v300 = vrot.slane %v259, %v299
  %v302 = vunpack.c.l.s4 1983009808
  %v303 = vunpack.c.0.s8 %v302
  %v304 = vlaneseq
  %v305 = vshrl.u32 %v304, 7
  %v306 = vsub.s32 %v303, %v305
  %v307 = vrot.slane %v293, %v306
  %308 = vrot.lane.b32.xlu0 %v270, 18
  %v309 = vpop.permute.xlu0 %308
  %310 = vrot.lane.b32.xlu0 %v277, 18
  %v311 = vpop.permute.xlu0 %310
  %312 = vrot.lane.b32.xlu0 %v285, 18
  %v313 = vpop.permute.xlu0 %312
  %314 = vrot.lane.b32.xlu0 %v292, 18
  %v315 = vpop.permute.xlu0 %314
  %316 = vrot.lane.b32.xlu0 %v300, 18
  %v317 = vpop.permute.xlu0 %316
  %318 = vrot.lane.b32.xlu0 %v307, 18
  %v319 = vpop.permute.xlu0 %318
  %v320 = vrot.slane %v309, 4
  %v321 = vrot.slane %v311, 4
  %v322 = vrot.slane %v313, 4
  %v323 = vrot.slane %v315, 4
  %v324 = vrot.slane %v317, 4
  %v325 = vrot.slane %v319, 4
  %v326 = vsel %vm139, %v320, %v321
  %vm327 = vcmask 146432
  %v328 = vsel %vm327, %v309, %v326
  %v329 = vsel %vm139, %v321, %v322
  %v330 = vsel %vm327, %v311, %v329
  %v331 = vsel %vm139, %v322, %v323
  %v332 = vsel %vm327, %v313, %v331
  %v333 = vsel %vm139, %v323, %v324
  %v334 = vsel %vm327, %v315, %v333
  %v335 = vsel %vm139, %v324, %v325
  %v336 = vsel %vm327, %v317, %v335
  %v337 = vsel %vm327, %v319, %v325
  %344 = vst [vmem:[#allocation2 + $0x2c] sm:$0x33] %v328
  %345 = vst [vmem:[#allocation2 + $0x34] sm:$0x33] %v330
  %346 = vst [vmem:[#allocation2 + $0x3c] sm:$0x33] %v332
  %347 = vst [vmem:[#allocation2 + $0x44] sm:$0x33] %v334
  %348 = vst [vmem:[#allocation2 + $0x4c] sm:$0x33] %v336
  %349 = vst [vmem:[#allocation2 + $0x54] sm:$0x3] %v337
  %v350 = vld [vmem:[%s0 + $0x2] sm:$0xff]
  %v351 = vld [vmem:[%s0 + $0xa] sm:$0xff]
  %v352 = vld [vmem:[%s0 + $0x12] sm:$0xff]
  %v356 = vcombine.low %v350, %v350
  %v358 = vunpack.c.l.s4 1983009808
  %v359 = vunpack.c.0.s8 %v358
  %v360 = vlaneseq
  %v361 = vshrl.u32 %v360, 7
  %v362 = vsub.s32 %v359, %v361
  %v363 = vrot.slane %v356, %v362
  %v365 = vunpack.c.l.s4 1983009808
  %v366 = vunpack.c.0.s8 %v365
  %v367 = vlaneseq
  %v368 = vshrl.u32 %v367, 7
  %v369 = vsub.s32 %v366, %v368
  %v370 = vrot.slane %v350, %v369
  %v371 = vcombine.low %v351, %v351
  %v373 = vunpack.c.l.s4 1983009808
  %v374 = vunpack.c.0.s8 %v373
  %v375 = vlaneseq
  %v376 = vshrl.u32 %v375, 7
  %v377 = vsub.s32 %v374, %v376
  %v378 = vrot.slane %v371, %v377
  %v380 = vunpack.c.l.s4 1983009808
  %v381 = vunpack.c.0.s8 %v380
  %v382 = vlaneseq
  %v383 = vshrl.u32 %v382, 7
  %v384 = vsub.s32 %v381, %v383
  %v385 = vrot.slane %v351, %v384
  %v386 = vcombine.low %v352, %v352
  %v388 = vunpack.c.l.s4 1983009808
  %v389 = vunpack.c.0.s8 %v388
  %v390 = vlaneseq
  %v391 = vshrl.u32 %v390, 7
  %v392 = vsub.s32 %v389, %v391
  %v393 = vrot.slane %v386, %v392
  %v395 = vunpack.c.l.s4 1983009808
  %v396 = vunpack.c.0.s8 %v395
  %v397 = vlaneseq
  %v398 = vshrl.u32 %v397, 7
  %v399 = vsub.s32 %v396, %v398
  %v400 = vrot.slane %v352, %v399
  %401 = vrot.lane.b32.xlu0 %v363, 122
  %v402 = vpop.permute.xlu0 %401
  %403 = vrot.lane.b32.xlu0 %v370, 122
  %v404 = vpop.permute.xlu0 %403
  %405 = vrot.lane.b32.xlu0 %v378, 122
  %v406 = vpop.permute.xlu0 %405
  %407 = vrot.lane.b32.xlu0 %v385, 122
  %v408 = vpop.permute.xlu0 %407
  %409 = vrot.lane.b32.xlu0 %v393, 122
  %v410 = vpop.permute.xlu0 %409
  %411 = vrot.lane.b32.xlu0 %v400, 122
  %v412 = vpop.permute.xlu0 %411
  %v413 = vrot.slane %v402, 4
  %v414 = vrot.slane %v404, 4
  %v415 = vrot.slane %v406, 4
  %v416 = vrot.slane %v408, 4
  %v417 = vrot.slane %v410, 4
  %v418 = vrot.slane %v412, 4
  %v419 = vsel %vm139, %v413, %v414
  %vm420 = vcmask 998400
  %v421 = vsel %vm420, %v402, %v419
  %v422 = vsel %vm139, %v414, %v415
  %v423 = vsel %vm420, %v404, %v422
  %v424 = vsel %vm139, %v415, %v416
  %v425 = vsel %vm420, %v406, %v424
  %v426 = vsel %vm139, %v416, %v417
  %v427 = vsel %vm420, %v408, %v426
  %v428 = vsel %vm139, %v417, %v418
  %v429 = vsel %vm420, %v410, %v428
  %v430 = vsel %vm420, %v412, %v418
  %437 = vst [vmem:[#allocation2 + $0x2c] sm:$0xcc] %v421
  %438 = vst [vmem:[#allocation2 + $0x34] sm:$0xcc] %v423
  %439 = vst [vmem:[#allocation2 + $0x3c] sm:$0xcc] %v425
  %440 = vst [vmem:[#allocation2 + $0x44] sm:$0xcc] %v427
  %441 = vst [vmem:[#allocation2 + $0x4c] sm:$0xcc] %v429
  %442 = vst [vmem:[#allocation2 + $0x54] sm:$0xc] %v430
  %v443 = vld [vmem:[%s0 + $0x2] sm:$0xff]
  %v444 = vld [vmem:[%s0 + $0xa] sm:$0xff]
  %v445 = vld [vmem:[%s0 + $0x12] sm:$0xff]
  %v449 = vcombine.high %v443, %v443
  %v451 = vunpack.c.l.s4 1983009808
  %v452 = vunpack.c.0.s8 %v451
  %v453 = vlaneseq
  %v454 = vshrl.u32 %v453, 7
  %v455 = vsub.s32 %v452, %v454
  %v456 = vrot.slane %v443, %v455
  %v458 = vunpack.c.l.s4 1983009808
  %v459 = vunpack.c.0.s8 %v458
  %v460 = vlaneseq
  %v461 = vshrl.u32 %v460, 7
  %v462 = vsub.s32 %v459, %v461
  %v463 = vrot.slane %v449, %v462
  %v464 = vcombine.high %v444, %v444
  %v466 = vunpack.c.l.s4 1983009808
  %v467 = vunpack.c.0.s8 %v466
  %v468 = vlaneseq
  %v469 = vshrl.u32 %v468, 7
  %v470 = vsub.s32 %v467, %v469
  %v471 = vrot.slane %v444, %v470
  %v473 = vunpack.c.l.s4 1983009808
  %v474 = vunpack.c.0.s8 %v473
  %v475 = vlaneseq
  %v476 = vshrl.u32 %v475, 7
  %v477 = vsub.s32 %v474, %v476
  %v478 = vrot.slane %v464, %v477
  %v479 = vcombine.high %v445, %v445
  %v481 = vunpack.c.l.s4 1983009808
  %v482 = vunpack.c.0.s8 %v481
  %v483 = vlaneseq
  %v484 = vshrl.u32 %v483, 7
  %v485 = vsub.s32 %v482, %v484
  %v486 = vrot.slane %v445, %v485
  %v488 = vunpack.c.l.s4 1983009808
  %v489 = vunpack.c.0.s8 %v488
  %v490 = vlaneseq
  %v491 = vshrl.u32 %v490, 7
  %v492 = vsub.s32 %v489, %v491
  %v493 = vrot.slane %v479, %v492
  %494 = vrot.lane.b32.xlu0 %v456, 121
  %v495 = vpop.permute.xlu0 %494
  %496 = vrot.lane.b32.xlu0 %v463, 121
  %v497 = vpop.permute.xlu0 %496
  %498 = vrot.lane.b32.xlu0 %v471, 121
  %v499 = vpop.permute.xlu0 %498
  %500 = vrot.lane.b32.xlu0 %v478, 121
  %v501 = vpop.permute.xlu0 %500
  %502 = vrot.lane.b32.xlu0 %v486, 121
  %v503 = vpop.permute.xlu0 %502
  %504 = vrot.lane.b32.xlu0 %v493, 121
  %v505 = vpop.permute.xlu0 %504
  %v506 = vrot.slane %v495, 4
  %v507 = vrot.slane %v497, 4
  %v508 = vrot.slane %v499, 4
  %v509 = vrot.slane %v501, 4
  %v510 = vrot.slane %v503, 4
  %v511 = vrot.slane %v505, 4
  %v512 = vsel %vm139, %v506, %v507
  %vm513 = vcmask 990208
  %v514 = vsel %vm513, %v495, %v512
  %v515 = vsel %vm139, %v507, %v508
  %v516 = vsel %vm513, %v497, %v515
  %v517 = vsel %vm139, %v508, %v509
  %v518 = vsel %vm513, %v499, %v517
  %v519 = vsel %vm139, %v509, %v510
  %v520 = vsel %vm513, %v501, %v519
  %v521 = vsel %vm139, %v510, %v511
  %v522 = vsel %vm513, %v503, %v521
  %v523 = vsel %vm513, %v505, %v511
  %530 = vst [vmem:[#allocation2 + $0x58] sm:$0x33] %v514
  %531 = vst [vmem:[#allocation2 + $0x60] sm:$0x33] %v516
  %532 = vst [vmem:[#allocation2 + $0x68] sm:$0x33] %v518
  %533 = vst [vmem:[#allocation2 + $0x70] sm:$0x33] %v520
  %534 = vst [vmem:[#allocation2 + $0x78] sm:$0x33] %v522
  %535 = vst [vmem:[#allocation2 + $0x80] sm:$0x3] %v523
  %v536 = vld [vmem:[%s0 + $0x2] sm:$0xff]
  %v537 = vld [vmem:[%s0 + $0xa] sm:$0xff]
  %v538 = vld [vmem:[%s0 + $0x12] sm:$0xff]
  %v542 = vcombine.low %v536, %v536
  %v544 = vunpack.c.l.s4 1983009808
  %v545 = vunpack.c.0.s8 %v544
  %v546 = vlaneseq
  %v547 = vshrl.u32 %v546, 7
  %v548 = vsub.s32 %v545, %v547
  %v549 = vrot.slane %v542, %v548
  %v551 = vunpack.c.l.s4 1983009808
  %v552 = vunpack.c.0.s8 %v551
  %v553 = vlaneseq
  %v554 = vshrl.u32 %v553, 7
  %v555 = vsub.s32 %v552, %v554
  %v556 = vrot.slane %v536, %v555
  %v557 = vcombine.low %v537, %v537
  %v559 = vunpack.c.l.s4 1983009808
  %v560 = vunpack.c.0.s8 %v559
  %v561 = vlaneseq
  %v562 = vshrl.u32 %v561, 7
  %v563 = vsub.s32 %v560, %v562
  %v564 = vrot.slane %v557, %v563
  %v566 = vunpack.c.l.s4 1983009808
  %v567 = vunpack.c.0.s8 %v566
  %v568 = vlaneseq
  %v569 = vshrl.u32 %v568, 7
  %v570 = vsub.s32 %v567, %v569
  %v571 = vrot.slane %v537, %v570
  %v572 = vcombine.low %v538, %v538
  %v574 = vunpack.c.l.s4 1983009808
  %v575 = vunpack.c.0.s8 %v574
  %v576 = vlaneseq
  %v577 = vshrl.u32 %v576, 7
  %v578 = vsub.s32 %v575, %v577
  %v579 = vrot.slane %v572, %v578
  %v581 = vunpack.c.l.s4 1983009808
  %v582 = vunpack.c.0.s8 %v581
  %v583 = vlaneseq
  %v584 = vshrl.u32 %v583, 7
  %v585 = vsub.s32 %v582, %v584
  %v586 = vrot.slane %v538, %v585
  %587 = vrot.lane.b32.xlu0 %v549, 120
  %v588 = vpop.permute.xlu0 %587
  %589 = vrot.lane.b32.xlu0 %v556, 120
  %v590 = vpop.permute.xlu0 %589
  %591 = vrot.lane.b32.xlu0 %v564, 120
  %v592 = vpop.permute.xlu0 %591
  %593 = vrot.lane.b32.xlu0 %v571, 120
  %v594 = vpop.permute.xlu0 %593
  %595 = vrot.lane.b32.xlu0 %v579, 120
  %v596 = vpop.permute.xlu0 %595
  %597 = vrot.lane.b32.xlu0 %v586, 120
  %v598 = vpop.permute.xlu0 %597
  %v599 = vrot.slane %v588, 4
  %v600 = vrot.slane %v590, 4
  %v601 = vrot.slane %v592, 4
  %v602 = vrot.slane %v594, 4
  %v603 = vrot.slane %v596, 4
  %v604 = vrot.slane %v598, 4
  %v605 = vsel %vm139, %v599, %v600
  %vm606 = vcmask 982016
  %v607 = vsel %vm606, %v588, %v605
  %v608 = vsel %vm139, %v600, %v601
  %v609 = vsel %vm606, %v590, %v608
  %v610 = vsel %vm139, %v601, %v602
  %v611 = vsel %vm606, %v592, %v610
  %v612 = vsel %vm139, %v602, %v603
  %v613 = vsel %vm606, %v594, %v612
  %v614 = vsel %vm139, %v603, %v604
  %v615 = vsel %vm606, %v596, %v614
  %v616 = vsel %vm606, %v598, %v604
  %623 = vst [vmem:[#allocation2 + $0x58] sm:$0xcc] %v607
  %624 = vst [vmem:[#allocation2 + $0x60] sm:$0xcc] %v609
  %625 = vst [vmem:[#allocation2 + $0x68] sm:$0xcc] %v611
  %626 = vst [vmem:[#allocation2 + $0x70] sm:$0xcc] %v613
  %627 = vst [vmem:[#allocation2 + $0x78] sm:$0xcc] %v615
  %628 = vst [vmem:[#allocation2 + $0x80] sm:$0xc] %v616
  %v629 = vld [vmem:[%s0 + $0x2] sm:$0xff]
  %v630 = vld [vmem:[%s0 + $0xa] sm:$0xff]
  %v631 = vld [vmem:[%s0 + $0x12] sm:$0xff]
  %v635 = vcombine.high %v629, %v629
  %v637 = vunpack.c.l.s4 1983009808
  %v638 = vunpack.c.0.s8 %v637
  %v639 = vlaneseq
  %v640 = vshrl.u32 %v639, 7
  %v641 = vsub.s32 %v638, %v640
  %v642 = vrot.slane %v629, %v641
  %v644 = vunpack.c.l.s4 1983009808
  %v645 = vunpack.c.0.s8 %v644
  %v646 = vlaneseq
  %v647 = vshrl.u32 %v646, 7
  %v648 = vsub.s32 %v645, %v647
  %v649 = vrot.slane %v635, %v648
  %v650 = vcombine.high %v630, %v630
  %v652 = vunpack.c.l.s4 1983009808
  %v653 = vunpack.c.0.s8 %v652
  %v654 = vlaneseq
  %v655 = vshrl.u32 %v654, 7
  %v656 = vsub.s32 %v653, %v655
  %v657 = vrot.slane %v630, %v656
  %v659 = vunpack.c.l.s4 1983009808
  %v660 = vunpack.c.0.s8 %v659
  %v661 = vlaneseq
  %v662 = vshrl.u32 %v661, 7
  %v663 = vsub.s32 %v660, %v662
  %v664 = vrot.slane %v650, %v663
  %v665 = vcombine.high %v631, %v631
  %v667 = vunpack.c.l.s4 1983009808
  %v668 = vunpack.c.0.s8 %v667
  %v669 = vlaneseq
  %v670 = vshrl.u32 %v669, 7
  %v671 = vsub.s32 %v668, %v670
  %v672 = vrot.slane %v631, %v671
  %v674 = vunpack.c.l.s4 1983009808
  %v675 = vunpack.c.0.s8 %v674
  %v676 = vlaneseq
  %v677 = vshrl.u32 %v676, 7
  %v678 = vsub.s32 %v675, %v677
  %v679 = vrot.slane %v665, %v678
  %680 = vrot.lane.b32.xlu0 %v642, 96
  %v681 = vpop.permute.xlu0 %680
  %682 = vrot.lane.b32.xlu0 %v649, 96
  %v683 = vpop.permute.xlu0 %682
  %684 = vrot.lane.b32.xlu0 %v657, 96
  %v685 = vpop.permute.xlu0 %684
  %686 = vrot.lane.b32.xlu0 %v664, 96
  %v687 = vpop.permute.xlu0 %686
  %688 = vrot.lane.b32.xlu0 %v672, 96
  %v689 = vpop.permute.xlu0 %688
  %690 = vrot.lane.b32.xlu0 %v679, 96
  %v691 = vpop.permute.xlu0 %690
  %v692 = vrot.slane %v681, 4
  %v693 = vrot.slane %v683, 4
  %v694 = vrot.slane %v685, 4
  %v695 = vrot.slane %v687, 4
  %v696 = vrot.slane %v689, 4
  %v697 = vrot.slane %v691, 4
  %v698 = vsel %vm139, %v692, %v693
  %vm699 = vcmask 785408
  %v700 = vsel %vm699, %v681, %v698
  %v701 = vsel %vm139, %v693, %v694
  %v702 = vsel %vm699, %v683, %v701
  %v703 = vsel %vm139, %v694, %v695
  %v704 = vsel %vm699, %v685, %v703
  %v705 = vsel %vm139, %v695, %v696
  %v706 = vsel %vm699, %v687, %v705
  %v707 = vsel %vm139, %v696, %v697
  %v708 = vsel %vm699, %v689, %v707
  %v709 = vsel %vm699, %v691, %v697
  %716 = vst [vmem:[#allocation2 + $0x84] sm:$0x33] %v700
  %717 = vst [vmem:[#allocation2 + $0x8c] sm:$0x33] %v702
  %718 = vst [vmem:[#allocation2 + $0x94] sm:$0x33] %v704
  %719 = vst [vmem:[#allocation2 + $0x9c] sm:$0x33] %v706
  %720 = vst [vmem:[#allocation2 + $0xa4] sm:$0x33] %v708
  %721 = vst [vmem:[#allocation2 + $0xac] sm:$0x3] %v709
  %v722 = vld [vmem:[%s0 + $0x2] sm:$0xff]
  %v723 = vld [vmem:[%s0 + $0xa] sm:$0xff]
  %v724 = vld [vmem:[%s0 + $0x12] sm:$0xff]
  %v728 = vcombine.low %v722, %v722
  %v730 = vunpack.c.l.s4 1983009808
  %v731 = vunpack.c.0.s8 %v730
  %v732 = vlaneseq
  %v733 = vshrl.u32 %v732, 7
  %v734 = vsub.s32 %v731, %v733
  %v735 = vrot.slane %v728, %v734
  %v737 = vunpack.c.l.s4 1983009808
  %v738 = vunpack.c.0.s8 %v737
  %v739 = vlaneseq
  %v740 = vshrl.u32 %v739, 7
  %v741 = vsub.s32 %v738, %v740
  %v742 = vrot.slane %v722, %v741
  %v743 = vcombine.low %v723, %v723
  %v745 = vunpack.c.l.s4 1983009808
  %v746 = vunpack.c.0.s8 %v745
  %v747 = vlaneseq
  %v748 = vshrl.u32 %v747, 7
  %v749 = vsub.s32 %v746, %v748
  %v750 = vrot.slane %v743, %v749
  %v752 = vunpack.c.l.s4 1983009808
  %v753 = vunpack.c.0.s8 %v752
  %v754 = vlaneseq
  %v755 = vshrl.u32 %v754, 7
  %v756 = vsub.s32 %v753, %v755
  %v757 = vrot.slane %v723, %v756
  %v758 = vcombine.low %v724, %v724
  %v760 = vunpack.c.l.s4 1983009808
  %v761 = vunpack.c.0.s8 %v760
  %v762 = vlaneseq
  %v763 = vshrl.u32 %v762, 7
  %v764 = vsub.s32 %v761, %v763
  %v765 = vrot.slane %v758, %v764
  %v767 = vunpack.c.l.s4 1983009808
  %v768 = vunpack.c.0.s8 %v767
  %v769 = vlaneseq
  %v770 = vshrl.u32 %v769, 7
  %v771 = vsub.s32 %v768, %v770
  %v772 = vrot.slane %v724, %v771
  %773 = vrot.lane.b32.xlu0 %v735, 95
  %v774 = vpop.permute.xlu0 %773
  %775 = vrot.lane.b32.xlu0 %v742, 95
  %v776 = vpop.permute.xlu0 %775
  %777 = vrot.lane.b32.xlu0 %v750, 95
  %v778 = vpop.permute.xlu0 %777
  %779 = vrot.lane.b32.xlu0 %v757, 95
  %v780 = vpop.permute.xlu0 %779
  %781 = vrot.lane.b32.xlu0 %v765, 95
  %v782 = vpop.permute.xlu0 %781
  %783 = vrot.lane.b32.xlu0 %v772, 95
  %v784 = vpop.permute.xlu0 %783
  %v785 = vrot.slane %v774, 4
  %v786 = vrot.slane %v776, 4
  %v787 = vrot.slane %v778, 4
  %v788 = vrot.slane %v780, 4
  %v789 = vrot.slane %v782, 4
  %v790 = vrot.slane %v784, 4
  %v791 = vsel %vm139, %v785, %v786
  %vm792 = vcmask 777216
  %v793 = vsel %vm792, %v774, %v791
  %v794 = vsel %vm139, %v786, %v787
  %v795 = vsel %vm792, %v776, %v794
  %v796 = vsel %vm139, %v787, %v788
  %v797 = vsel %vm792, %v778, %v796
  %v798 = vsel %vm139, %v788, %v789
  %v799 = vsel %vm792, %v780, %v798
  %v800 = vsel %vm139, %v789, %v790
  %v801 = vsel %vm792, %v782, %v800
  %v802 = vsel %vm792, %v784, %v790
  %809 = vst [vmem:[#allocation2 + $0x84] sm:$0xcc] %v793
  %810 = vst [vmem:[#allocation2 + $0x8c] sm:$0xcc] %v795
  %811 = vst [vmem:[#allocation2 + $0x94] sm:$0xcc] %v797
  %812 = vst [vmem:[#allocation2 + $0x9c] sm:$0xcc] %v799
  %813 = vst [vmem:[#allocation2 + $0xa4] sm:$0xcc] %v801
  %814 = vst [vmem:[#allocation2 + $0xac] sm:$0xc] %v802
  %v815 = vld [vmem:[%s0 + $0x2] sm:$0xff]
  %v816 = vld [vmem:[%s0 + $0xa] sm:$0xff]
  %v817 = vld [vmem:[%s0 + $0x12] sm:$0xff]
  %v821 = vcombine.high %v815, %v815
  %v823 = vunpack.c.l.s4 1983009808
  %v824 = vunpack.c.0.s8 %v823
  %v825 = vlaneseq
  %v826 = vshrl.u32 %v825, 7
  %v827 = vsub.s32 %v824, %v826
  %v828 = vrot.slane %v815, %v827
  %v830 = vunpack.c.l.s4 1983009808
  %v831 = vunpack.c.0.s8 %v830
  %v832 = vlaneseq
  %v833 = vshrl.u32 %v832, 7
  %v834 = vsub.s32 %v831, %v833
  %v835 = vrot.slane %v821, %v834
  %v836 = vcombine.high %v816, %v816
  %v838 = vunpack.c.l.s4 1983009808
  %v839 = vunpack.c.0.s8 %v838
  %v840 = vlaneseq
  %v841 = vshrl.u32 %v840, 7
  %v842 = vsub.s32 %v839, %v841
  %v843 = vrot.slane %v816, %v842
  %v845 = vunpack.c.l.s4 1983009808
  %v846 = vunpack.c.0.s8 %v845
  %v847 = vlaneseq
  %v848 = vshrl.u32 %v847, 7
  %v849 = vsub.s32 %v846, %v848
  %v850 = vrot.slane %v836, %v849
  %v851 = vcombine.high %v817, %v817
  %v853 = vunpack.c.l.s4 1983009808
  %v854 = vunpack.c.0.s8 %v853
  %v855 = vlaneseq
  %v856 = vshrl.u32 %v855, 7
  %v857 = vsub.s32 %v854, %v856
  %v858 = vrot.slane %v817, %v857
  %v860 = vunpack.c.l.s4 1983009808
  %v861 = vunpack.c.0.s8 %v860
  %v862 = vlaneseq
  %v863 = vshrl.u32 %v862, 7
  %v864 = vsub.s32 %v861, %v863
  %v865 = vrot.slane %v851, %v864
  %866 = vrot.lane.b32.xlu0 %v828, 94
  %v867 = vpop.permute.xlu0 %866
  %868 = vrot.lane.b32.xlu0 %v835, 94
  %v869 = vpop.permute.xlu0 %868
  %870 = vrot.lane.b32.xlu0 %v843, 94
  %v871 = vpop.permute.xlu0 %870
  %872 = vrot.lane.b32.xlu0 %v850, 94
  %v873 = vpop.permute.xlu0 %872
  %874 = vrot.lane.b32.xlu0 %v858, 94
  %v875 = vpop.permute.xlu0 %874
  %876 = vrot.lane.b32.xlu0 %v865, 94
  %v877 = vpop.permute.xlu0 %876
  %v878 = vrot.slane %v867, 4
  %v879 = vrot.slane %v869, 4
  %v880 = vrot.slane %v871, 4
  %v881 = vrot.slane %v873, 4
  %v882 = vrot.slane %v875, 4
  %v883 = vrot.slane %v877, 4
  %v884 = vsel %vm139, %v878, %v879
  %vm885 = vcmask 769024
  %v886 = vsel %vm885, %v867, %v884
  %v887 = vsel %vm139, %v879, %v880
  %v888 = vsel %vm885, %v869, %v887
  %v889 = vsel %vm139, %v880, %v881
  %v890 = vsel %vm885, %v871, %v889
  %v891 = vsel %vm139, %v881, %v882
  %v892 = vsel %vm885, %v873, %v891
  %v893 = vsel %vm139, %v882, %v883
  %v894 = vsel %vm885, %v875, %v893
  %v895 = vsel %vm885, %v877, %v883
  %902 = vst [vmem:[#allocation2 + $0xb0] sm:$0x33] %v886
  %903 = vst [vmem:[#allocation2 + $0xb8] sm:$0x33] %v888
  %904 = vst [vmem:[#allocation2 + $0xc0] sm:$0x33] %v890
  %905 = vst [vmem:[#allocation2 + $0xc8] sm:$0x33] %v892
  %906 = vst [vmem:[#allocation2 + $0xd0] sm:$0x33] %v894
  %907 = vst [vmem:[#allocation2 + $0xd8] sm:$0x3] %v895
  %v908 = vld [vmem:[%s0] sm:$0xff]
  %v909 = vld [vmem:[%s0 + $0x8] sm:$0xff]
  %v910 = vld [vmem:[%s0 + $0x10] sm:$0xff]
  %v914 = vcombine.low %v908, %v908
  %v916 = vunpack.c.l.s4 1983009808
  %v917 = vunpack.c.0.s8 %v916
  %v918 = vlaneseq
  %v919 = vshrl.u32 %v918, 7
  %v920 = vsub.s32 %v917, %v919
  %v921 = vrot.slane %v914, %v920
  %v923 = vunpack.c.l.s4 1983009808
  %v924 = vunpack.c.0.s8 %v923
  %v925 = vlaneseq
  %v926 = vshrl.u32 %v925, 7
  %v927 = vsub.s32 %v924, %v926
  %v928 = vrot.slane %v908, %v927
  %v929 = vcombine.low %v909, %v909
  %v931 = vunpack.c.l.s4 1983009808
  %v932 = vunpack.c.0.s8 %v931
  %v933 = vlaneseq
  %v934 = vshrl.u32 %v933, 7
  %v935 = vsub.s32 %v932, %v934
  %v936 = vrot.slane %v929, %v935
  %v938 = vunpack.c.l.s4 1983009808
  %v939 = vunpack.c.0.s8 %v938
  %v940 = vlaneseq
  %v941 = vshrl.u32 %v940, 7
  %v942 = vsub.s32 %v939, %v941
  %v943 = vrot.slane %v909, %v942
  %v944 = vcombine.low %v910, %v910
  %v946 = vunpack.c.l.s4 1983009808
  %v947 = vunpack.c.0.s8 %v946
  %v948 = vlaneseq
  %v949 = vshrl.u32 %v948, 7
  %v950 = vsub.s32 %v947, %v949
  %v951 = vrot.slane %v944, %v950
  %v953 = vunpack.c.l.s4 1983009808
  %v954 = vunpack.c.0.s8 %v953
  %v955 = vlaneseq
  %v956 = vshrl.u32 %v955, 7
  %v957 = vsub.s32 %v954, %v956
  %v958 = vrot.slane %v910, %v957
  %959 = vrot.lane.b32.xlu0 %v921, 74
  %v960 = vpop.permute.xlu0 %959
  %961 = vrot.lane.b32.xlu0 %v928, 74
  %v962 = vpop.permute.xlu0 %961
  %963 = vrot.lane.b32.xlu0 %v936, 74
  %v964 = vpop.permute.xlu0 %963
  %965 = vrot.lane.b32.xlu0 %v943, 74
  %v966 = vpop.permute.xlu0 %965
  %967 = vrot.lane.b32.xlu0 %v951, 74
  %v968 = vpop.permute.xlu0 %967
  %969 = vrot.lane.b32.xlu0 %v958, 74
  %v970 = vpop.permute.xlu0 %969
  %v971 = vrot.slane %v960, 4
  %v972 = vrot.slane %v962, 4
  %v973 = vrot.slane %v964, 4
  %v974 = vrot.slane %v966, 4
  %v975 = vrot.slane %v968, 4
  %v976 = vrot.slane %v970, 4
  %v977 = vsel %vm139, %v971, %v972
  %vm978 = vcmask 605184
  %v979 = vsel %vm978, %v960, %v977
  %v980 = vsel %vm139, %v972, %v973
  %v981 = vsel %vm978, %v962, %v980
  %v982 = vsel %vm139, %v973, %v974
  %v983 = vsel %vm978, %v964, %v982
  %v984 = vsel %vm139, %v974, %v975
  %v985 = vsel %vm978, %v966, %v984
  %v986 = vsel %vm139, %v975, %v976
  %v987 = vsel %vm978, %v968, %v986
  %v988 = vsel %vm978, %v970, %v976
  %995 = vst [vmem:[#allocation2 + $0xb0] sm:$0xcc] %v979
  %996 = vst [vmem:[#allocation2 + $0xb8] sm:$0xcc] %v981
  %997 = vst [vmem:[#allocation2 + $0xc0] sm:$0xcc] %v983
  %998 = vst [vmem:[#allocation2 + $0xc8] sm:$0xcc] %v985
  %999 = vst [vmem:[#allocation2 + $0xd0] sm:$0xcc] %v987
  %1000 = vst [vmem:[#allocation2 + $0xd8] sm:$0xc] %v988
  %v1001 = vld [vmem:[%s0] sm:$0xff]
  %v1002 = vld [vmem:[%s0 + $0x8] sm:$0xff]
  %v1003 = vld [vmem:[%s0 + $0x10] sm:$0xff]
  %v1007 = vcombine.high %v1001, %v1001
  %v1009 = vunpack.c.l.s4 1983009808
  %v1010 = vunpack.c.0.s8 %v1009
  %v1011 = vlaneseq
  %v1012 = vshrl.u32 %v1011, 7
  %v1013 = vsub.s32 %v1010, %v1012
  %v1014 = vrot.slane %v1001, %v1013
  %v1016 = vunpack.c.l.s4 1983009808
  %v1017 = vunpack.c.0.s8 %v1016
  %v1018 = vlaneseq
  %v1019 = vshrl.u32 %v1018, 7
  %v1020 = vsub.s32 %v1017, %v1019
  %v1021 = vrot.slane %v1007, %v1020
  %v1022 = vcombine.high %v1002, %v1002
  %v1024 = vunpack.c.l.s4 1983009808
  %v1025 = vunpack.c.0.s8 %v1024
  %v1026 = vlaneseq
  %v1027 = vshrl.u32 %v1026, 7
  %v1028 = vsub.s32 %v1025, %v1027
  %v1029 = vrot.slane %v1002, %v1028
  %v1031 = vunpack.c.l.s4 1983009808
  %v1032 = vunpack.c.0.s8 %v1031
  %v1033 = vlaneseq
  %v1034 = vshrl.u32 %v1033, 7
  %v1035 = vsub.s32 %v1032, %v1034
  %v1036 = vrot.slane %v1022, %v1035
  %v1037 = vcombine.high %v1003, %v1003
  %v1039 = vunpack.c.l.s4 1983009808
  %v1040 = vunpack.c.0.s8 %v1039
  %v1041 = vlaneseq
  %v1042 = vshrl.u32 %v1041, 7
  %v1043 = vsub.s32 %v1040, %v1042
  %v1044 = vrot.slane %v1003, %v1043
  %v1046 = vunpack.c.l.s4 1983009808
  %v1047 = vunpack.c.0.s8 %v1046
  %v1048 = vlaneseq
  %v1049 = vshrl.u32 %v1048, 7
  %v1050 = vsub.s32 %v1047, %v1049
  %v1051 = vrot.slane %v1037, %v1050
  %1052 = vrot.lane.b32.xlu0 %v1014, 71
  %v1053 = vpop.permute.xlu0 %1052
  %1054 = vrot.lane.b32.xlu0 %v1021, 71
  %v1055 = vpop.permute.xlu0 %1054
  %1056 = vrot.lane.b32.xlu0 %v1029, 71
  %v1057 = vpop.permute.xlu0 %1056
  %1058 = vrot.lane.b32.xlu0 %v1036, 71
  %v1059 = vpop.permute.xlu0 %1058
  %1060 = vrot.lane.b32.xlu0 %v1044, 71
  %v1061 = vpop.permute.xlu0 %1060
  %1062 = vrot.lane.b32.xlu0 %v1051, 71
  %v1063 = vpop.permute.xlu0 %1062
  %v1064 = vrot.slane %v1053, 4
  %v1065 = vrot.slane %v1055, 4
  %v1066 = vrot.slane %v1057, 4
  %v1067 = vrot.slane %v1059, 4
  %v1068 = vrot.slane %v1061, 4
  %v1069 = vrot.slane %v1063, 4
  %v1070 = vsel %vm139, %v1064, %v1065
  %vm1071 = vcmask 580608
  %v1072 = vsel %vm1071, %v1053, %v1070
  %v1073 = vsel %vm139, %v1065, %v1066
  %v1074 = vsel %vm1071, %v1055, %v1073
  %v1075 = vsel %vm139, %v1066, %v1067
  %v1076 = vsel %vm1071, %v1057, %v1075
  %v1077 = vsel %vm139, %v1067, %v1068
  %v1078 = vsel %vm1071, %v1059, %v1077
  %v1079 = vsel %vm139, %v1068, %v1069
  %v1080 = vsel %vm1071, %v1061, %v1079
  %v1081 = vsel %vm1071, %v1063, %v1069
  %1088 = vst [vmem:[#allocation2 + $0xdc] sm:$0x33] %v1072
  %1089 = vst [vmem:[#allocation2 + $0xe4] sm:$0x33] %v1074
  %1090 = vst [vmem:[#allocation2 + $0xec] sm:$0x33] %v1076
  %1091 = vst [vmem:[#allocation2 + $0xf4] sm:$0x33] %v1078
  %1092 = vst [vmem:[#allocation2 + $0xfc] sm:$0x33] %v1080
  %1093 = vst [vmem:[#allocation2 + $0x104] sm:$0x3] %v1081
  %v1094 = vld [vmem:[%s0] sm:$0xff]
  %v1095 = vld [vmem:[%s0 + $0x8] sm:$0xff]
  %v1096 = vld [vmem:[%s0 + $0x10] sm:$0xff]
  %v1100 = vcombine.low %v1094, %v1094
  %v1102 = vunpack.c.l.s4 1983009808
  %v1103 = vunpack.c.0.s8 %v1102
  %v1104 = vlaneseq
  %v1105 = vshrl.u32 %v1104, 7
  %v1106 = vsub.s32 %v1103, %v1105
  %v1107 = vrot.slane %v1100, %v1106
  %v1109 = vunpack.c.l.s4 1983009808
  %v1110 = vunpack.c.0.s8 %v1109
  %v1111 = vlaneseq
  %v1112 = vshrl.u32 %v1111, 7
  %v1113 = vsub.s32 %v1110, %v1112
  %v1114 = vrot.slane %v1094, %v1113
  %v1115 = vcombine.low %v1095, %v1095
  %v1117 = vunpack.c.l.s4 1983009808
  %v1118 = vunpack.c.0.s8 %v1117
  %v1119 = vlaneseq
  %v1120 = vshrl.u32 %v1119, 7
  %v1121 = vsub.s32 %v1118, %v1120
  %v1122 = vrot.slane %v1115, %v1121
  %v1124 = vunpack.c.l.s4 1983009808
  %v1125 = vunpack.c.0.s8 %v1124
  %v1126 = vlaneseq
  %v1127 = vshrl.u32 %v1126, 7
  %v1128 = vsub.s32 %v1125, %v1127
  %v1129 = vrot.slane %v1095, %v1128
  %v1130 = vcombine.low %v1096, %v1096
  %v1132 = vunpack.c.l.s4 1983009808
  %v1133 = vunpack.c.0.s8 %v1132
  %v1134 = vlaneseq
  %v1135 = vshrl.u32 %v1134, 7
  %v1136 = vsub.s32 %v1133, %v1135
  %v1137 = vrot.slane %v1130, %v1136
  %v1139 = vunpack.c.l.s4 1983009808
  %v1140 = vunpack.c.0.s8 %v1139
  %v1141 = vlaneseq
  %v1142 = vshrl.u32 %v1141, 7
  %v1143 = vsub.s32 %v1140, %v1142
  %v1144 = vrot.slane %v1096, %v1143
  %1145 = vrot.lane.b32.xlu0 %v1107, 68
  %v1146 = vpop.permute.xlu0 %1145
  %1147 = vrot.lane.b32.xlu0 %v1114, 68
  %v1148 = vpop.permute.xlu0 %1147
  %1149 = vrot.lane.b32.xlu0 %v1122, 68
  %v1150 = vpop.permute.xlu0 %1149
  %1151 = vrot.lane.b32.xlu0 %v1129, 68
  %v1152 = vpop.permute.xlu0 %1151
  %1153 = vrot.lane.b32.xlu0 %v1137, 68
  %v1154 = vpop.permute.xlu0 %1153
  %1155 = vrot.lane.b32.xlu0 %v1144, 68
  %v1156 = vpop.permute.xlu0 %1155
  %v1157 = vrot.slane %v1146, 4
  %v1158 = vrot.slane %v1148, 4
  %v1159 = vrot.slane %v1150, 4
  %v1160 = vrot.slane %v1152, 4
  %v1161 = vrot.slane %v1154, 4
  %v1162 = vrot.slane %v1156, 4
  %v1163 = vsel %vm139, %v1157, %v1158
  %vm1164 = vcmask 556032
  %v1165 = vsel %vm1164, %v1146, %v1163
  %v1166 = vsel %vm139, %v1158, %v1159
  %v1167 = vsel %vm1164, %v1148, %v1166
  %v1168 = vsel %vm139, %v1159, %v1160
  %v1169 = vsel %vm1164, %v1150, %v1168
  %v1170 = vsel %vm139, %v1160, %v1161
  %v1171 = vsel %vm1164, %v1152, %v1170
  %v1172 = vsel %vm139, %v1161, %v1162
  %v1173 = vsel %vm1164, %v1154, %v1172
  %v1174 = vsel %vm1164, %v1156, %v1162
  %1181 = vst [vmem:[#allocation2 + $0xdc] sm:$0xcc] %v1165
  %1182 = vst [vmem:[#allocation2 + $0xe4] sm:$0xcc] %v1167
  %1183 = vst [vmem:[#allocation2 + $0xec] sm:$0xcc] %v1169
  %1184 = vst [vmem:[#allocation2 + $0xf4] sm:$0xcc] %v1171
  %1185 = vst [vmem:[#allocation2 + $0xfc] sm:$0xcc] %v1173
  %1186 = vst [vmem:[#allocation2 + $0x104] sm:$0xc] %v1174
  %v1187 = vld [vmem:[%s0 + $0x2] sm:$0xff]
  %v1188 = vld [vmem:[%s0 + $0xa] sm:$0xff]
  %v1189 = vld [vmem:[%s0 + $0x12] sm:$0xff]
  %v1193 = vcombine.high %v1187, %v1187
  %v1195 = vunpack.c.l.s4 1983009808
  %v1196 = vunpack.c.0.s8 %v1195
  %v1197 = vlaneseq
  %v1198 = vshrl.u32 %v1197, 7
  %v1199 = vsub.s32 %v1196, %v1198
  %v1200 = vrot.slane %v1187, %v1199
  %v1202 = vunpack.c.l.s4 1983009808
  %v1203 = vunpack.c.0.s8 %v1202
  %v1204 = vlaneseq
  %v1205 = vshrl.u32 %v1204, 7
  %v1206 = vsub.s32 %v1203, %v1205
  %v1207 = vrot.slane %v1193, %v1206
  %v1208 = vcombine.high %v1188, %v1188
  %v1210 = vunpack.c.l.s4 1983009808
  %v1211 = vunpack.c.0.s8 %v1210
  %v1212 = vlaneseq
  %v1213 = vshrl.u32 %v1212, 7
  %v1214 = vsub.s32 %v1211, %v1213
  %v1215 = vrot.slane %v1188, %v1214
  %v1217 = vunpack.c.l.s4 1983009808
  %v1218 = vunpack.c.0.s8 %v1217
  %v1219 = vlaneseq
  %v1220 = vshrl.u32 %v1219, 7
  %v1221 = vsub.s32 %v1218, %v1220
  %v1222 = vrot.slane %v1208, %v1221
  %v1223 = vcombine.high %v1189, %v1189
  %v1225 = vunpack.c.l.s4 1983009808
  %v1226 = vunpack.c.0.s8 %v1225
  %v1227 = vlaneseq
  %v1228 = vshrl.u32 %v1227, 7
  %v1229 = vsub.s32 %v1226, %v1228
  %v1230 = vrot.slane %v1189, %v1229
  %v1232 = vunpack.c.l.s4 1983009808
  %v1233 = vunpack.c.0.s8 %v1232
  %v1234 = vlaneseq
  %v1235 = vshrl.u32 %v1234, 7
  %v1236 = vsub.s32 %v1233, %v1235
  %v1237 = vrot.slane %v1223, %v1236
  %1238 = vrot.lane.b32.xlu0 %v1200, 124
  %v1239 = vpop.permute.xlu0 %1238
  %1240 = vrot.lane.b32.xlu0 %v1207, 124
  %v1241 = vpop.permute.xlu0 %1240
  %1242 = vrot.lane.b32.xlu0 %v1215, 124
  %v1243 = vpop.permute.xlu0 %1242
  %1244 = vrot.lane.b32.xlu0 %v1222, 124
  %v1245 = vpop.permute.xlu0 %1244
  %1246 = vrot.lane.b32.xlu0 %v1230, 124
  %v1247 = vpop.permute.xlu0 %1246
  %1248 = vrot.lane.b32.xlu0 %v1237, 124
  %v1249 = vpop.permute.xlu0 %1248
  %v1250 = vrot.slane %v1239, 4
  %v1251 = vrot.slane %v1241, 4
  %v1252 = vrot.slane %v1243, 4
  %v1253 = vrot.slane %v1245, 4
  %v1254 = vrot.slane %v1247, 4
  %v1255 = vrot.slane %v1249, 4
  %v1256 = vsel %vm139, %v1250, %v1251
  %vm1257 = vcmask 1014784
  %v1258 = vsel %vm1257, %v1239, %v1256
  %v1259 = vsel %vm139, %v1251, %v1252
  %v1260 = vsel %vm1257, %v1241, %v1259
  %v1261 = vsel %vm139, %v1252, %v1253
  %v1262 = vsel %vm1257, %v1243, %v1261
  %v1263 = vsel %vm139, %v1253, %v1254
  %v1264 = vsel %vm1257, %v1245, %v1263
  %v1265 = vsel %vm139, %v1254, %v1255
  %v1266 = vsel %vm1257, %v1247, %v1265
  %v1267 = vsel %vm1257, %v1249, %v1255
  %1274 = vst [vmem:[#allocation2 + $0x108] sm:$0x33] %v1258
  %1275 = vst [vmem:[#allocation2 + $0x110] sm:$0x33] %v1260
  %1276 = vst [vmem:[#allocation2 + $0x118] sm:$0x33] %v1262
  %1277 = vst [vmem:[#allocation2 + $0x120] sm:$0x33] %v1264
  %1278 = vst [vmem:[#allocation2 + $0x128] sm:$0x33] %v1266
  %1279 = vst [vmem:[#allocation2 + $0x130] sm:$0x3] %v1267
  %v1280 = vld [vmem:[%s0 + $0x2] sm:$0xff]
  %v1281 = vld [vmem:[%s0 + $0xa] sm:$0xff]
  %v1282 = vld [vmem:[%s0 + $0x12] sm:$0xff]
  %v1286 = vcombine.low %v1280, %v1280
  %v1288 = vunpack.c.l.s4 1983009808
  %v1289 = vunpack.c.0.s8 %v1288
  %v1290 = vlaneseq
  %v1291 = vshrl.u32 %v1290, 7
  %v1292 = vsub.s32 %v1289, %v1291
  %v1293 = vrot.slane %v1286, %v1292
  %v1295 = vunpack.c.l.s4 1983009808
  %v1296 = vunpack.c.0.s8 %v1295
  %v1297 = vlaneseq
  %v1298 = vshrl.u32 %v1297, 7
  %v1299 = vsub.s32 %v1296, %v1298
  %v1300 = vrot.slane %v1280, %v1299
  %v1301 = vcombine.low %v1281, %v1281
  %v1303 = vunpack.c.l.s4 1983009808
  %v1304 = vunpack.c.0.s8 %v1303
  %v1305 = vlaneseq
  %v1306 = vshrl.u32 %v1305, 7
  %v1307 = vsub.s32 %v1304, %v1306
  %v1308 = vrot.slane %v1301, %v1307
  %v1310 = vunpack.c.l.s4 1983009808
  %v1311 = vunpack.c.0.s8 %v1310
  %v1312 = vlaneseq
  %v1313 = vshrl.u32 %v1312, 7
  %v1314 = vsub.s32 %v1311, %v1313
  %v1315 = vrot.slane %v1281, %v1314
  %v1316 = vcombine.low %v1282, %v1282
  %v1318 = vunpack.c.l.s4 1983009808
  %v1319 = vunpack.c.0.s8 %v1318
  %v1320 = vlaneseq
  %v1321 = vshrl.u32 %v1320, 7
  %v1322 = vsub.s32 %v1319, %v1321
  %v1323 = vrot.slane %v1316, %v1322
  %v1325 = vunpack.c.l.s4 1983009808
  %v1326 = vunpack.c.0.s8 %v1325
  %v1327 = vlaneseq
  %v1328 = vshrl.u32 %v1327, 7
  %v1329 = vsub.s32 %v1326, %v1328
  %v1330 = vrot.slane %v1282, %v1329
  %1331 = vrot.lane.b32.xlu0 %v1293, 121
  %v1332 = vpop.permute.xlu0 %1331
  %1333 = vrot.lane.b32.xlu0 %v1300, 121
  %v1334 = vpop.permute.xlu0 %1333
  %1335 = vrot.lane.b32.xlu0 %v1308, 121
  %v1336 = vpop.permute.xlu0 %1335
  %1337 = vrot.lane.b32.xlu0 %v1315, 121
  %v1338 = vpop.permute.xlu0 %1337
  %1339 = vrot.lane.b32.xlu0 %v1323, 121
  %v1340 = vpop.permute.xlu0 %1339
  %1341 = vrot.lane.b32.xlu0 %v1330, 121
  %v1342 = vpop.permute.xlu0 %1341
  %v1343 = vrot.slane %v1332, 4
  %v1344 = vrot.slane %v1334, 4
  %v1345 = vrot.slane %v1336, 4
  %v1346 = vrot.slane %v1338, 4
  %v1347 = vrot.slane %v1340, 4
  %v1348 = vrot.slane %v1342, 4
  %v1349 = vsel %vm139, %v1343, %v1344
  %v1350 = vsel %vm513, %v1332, %v1349
  %v1351 = vsel %vm139, %v1344, %v1345
  %v1352 = vsel %vm513, %v1334, %v1351
  %v1353 = vsel %vm139, %v1345, %v1346
  %v1354 = vsel %vm513, %v1336, %v1353
  %v1355 = vsel %vm139, %v1346, %v1347
  %v1356 = vsel %vm513, %v1338, %v1355
  %v1357 = vsel %vm139, %v1347, %v1348
  %v1358 = vsel %vm513, %v1340, %v1357
  %v1359 = vsel %vm513, %v1342, %v1348
  %1366 = vst [vmem:[#allocation2 + $0x108] sm:$0xcc] %v1350
  %1367 = vst [vmem:[#allocation2 + $0x110] sm:$0xcc] %v1352
  %1368 = vst [vmem:[#allocation2 + $0x118] sm:$0xcc] %v1354
  %1369 = vst [vmem:[#allocation2 + $0x120] sm:$0xcc] %v1356
  %1370 = vst [vmem:[#allocation2 + $0x128] sm:$0xcc] %v1358
  %1371 = vst [vmem:[#allocation2 + $0x130] sm:$0xc] %v1359
  %v1372 = vld [vmem:[%s0 + $0x2] sm:$0xff]
  %v1373 = vld [vmem:[%s0 + $0xa] sm:$0xff]
  %v1374 = vld [vmem:[%s0 + $0x12] sm:$0xff]
  %v1378 = vcombine.high %v1372, %v1372
  %v1380 = vunpack.c.l.s4 1983009808
  %v1381 = vunpack.c.0.s8 %v1380
  %v1382 = vlaneseq
  %v1383 = vshrl.u32 %v1382, 7
  %v1384 = vsub.s32 %v1381, %v1383
  %v1385 = vrot.slane %v1372, %v1384
  %v1387 = vunpack.c.l.s4 1983009808
  %v1388 = vunpack.c.0.s8 %v1387
  %v1389 = vlaneseq
  %v1390 = vshrl.u32 %v1389, 7
  %v1391 = vsub.s32 %v1388, %v1390
  %v1392 = vrot.slane %v1378, %v1391
  %v1393 = vcombine.high %v1373, %v1373
  %v1395 = vunpack.c.l.s4 1983009808
  %v1396 = vunpack.c.0.s8 %v1395
  %v1397 = vlaneseq
  %v1398 = vshrl.u32 %v1397, 7
  %v1399 = vsub.s32 %v1396, %v1398
  %v1400 = vrot.slane %v1373, %v1399
  %v1402 = vunpack.c.l.s4 1983009808
  %v1403 = vunpack.c.0.s8 %v1402
  %v1404 = vlaneseq
  %v1405 = vshrl.u32 %v1404, 7
  %v1406 = vsub.s32 %v1403, %v1405
  %v1407 = vrot.slane %v1393, %v1406
  %v1408 = vcombine.high %v1374, %v1374
  %v1410 = vunpack.c.l.s4 1983009808
  %v1411 = vunpack.c.0.s8 %v1410
  %v1412 = vlaneseq
  %v1413 = vshrl.u32 %v1412, 7
  %v1414 = vsub.s32 %v1411, %v1413
  %v1415 = vrot.slane %v1374, %v1414
  %v1417 = vunpack.c.l.s4 1983009808
  %v1418 = vunpack.c.0.s8 %v1417
  %v1419 = vlaneseq
  %v1420 = vshrl.u32 %v1419, 7
  %v1421 = vsub.s32 %v1418, %v1420
  %v1422 = vrot.slane %v1408, %v1421
  %1423 = vrot.lane.b32.xlu0 %v1385, 118
  %v1424 = vpop.permute.xlu0 %1423
  %1425 = vrot.lane.b32.xlu0 %v1392, 118
  %v1426 = vpop.permute.xlu0 %1425
  %1427 = vrot.lane.b32.xlu0 %v1400, 118
  %v1428 = vpop.permute.xlu0 %1427
  %1429 = vrot.lane.b32.xlu0 %v1407, 118
  %v1430 = vpop.permute.xlu0 %1429
  %1431 = vrot.lane.b32.xlu0 %v1415, 118
  %v1432 = vpop.permute.xlu0 %1431
  %1433 = vrot.lane.b32.xlu0 %v1422, 118
  %v1434 = vpop.permute.xlu0 %1433
  %v1435 = vrot.slane %v1424, 4
  %v1436 = vrot.slane %v1426, 4
  %v1437 = vrot.slane %v1428, 4
  %v1438 = vrot.slane %v1430, 4
  %v1439 = vrot.slane %v1432, 4
  %v1440 = vrot.slane %v1434, 4
  %v1441 = vsel %vm139, %v1435, %v1436
  %vm1442 = vcmask 965632
  %v1443 = vsel %vm1442, %v1424, %v1441
  %v1444 = vsel %vm139, %v1436, %v1437
  %v1445 = vsel %vm1442, %v1426, %v1444
  %v1446 = vsel %vm139, %v1437, %v1438
  %v1447 = vsel %vm1442, %v1428, %v1446
  %v1448 = vsel %vm139, %v1438, %v1439
  %v1449 = vsel %vm1442, %v1430, %v1448
  %v1450 = vsel %vm139, %v1439, %v1440
  %v1451 = vsel %vm1442, %v1432, %v1450
  %v1452 = vsel %vm1442, %v1434, %v1440
  %1459 = vst [vmem:[#allocation2 + $0x134] sm:$0x33] %v1443
  %1460 = vst [vmem:[#allocation2 + $0x13c] sm:$0x33] %v1445
  %1461 = vst [vmem:[#allocation2 + $0x144] sm:$0x33] %v1447
  %1462 = vst [vmem:[#allocation2 + $0x14c] sm:$0x33] %v1449
  %1463 = vst [vmem:[#allocation2 + $0x154] sm:$0x33] %v1451
  %1464 = vst [vmem:[#allocation2 + $0x15c] sm:$0x3] %v1452
  %v1465 = vld [vmem:[%s0 + $0x2] sm:$0xff]
  %v1466 = vld [vmem:[%s0 + $0xa] sm:$0xff]
  %v1467 = vld [vmem:[%s0 + $0x12] sm:$0xff]
  %v1471 = vcombine.low %v1465, %v1465
  %v1473 = vunpack.c.l.s4 1983009808
  %v1474 = vunpack.c.0.s8 %v1473
  %v1475 = vlaneseq
  %v1476 = vshrl.u32 %v1475, 7
  %v1477 = vsub.s32 %v1474, %v1476
  %v1478 = vrot.slane %v1471, %v1477
  %v1480 = vunpack.c.l.s4 1983009808
  %v1481 = vunpack.c.0.s8 %v1480
  %v1482 = vlaneseq
  %v1483 = vshrl.u32 %v1482, 7
  %v1484 = vsub.s32 %v1481, %v1483
  %v1485 = vrot.slane %v1465, %v1484
  %v1486 = vcombine.low %v1466, %v1466
  %v1488 = vunpack.c.l.s4 1983009808
  %v1489 = vunpack.c.0.s8 %v1488
  %v1490 = vlaneseq
  %v1491 = vshrl.u32 %v1490, 7
  %v1492 = vsub.s32 %v1489, %v1491
  %v1493 = vrot.slane %v1486, %v1492
  %v1495 = vunpack.c.l.s4 1983009808
  %v1496 = vunpack.c.0.s8 %v1495
  %v1497 = vlaneseq
  %v1498 = vshrl.u32 %v1497, 7
  %v1499 = vsub.s32 %v1496, %v1498
  %v1500 = vrot.slane %v1466, %v1499
  %v1501 = vcombine.low %v1467, %v1467
  %v1503 = vunpack.c.l.s4 1983009808
  %v1504 = vunpack.c.0.s8 %v1503
  %v1505 = vlaneseq
  %v1506 = vshrl.u32 %v1505, 7
  %v1507 = vsub.s32 %v1504, %v1506
  %v1508 = vrot.slane %v1501, %v1507
  %v1510 = vunpack.c.l.s4 1983009808
  %v1511 = vunpack.c.0.s8 %v1510
  %v1512 = vlaneseq
  %v1513 = vshrl.u32 %v1512, 7
  %v1514 = vsub.s32 %v1511, %v1513
  %v1515 = vrot.slane %v1467, %v1514
  %1516 = vrot.lane.b32.xlu0 %v1478, 46
  %v1517 = vpop.permute.xlu0 %1516
  %1518 = vrot.lane.b32.xlu0 %v1485, 46
  %v1519 = vpop.permute.xlu0 %1518
  %1520 = vrot.lane.b32.xlu0 %v1493, 46
  %v1521 = vpop.permute.xlu0 %1520
  %1522 = vrot.lane.b32.xlu0 %v1500, 46
  %v1523 = vpop.permute.xlu0 %1522
  %1524 = vrot.lane.b32.xlu0 %v1508, 46
  %v1525 = vpop.permute.xlu0 %1524
  %1526 = vrot.lane.b32.xlu0 %v1515, 46
  %v1527 = vpop.permute.xlu0 %1526
  %v1528 = vrot.slane %v1517, 4
  %v1529 = vrot.slane %v1519, 4
  %v1530 = vrot.slane %v1521, 4
  %v1531 = vrot.slane %v1523, 4
  %v1532 = vrot.slane %v1525, 4
  %v1533 = vrot.slane %v1527, 4
  %v1534 = vsel %vm139, %v1528, %v1529
  %vm1535 = vcmask 375808
  %v1536 = vsel %vm1535, %v1517, %v1534
  %v1537 = vsel %vm139, %v1529, %v1530
  %v1538 = vsel %vm1535, %v1519, %v1537
  %v1539 = vsel %vm139, %v1530, %v1531
  %v1540 = vsel %vm1535, %v1521, %v1539
  %v1541 = vsel %vm139, %v1531, %v1532
  %v1542 = vsel %vm1535, %v1523, %v1541
  %v1543 = vsel %vm139, %v1532, %v1533
  %v1544 = vsel %vm1535, %v1525, %v1543
  %v1545 = vsel %vm1535, %v1527, %v1533
  %1552 = vst [vmem:[#allocation2 + $0x134] sm:$0xcc] %v1536
  %1553 = vst [vmem:[#allocation2 + $0x13c] sm:$0xcc] %v1538
  %1554 = vst [vmem:[#allocation2 + $0x144] sm:$0xcc] %v1540
  %1555 = vst [vmem:[#allocation2 + $0x14c] sm:$0xcc] %v1542
  %1556 = vst [vmem:[#allocation2 + $0x154] sm:$0xcc] %v1544
  %1557 = vst [vmem:[#allocation2 + $0x15c] sm:$0xc] %v1545
  %v1558 = vld [vmem:[%s0 + $0x2] sm:$0xff]
  %v1559 = vld [vmem:[%s0 + $0xa] sm:$0xff]
  %v1560 = vld [vmem:[%s0 + $0x12] sm:$0xff]
  %v1564 = vcombine.high %v1558, %v1558
  %v1566 = vunpack.c.l.s4 1983009808
  %v1567 = vunpack.c.0.s8 %v1566
  %v1568 = vlaneseq
  %v1569 = vshrl.u32 %v1568, 7
  %v1570 = vsub.s32 %v1567, %v1569
  %v1571 = vrot.slane %v1558, %v1570
  %v1573 = vunpack.c.l.s4 1983009808
  %v1574 = vunpack.c.0.s8 %v1573
  %v1575 = vlaneseq
  %v1576 = vshrl.u32 %v1575, 7
  %v1577 = vsub.s32 %v1574, %v1576
  %v1578 = vrot.slane %v1564, %v1577
  %v1579 = vcombine.high %v1559, %v1559
  %v1581 = vunpack.c.l.s4 1983009808
  %v1582 = vunpack.c.0.s8 %v1581
  %v1583 = vlaneseq
  %v1584 = vshrl.u32 %v1583, 7
  %v1585 = vsub.s32 %v1582, %v1584
  %v1586 = vrot.slane %v1559, %v1585
  %v1588 = vunpack.c.l.s4 1983009808
  %v1589 = vunpack.c.0.s8 %v1588
  %v1590 = vlaneseq
  %v1591 = vshrl.u32 %v1590, 7
  %v1592 = vsub.s32 %v1589, %v1591
  %v1593 = vrot.slane %v1579, %v1592
  %v1594 = vcombine.high %v1560, %v1560
  %v1596 = vunpack.c.l.s4 1983009808
  %v1597 = vunpack.c.0.s8 %v1596
  %v1598 = vlaneseq
  %v1599 = vshrl.u32 %v1598, 7
  %v1600 = vsub.s32 %v1597, %v1599
  %v1601 = vrot.slane %v1560, %v1600
  %v1603 = vunpack.c.l.s4 1983009808
  %v1604 = vunpack.c.0.s8 %v1603
  %v1605 = vlaneseq
  %v1606 = vshrl.u32 %v1605, 7
  %v1607 = vsub.s32 %v1604, %v1606
  %v1608 = vrot.slane %v1594, %v1607
  %1609 = vrot.lane.b32.xlu0 %v1571, 43
  %v1610 = vpop.permute.xlu0 %1609
  %1611 = vrot.lane.b32.xlu0 %v1578, 43
  %v1612 = vpop.permute.xlu0 %1611
  %1613 = vrot.lane.b32.xlu0 %v1586, 43
  %v1614 = vpop.permute.xlu0 %1613
  %1615 = vrot.lane.b32.xlu0 %v1593, 43
  %v1616 = vpop.permute.xlu0 %1615
  %1617 = vrot.lane.b32.xlu0 %v1601, 43
  %v1618 = vpop.permute.xlu0 %1617
  %1619 = vrot.lane.b32.xlu0 %v1608, 43
  %v1620 = vpop.permute.xlu0 %1619
  %v1621 = vrot.slane %v1610, 4
  %v1622 = vrot.slane %v1612, 4
  %v1623 = vrot.slane %v1614, 4
  %v1624 = vrot.slane %v1616, 4
  %v1625 = vrot.slane %v1618, 4
  %v1626 = vrot.slane %v1620, 4
  %v1627 = vsel %vm139, %v1621, %v1622
  %vm1628 = vcmask 351232
  %v1629 = vsel %vm1628, %v1610, %v1627
  %v1630 = vsel %vm139, %v1622, %v1623
  %v1631 = vsel %vm1628, %v1612, %v1630
  %v1632 = vsel %vm139, %v1623, %v1624
  %v1633 = vsel %vm1628, %v1614, %v1632
  %v1634 = vsel %vm139, %v1624, %v1625
  %v1635 = vsel %vm1628, %v1616, %v1634
  %v1636 = vsel %vm139, %v1625, %v1626
  %v1637 = vsel %vm1628, %v1618, %v1636
  %v1638 = vsel %vm1628, %v1620, %v1626
  %1645 = vst [vmem:[#allocation2 + $0x160] sm:$0x33] %v1629
  %1646 = vst [vmem:[#allocation2 + $0x168] sm:$0x33] %v1631
  %1647 = vst [vmem:[#allocation2 + $0x170] sm:$0x33] %v1633
  %1648 = vst [vmem:[#allocation2 + $0x178] sm:$0x33] %v1635
  %1649 = vst [vmem:[#allocation2 + $0x180] sm:$0x33] %v1637
  %1650 = vst [vmem:[#allocation2 + $0x188] sm:$0x3] %v1638
  %v1651 = vld [vmem:[%s0 + $0x2] sm:$0xff]
  %v1652 = vld [vmem:[%s0 + $0xa] sm:$0xff]
  %v1653 = vld [vmem:[%s0 + $0x12] sm:$0xff]
  %v1657 = vcombine.low %v1651, %v1651
  %v1659 = vunpack.c.l.s4 1983009808
  %v1660 = vunpack.c.0.s8 %v1659
  %v1661 = vlaneseq
  %v1662 = vshrl.u32 %v1661, 7
  %v1663 = vsub.s32 %v1660, %v1662
  %v1664 = vrot.slane %v1657, %v1663
  %v1666 = vunpack.c.l.s4 1983009808
  %v1667 = vunpack.c.0.s8 %v1666
  %v1668 = vlaneseq
  %v1669 = vshrl.u32 %v1668, 7
  %v1670 = vsub.s32 %v1667, %v1669
  %v1671 = vrot.slane %v1651, %v1670
  %v1672 = vcombine.low %v1652, %v1652
  %v1674 = vunpack.c.l.s4 1983009808
  %v1675 = vunpack.c.0.s8 %v1674
  %v1676 = vlaneseq
  %v1677 = vshrl.u32 %v1676, 7
  %v1678 = vsub.s32 %v1675, %v1677
  %v1679 = vrot.slane %v1672, %v1678
  %v1681 = vunpack.c.l.s4 1983009808
  %v1682 = vunpack.c.0.s8 %v1681
  %v1683 = vlaneseq
  %v1684 = vshrl.u32 %v1683, 7
  %v1685 = vsub.s32 %v1682, %v1684
  %v1686 = vrot.slane %v1652, %v1685
  %v1687 = vcombine.low %v1653, %v1653
  %v1689 = vunpack.c.l.s4 1983009808
  %v1690 = vunpack.c.0.s8 %v1689
  %v1691 = vlaneseq
  %v1692 = vshrl.u32 %v1691, 7
  %v1693 = vsub.s32 %v1690, %v1692
  %v1694 = vrot.slane %v1687, %v1693
  %v1696 = vunpack.c.l.s4 1983009808
  %v1697 = vunpack.c.0.s8 %v1696
  %v1698 = vlaneseq
  %v1699 = vshrl.u32 %v1698, 7
  %v1700 = vsub.s32 %v1697, %v1699
  %v1701 = vrot.slane %v1653, %v1700
  %1702 = vrot.lane.b32.xlu0 %v1664, 40
  %v1703 = vpop.permute.xlu0 %1702
  %1704 = vrot.lane.b32.xlu0 %v1671, 40
  %v1705 = vpop.permute.xlu0 %1704
  %1706 = vrot.lane.b32.xlu0 %v1679, 40
  %v1707 = vpop.permute.xlu0 %1706
  %1708 = vrot.lane.b32.xlu0 %v1686, 40
  %v1709 = vpop.permute.xlu0 %1708
  %1710 = vrot.lane.b32.xlu0 %v1694, 40
  %v1711 = vpop.permute.xlu0 %1710
  %1712 = vrot.lane.b32.xlu0 %v1701, 40
  %v1713 = vpop.permute.xlu0 %1712
  %v1714 = vrot.slane %v1703, 4
  %v1715 = vrot.slane %v1705, 4
  %v1716 = vrot.slane %v1707, 4
  %v1717 = vrot.slane %v1709, 4
  %v1718 = vrot.slane %v1711, 4
  %v1719 = vrot.slane %v1713, 4
  %v1720 = vsel %vm139, %v1714, %v1715
  %vm1721 = vcmask 326656
  %v1722 = vsel %vm1721, %v1703, %v1720
  %v1723 = vsel %vm139, %v1715, %v1716
  %v1724 = vsel %vm1721, %v1705, %v1723
  %v1725 = vsel %vm139, %v1716, %v1717
  %v1726 = vsel %vm1721, %v1707, %v1725
  %v1727 = vsel %vm139, %v1717, %v1718
  %v1728 = vsel %vm1721, %v1709, %v1727
  %v1729 = vsel %vm139, %v1718, %v1719
  %v1730 = vsel %vm1721, %v1711, %v1729
  %v1731 = vsel %vm1721, %v1713, %v1719
  %1738 = vst [vmem:[#allocation2 + $0x160] sm:$0xcc] %v1722
  %1739 = vst [vmem:[#allocation2 + $0x168] sm:$0xcc] %v1724
  %1740 = vst [vmem:[#allocation2 + $0x170] sm:$0xcc] %v1726
  %1741 = vst [vmem:[#allocation2 + $0x178] sm:$0xcc] %v1728
  %1742 = vst [vmem:[#allocation2 + $0x180] sm:$0xcc] %v1730
  %1743 = vst [vmem:[#allocation2 + $0x188] sm:$0xc] %v1731
  %v1744 = vld [vmem:[%s0] sm:$0xff]
  %v1745 = vld [vmem:[%s0 + $0x8] sm:$0xff]
  %v1746 = vld [vmem:[%s0 + $0x10] sm:$0x3f]
  %v1750 = vcombine.high %v1744, %v1744
  %v1752 = vunpack.c.l.s4 1983009808
  %v1753 = vunpack.c.0.s8 %v1752
  %v1754 = vlaneseq
  %v1755 = vshrl.u32 %v1754, 7
  %v1756 = vsub.s32 %v1753, %v1755
  %v1757 = vrot.slane %v1744, %v1756
  %v1759 = vunpack.c.l.s4 1983009808
  %v1760 = vunpack.c.0.s8 %v1759
  %v1761 = vlaneseq
  %v1762 = vshrl.u32 %v1761, 7
  %v1763 = vsub.s32 %v1760, %v1762
  %v1764 = vrot.slane %v1750, %v1763
  %v1765 = vcombine.high %v1745, %v1745
  %v1767 = vunpack.c.l.s4 1983009808
  %v1768 = vunpack.c.0.s8 %v1767
  %v1769 = vlaneseq
  %v1770 = vshrl.u32 %v1769, 7
  %v1771 = vsub.s32 %v1768, %v1770
  %v1772 = vrot.slane %v1745, %v1771
  %v1774 = vunpack.c.l.s4 1983009808
  %v1775 = vunpack.c.0.s8 %v1774
  %v1776 = vlaneseq
  %v1777 = vshrl.u32 %v1776, 7
  %v1778 = vsub.s32 %v1775, %v1777
  %v1779 = vrot.slane %v1765, %v1778
  %v1780 = vcombine.high %v1746, %v1746
  %v1782 = vunpack.c.l.s4 1983009808
  %v1783 = vunpack.c.0.s8 %v1782
  %v1784 = vlaneseq
  %v1785 = vshrl.u32 %v1784, 7
  %v1786 = vsub.s32 %v1783, %v1785
  %v1787 = vrot.slane %v1746, %v1786
  %v1789 = vunpack.c.l.s4 1983009808
  %v1790 = vunpack.c.0.s8 %v1789
  %v1791 = vlaneseq
  %v1792 = vshrl.u32 %v1791, 7
  %v1793 = vsub.s32 %v1790, %v1792
  %v1794 = vrot.slane %v1780, %v1793
  %1801 = vst [vmem:[#allocation2 + $0x18c] sm:$0x33] %v1757
  %1802 = vst [vmem:[#allocation2 + $0x194] sm:$0x33] %v1764
  %1803 = vst [vmem:[#allocation2 + $0x19c] sm:$0x33] %v1772
  %1804 = vst [vmem:[#allocation2 + $0x1a4] sm:$0x33] %v1779
  %1805 = vst [vmem:[#allocation2 + $0x1ac] sm:$0x33] %v1787
  %1806 = vst [vmem:[#allocation2 + $0x1b4] sm:$0x3] %v1794
  %v1807 = vld [vmem:[%s0] sm:$0xff]
  %v1808 = vld [vmem:[%s0 + $0x8] sm:$0xff]
  %v1809 = vld [vmem:[%s0 + $0x10] sm:$0xff]
  %v1813 = vcombine.low %v1807, %v1807
  %v1815 = vunpack.c.l.s4 1983009808
  %v1816 = vunpack.c.0.s8 %v1815
  %v1817 = vlaneseq
  %v1818 = vshrl.u32 %v1817, 7
  %v1819 = vsub.s32 %v1816, %v1818
  %v1820 = vrot.slane %v1813, %v1819
  %v1822 = vunpack.c.l.s4 1983009808
  %v1823 = vunpack.c.0.s8 %v1822
  %v1824 = vlaneseq
  %v1825 = vshrl.u32 %v1824, 7
  %v1826 = vsub.s32 %v1823, %v1825
  %v1827 = vrot.slane %v1807, %v1826
  %v1828 = vcombine.low %v1808, %v1808
  %v1830 = vunpack.c.l.s4 1983009808
  %v1831 = vunpack.c.0.s8 %v1830
  %v1832 = vlaneseq
  %v1833 = vshrl.u32 %v1832, 7
  %v1834 = vsub.s32 %v1831, %v1833
  %v1835 = vrot.slane %v1828, %v1834
  %v1837 = vunpack.c.l.s4 1983009808
  %v1838 = vunpack.c.0.s8 %v1837
  %v1839 = vlaneseq
  %v1840 = vshrl.u32 %v1839, 7
  %v1841 = vsub.s32 %v1838, %v1840
  %v1842 = vrot.slane %v1808, %v1841
  %v1843 = vcombine.low %v1809, %v1809
  %v1845 = vunpack.c.l.s4 1983009808
  %v1846 = vunpack.c.0.s8 %v1845
  %v1847 = vlaneseq
  %v1848 = vshrl.u32 %v1847, 7
  %v1849 = vsub.s32 %v1846, %v1848
  %v1850 = vrot.slane %v1843, %v1849
  %v1852 = vunpack.c.l.s4 1983009808
  %v1853 = vunpack.c.0.s8 %v1852
  %v1854 = vlaneseq
  %v1855 = vshrl.u32 %v1854, 7
  %v1856 = vsub.s32 %v1853, %v1855
  %v1857 = vrot.slane %v1809, %v1856
  %1858 = vrot.lane.b32.xlu0 %v1820, 123
  %v1859 = vpop.permute.xlu0 %1858
  %1860 = vrot.lane.b32.xlu0 %v1827, 123
  %v1861 = vpop.permute.xlu0 %1860
  %1862 = vrot.lane.b32.xlu0 %v1835, 123
  %v1863 = vpop.permute.xlu0 %1862
  %1864 = vrot.lane.b32.xlu0 %v1842, 123
  %v1865 = vpop.permute.xlu0 %1864
  %1866 = vrot.lane.b32.xlu0 %v1850, 123
  %v1867 = vpop.permute.xlu0 %1866
  %1868 = vrot.lane.b32.xlu0 %v1857, 123
  %v1869 = vpop.permute.xlu0 %1868
  %v1870 = vrot.slane %v1859, 4
  %v1871 = vrot.slane %v1861, 4
  %v1872 = vrot.slane %v1863, 4
  %v1873 = vrot.slane %v1865, 4
  %v1874 = vrot.slane %v1867, 4
  %v1875 = vrot.slane %v1869, 4
  %v1876 = vsel %vm139, %v1870, %v1871
  %vm1877 = vcmask 1006592
  %v1878 = vsel %vm1877, %v1859, %v1876
  %v1879 = vsel %vm139, %v1871, %v1872
  %v1880 = vsel %vm1877, %v1861, %v1879
  %v1881 = vsel %vm139, %v1872, %v1873
  %v1882 = vsel %vm1877, %v1863, %v1881
  %v1883 = vsel %vm139, %v1873, %v1874
  %v1884 = vsel %vm1877, %v1865, %v1883
  %v1885 = vsel %vm139, %v1874, %v1875
  %v1886 = vsel %vm1877, %v1867, %v1885
  %v1887 = vsel %vm1877, %v1869, %v1875
  %1894 = vst [vmem:[#allocation2 + $0x18c] sm:$0xcc] %v1878
  %1895 = vst [vmem:[#allocation2 + $0x194] sm:$0xcc] %v1880
  %1896 = vst [vmem:[#allocation2 + $0x19c] sm:$0xcc] %v1882
  %1897 = vst [vmem:[#allocation2 + $0x1a4] sm:$0xcc] %v1884
  %1898 = vst [vmem:[#allocation2 + $0x1ac] sm:$0xcc] %v1886
  %1899 = vst [vmem:[#allocation2 + $0x1b4] sm:$0xc] %v1887
  %v1900 = vld [vmem:[%s0] sm:$0xff]
  %v1901 = vld [vmem:[%s0 + $0x8] sm:$0xff]
  %v1902 = vld [vmem:[%s0 + $0x10] sm:$0xff]
  %v1906 = vcombine.high %v1900, %v1900
  %v1908 = vunpack.c.l.s4 1983009808
  %v1909 = vunpack.c.0.s8 %v1908
  %v1910 = vlaneseq
  %v1911 = vshrl.u32 %v1910, 7
  %v1912 = vsub.s32 %v1909, %v1911
  %v1913 = vrot.slane %v1900, %v1912
  %v1915 = vunpack.c.l.s4 1983009808
  %v1916 = vunpack.c.0.s8 %v1915
  %v1917 = vlaneseq
  %v1918 = vshrl.u32 %v1917, 7
  %v1919 = vsub.s32 %v1916, %v1918
  %v1920 = vrot.slane %v1906, %v1919
  %v1921 = vcombine.high %v1901, %v1901
  %v1923 = vunpack.c.l.s4 1983009808
  %v1924 = vunpack.c.0.s8 %v1923
  %v1925 = vlaneseq
  %v1926 = vshrl.u32 %v1925, 7
  %v1927 = vsub.s32 %v1924, %v1926
  %v1928 = vrot.slane %v1901, %v1927
  %v1930 = vunpack.c.l.s4 1983009808
  %v1931 = vunpack.c.0.s8 %v1930
  %v1932 = vlaneseq
  %v1933 = vshrl.u32 %v1932, 7
  %v1934 = vsub.s32 %v1931, %v1933
  %v1935 = vrot.slane %v1921, %v1934
  %v1936 = vcombine.high %v1902, %v1902
  %v1938 = vunpack.c.l.s4 1983009808
  %v1939 = vunpack.c.0.s8 %v1938
  %v1940 = vlaneseq
  %v1941 = vshrl.u32 %v1940, 7
  %v1942 = vsub.s32 %v1939, %v1941
  %v1943 = vrot.slane %v1902, %v1942
  %v1945 = vunpack.c.l.s4 1983009808
  %v1946 = vunpack.c.0.s8 %v1945
  %v1947 = vlaneseq
  %v1948 = vshrl.u32 %v1947, 7
  %v1949 = vsub.s32 %v1946, %v1948
  %v1950 = vrot.slane %v1936, %v1949
  %1951 = vrot.lane.b32.xlu0 %v1913, 118
  %v1952 = vpop.permute.xlu0 %1951
  %1953 = vrot.lane.b32.xlu0 %v1920, 118
  %v1954 = vpop.permute.xlu0 %1953
  %1955 = vrot.lane.b32.xlu0 %v1928, 118
  %v1956 = vpop.permute.xlu0 %1955
  %1957 = vrot.lane.b32.xlu0 %v1935, 118
  %v1958 = vpop.permute.xlu0 %1957
  %1959 = vrot.lane.b32.xlu0 %v1943, 118
  %v1960 = vpop.permute.xlu0 %1959
  %1961 = vrot.lane.b32.xlu0 %v1950, 118
  %v1962 = vpop.permute.xlu0 %1961
  %v1963 = vrot.slane %v1952, 4
  %v1964 = vrot.slane %v1954, 4
  %v1965 = vrot.slane %v1956, 4
  %v1966 = vrot.slane %v1958, 4
  %v1967 = vrot.slane %v1960, 4
  %v1968 = vrot.slane %v1962, 4
  %v1969 = vsel %vm139, %v1963, %v1964
  %v1970 = vsel %vm1442, %v1952, %v1969
  %v1971 = vsel %vm139, %v1964, %v1965
  %v1972 = vsel %vm1442, %v1954, %v1971
  %v1973 = vsel %vm139, %v1965, %v1966
  %v1974 = vsel %vm1442, %v1956, %v1973
  %v1975 = vsel %vm139, %v1966, %v1967
  %v1976 = vsel %vm1442, %v1958, %v1975
  %v1977 = vsel %vm139, %v1967, %v1968
  %v1978 = vsel %vm1442, %v1960, %v1977
  %v1979 = vsel %vm1442, %v1962, %v1968
  %1986 = vst [vmem:[#allocation2 + $0x1b8] sm:$0x33] %v1970
  %1987 = vst [vmem:[#allocation2 + $0x1c0] sm:$0x33] %v1972
  %1988 = vst [vmem:[#allocation2 + $0x1c8] sm:$0x33] %v1974
  %1989 = vst [vmem:[#allocation2 + $0x1d0] sm:$0x33] %v1976
  %1990 = vst [vmem:[#allocation2 + $0x1d8] sm:$0x33] %v1978
  %1991 = vst [vmem:[#allocation2 + $0x1e0] sm:$0x3] %v1979
  %v1992 = vld [vmem:[%s0 + $0x2] sm:$0xff]
  %v1993 = vld [vmem:[%s0 + $0xa] sm:$0xff]
  %v1994 = vld [vmem:[%s0 + $0x12] sm:$0xff]
  %v1998 = vcombine.low %v1992, %v1992
  %v2000 = vunpack.c.l.s4 1983009808
  %v2001 = vunpack.c.0.s8 %v2000
  %v2002 = vlaneseq
  %v2003 = vshrl.u32 %v2002, 7
  %v2004 = vsub.s32 %v2001, %v2003
  %v2005 = vrot.slane %v1998, %v2004
  %v2007 = vunpack.c.l.s4 1983009808
  %v2008 = vunpack.c.0.s8 %v2007
  %v2009 = vlaneseq
  %v2010 = vshrl.u32 %v2009, 7
  %v2011 = vsub.s32 %v2008, %v2010
  %v2012 = vrot.slane %v1992, %v2011
  %v2013 = vcombine.low %v1993, %v1993
  %v2015 = vunpack.c.l.s4 1983009808
  %v2016 = vunpack.c.0.s8 %v2015
  %v2017 = vlaneseq
  %v2018 = vshrl.u32 %v2017, 7
  %v2019 = vsub.s32 %v2016, %v2018
  %v2020 = vrot.slane %v2013, %v2019
  %v2022 = vunpack.c.l.s4 1983009808
  %v2023 = vunpack.c.0.s8 %v2022
  %v2024 = vlaneseq
  %v2025 = vshrl.u32 %v2024, 7
  %v2026 = vsub.s32 %v2023, %v2025
  %v2027 = vrot.slane %v1993, %v2026
  %v2028 = vcombine.low %v1994, %v1994
  %v2030 = vunpack.c.l.s4 1983009808
  %v2031 = vunpack.c.0.s8 %v2030
  %v2032 = vlaneseq
  %v2033 = vshrl.u32 %v2032, 7
  %v2034 = vsub.s32 %v2031, %v2033
  %v2035 = vrot.slane %v2028, %v2034
  %v2037 = vunpack.c.l.s4 1983009808
  %v2038 = vunpack.c.0.s8 %v2037
  %v2039 = vlaneseq
  %v2040 = vshrl.u32 %v2039, 7
  %v2041 = vsub.s32 %v2038, %v2040
  %v2042 = vrot.slane %v1994, %v2041
  %2043 = vrot.lane.b32.xlu0 %v2005, 126
  %v2044 = vpop.permute.xlu0 %2043
  %2045 = vrot.lane.b32.xlu0 %v2012, 126
  %v2046 = vpop.permute.xlu0 %2045
  %2047 = vrot.lane.b32.xlu0 %v2020, 126
  %v2048 = vpop.permute.xlu0 %2047
  %2049 = vrot.lane.b32.xlu0 %v2027, 126
  %v2050 = vpop.permute.xlu0 %2049
  %2051 = vrot.lane.b32.xlu0 %v2035, 126
  %v2052 = vpop.permute.xlu0 %2051
  %2053 = vrot.lane.b32.xlu0 %v2042, 126
  %v2054 = vpop.permute.xlu0 %2053
  %v2055 = vrot.slane %v2044, 4
  %v2056 = vrot.slane %v2046, 4
  %v2057 = vrot.slane %v2048, 4
  %v2058 = vrot.slane %v2050, 4
  %v2059 = vrot.slane %v2052, 4
  %v2060 = vrot.slane %v2054, 4
  %v2061 = vsel %vm139, %v2055, %v2056
  %vm2062 = vcmask 1031168
  %v2063 = vsel %vm2062, %v2044, %v2061
  %v2064 = vsel %vm139, %v2056, %v2057
  %v2065 = vsel %vm2062, %v2046, %v2064
  %v2066 = vsel %vm139, %v2057, %v2058
  %v2067 = vsel %vm2062, %v2048, %v2066
  %v2068 = vsel %vm139, %v2058, %v2059
  %v2069 = vsel %vm2062, %v2050, %v2068
  %v2070 = vsel %vm139, %v2059, %v2060
  %v2071 = vsel %vm2062, %v2052, %v2070
  %v2072 = vsel %vm2062, %v2054, %v2060
  %2079 = vst [vmem:[#allocation2 + $0x1b8] sm:$0xcc] %v2063
  %2080 = vst [vmem:[#allocation2 + $0x1c0] sm:$0xcc] %v2065
  %2081 = vst [vmem:[#allocation2 + $0x1c8] sm:$0xcc] %v2067
  %2082 = vst [vmem:[#allocation2 + $0x1d0] sm:$0xcc] %v2069
  %2083 = vst [vmem:[#allocation2 + $0x1d8] sm:$0xcc] %v2071
  %2084 = vst [vmem:[#allocation2 + $0x1e0] sm:$0xc] %v2072
  %v2085 = vld [vmem:[%s0 + $0x2] sm:$0xff]
  %v2086 = vld [vmem:[%s0 + $0xa] sm:$0xff]
  %v2087 = vld [vmem:[%s0 + $0x12] sm:$0xff]
  %v2091 = vcombine.high %v2085, %v2085
  %v2093 = vunpack.c.l.s4 1983009808
  %v2094 = vunpack.c.0.s8 %v2093
  %v2095 = vlaneseq
  %v2096 = vshrl.u32 %v2095, 7
  %v2097 = vsub.s32 %v2094, %v2096
  %v2098 = vrot.slane %v2085, %v2097
  %v2100 = vunpack.c.l.s4 1983009808
  %v2101 = vunpack.c.0.s8 %v2100
  %v2102 = vlaneseq
  %v2103 = vshrl.u32 %v2102, 7
  %v2104 = vsub.s32 %v2101, %v2103
  %v2105 = vrot.slane %v2091, %v2104
  %v2106 = vcombine.high %v2086, %v2086
  %v2108 = vunpack.c.l.s4 1983009808
  %v2109 = vunpack.c.0.s8 %v2108
  %v2110 = vlaneseq
  %v2111 = vshrl.u32 %v2110, 7
  %v2112 = vsub.s32 %v2109, %v2111
  %v2113 = vrot.slane %v2086, %v2112
  %v2115 = vunpack.c.l.s4 1983009808
  %v2116 = vunpack.c.0.s8 %v2115
  %v2117 = vlaneseq
  %v2118 = vshrl.u32 %v2117, 7
  %v2119 = vsub.s32 %v2116, %v2118
  %v2120 = vrot.slane %v2106, %v2119
  %v2121 = vcombine.high %v2087, %v2087
  %v2123 = vunpack.c.l.s4 1983009808
  %v2124 = vunpack.c.0.s8 %v2123
  %v2125 = vlaneseq
  %v2126 = vshrl.u32 %v2125, 7
  %v2127 = vsub.s32 %v2124, %v2126
  %v2128 = vrot.slane %v2087, %v2127
  %v2130 = vunpack.c.l.s4 1983009808
  %v2131 = vunpack.c.0.s8 %v2130
  %v2132 = vlaneseq
  %v2133 = vshrl.u32 %v2132, 7
  %v2134 = vsub.s32 %v2131, %v2133
  %v2135 = vrot.slane %v2121, %v2134
  %2136 = vrot.lane.b32.xlu0 %v2098, 121
  %v2137 = vpop.permute.xlu0 %2136
  %2138 = vrot.lane.b32.xlu0 %v2105, 121
  %v2139 = vpop.permute.xlu0 %2138
  %2140 = vrot.lane.b32.xlu0 %v2113, 121
  %v2141 = vpop.permute.xlu0 %2140
  %2142 = vrot.lane.b32.xlu0 %v2120, 121
  %v2143 = vpop.permute.xlu0 %2142
  %2144 = vrot.lane.b32.xlu0 %v2128, 121
  %v2145 = vpop.permute.xlu0 %2144
  %2146 = vrot.lane.b32.xlu0 %v2135, 121
  %v2147 = vpop.permute.xlu0 %2146
  %v2148 = vrot.slane %v2137, 4
  %v2149 = vrot.slane %v2139, 4
  %v2150 = vrot.slane %v2141, 4
  %v2151 = vrot.slane %v2143, 4
  %v2152 = vrot.slane %v2145, 4
  %v2153 = vrot.slane %v2147, 4
  %v2154 = vsel %vm139, %v2148, %v2149
  %v2155 = vsel %vm513, %v2137, %v2154
  %v2156 = vsel %vm139, %v2149, %v2150
  %v2157 = vsel %vm513, %v2139, %v2156
  %v2158 = vsel %vm139, %v2150, %v2151
  %v2159 = vsel %vm513, %v2141, %v2158
  %v2160 = vsel %vm139, %v2151, %v2152
  %v2161 = vsel %vm513, %v2143, %v2160
  %v2162 = vsel %vm139, %v2152, %v2153
  %v2163 = vsel %vm513, %v2145, %v2162
  %v2164 = vsel %vm513, %v2147, %v2153
  %2171 = vst [vmem:[#allocation2 + $0x1e4] sm:$0x33] %v2155
  %2172 = vst [vmem:[#allocation2 + $0x1ec] sm:$0x33] %v2157
  %2173 = vst [vmem:[#allocation2 + $0x1f4] sm:$0x33] %v2159
  %2174 = vst [vmem:[#allocation2 + $0x1fc] sm:$0x33] %v2161
  %2175 = vst [vmem:[#allocation2 + $0x204] sm:$0x33] %v2163
  %2176 = vst [vmem:[#allocation2 + $0x20c] sm:$0x3] %v2164
  %v2177 = vld [vmem:[%s0 + $0x2] sm:$0xff]
  %v2178 = vld [vmem:[%s0 + $0xa] sm:$0xff]
  %v2179 = vld [vmem:[%s0 + $0x12] sm:$0xff]
  %v2183 = vcombine.low %v2177, %v2177
  %v2185 = vunpack.c.l.s4 1983009808
  %v2186 = vunpack.c.0.s8 %v2185
  %v2187 = vlaneseq
  %v2188 = vshrl.u32 %v2187, 7
  %v2189 = vsub.s32 %v2186, %v2188
  %v2190 = vrot.slane %v2183, %v2189
  %v2192 = vunpack.c.l.s4 1983009808
  %v2193 = vunpack.c.0.s8 %v2192
  %v2194 = vlaneseq
  %v2195 = vshrl.u32 %v2194, 7
  %v2196 = vsub.s32 %v2193, %v2195
  %v2197 = vrot.slane %v2177, %v2196
  %v2198 = vcombine.low %v2178, %v2178
  %v2200 = vunpack.c.l.s4 1983009808
  %v2201 = vunpack.c.0.s8 %v2200
  %v2202 = vlaneseq
  %v2203 = vshrl.u32 %v2202, 7
  %v2204 = vsub.s32 %v2201, %v2203
  %v2205 = vrot.slane %v2198, %v2204
  %v2207 = vunpack.c.l.s4 1983009808
  %v2208 = vunpack.c.0.s8 %v2207
  %v2209 = vlaneseq
  %v2210 = vshrl.u32 %v2209, 7
  %v2211 = vsub.s32 %v2208, %v2210
  %v2212 = vrot.slane %v2178, %v2211
  %v2213 = vcombine.low %v2179, %v2179
  %v2215 = vunpack.c.l.s4 1983009808
  %v2216 = vunpack.c.0.s8 %v2215
  %v2217 = vlaneseq
  %v2218 = vshrl.u32 %v2217, 7
  %v2219 = vsub.s32 %v2216, %v2218
  %v2220 = vrot.slane %v2213, %v2219
  %v2222 = vunpack.c.l.s4 1983009808
  %v2223 = vunpack.c.0.s8 %v2222
  %v2224 = vlaneseq
  %v2225 = vshrl.u32 %v2224, 7
  %v2226 = vsub.s32 %v2223, %v2225
  %v2227 = vrot.slane %v2179, %v2226
  %2228 = vrot.lane.b32.xlu0 %v2190, 116
  %v2229 = vpop.permute.xlu0 %2228
  %2230 = vrot.lane.b32.xlu0 %v2197, 116
  %v2231 = vpop.permute.xlu0 %2230
  %2232 = vrot.lane.b32.xlu0 %v2205, 116
  %v2233 = vpop.permute.xlu0 %2232
  %2234 = vrot.lane.b32.xlu0 %v2212, 116
  %v2235 = vpop.permute.xlu0 %2234
  %2236 = vrot.lane.b32.xlu0 %v2220, 116
  %v2237 = vpop.permute.xlu0 %2236
  %2238 = vrot.lane.b32.xlu0 %v2227, 116
  %v2239 = vpop.permute.xlu0 %2238
  %v2240 = vrot.slane %v2229, 4
  %v2241 = vrot.slane %v2231, 4
  %v2242 = vrot.slane %v2233, 4
  %v2243 = vrot.slane %v2235, 4
  %v2244 = vrot.slane %v2237, 4
  %v2245 = vrot.slane %v2239, 4
  %v2246 = vsel %vm139, %v2240, %v2241
  %vm2247 = vcmask 949248
  %v2248 = vsel %vm2247, %v2229, %v2246
  %v2249 = vsel %vm139, %v2241, %v2242
  %v2250 = vsel %vm2247, %v2231, %v2249
  %v2251 = vsel %vm139, %v2242, %v2243
  %v2252 = vsel %vm2247, %v2233, %v2251
  %v2253 = vsel %vm139, %v2243, %v2244
  %v2254 = vsel %vm2247, %v2235, %v2253
  %v2255 = vsel %vm139, %v2244, %v2245
  %v2256 = vsel %vm2247, %v2237, %v2255
  %v2257 = vsel %vm2247, %v2239, %v2245
  %2264 = vst [vmem:[#allocation2 + $0x1e4] sm:$0xcc] %v2248
  %2265 = vst [vmem:[#allocation2 + $0x1ec] sm:$0xcc] %v2250
  %2266 = vst [vmem:[#allocation2 + $0x1f4] sm:$0xcc] %v2252
  %2267 = vst [vmem:[#allocation2 + $0x1fc] sm:$0xcc] %v2254
  %2268 = vst [vmem:[#allocation2 + $0x204] sm:$0xcc] %v2256
  %2269 = vst [vmem:[#allocation2 + $0x20c] sm:$0xc] %v2257
  %v2270 = vld [vmem:[%s0 + $0x4] sm:$0xff]
  %v2271 = vld [vmem:[%s0 + $0xc] sm:$0xff]
  %v2272 = vld [vmem:[%s0 + $0x14] sm:$0xff]
  %v2276 = vcombine.high %v2270, %v2270
  %v2278 = vunpack.c.l.s4 1983009808
  %v2279 = vunpack.c.0.s8 %v2278
  %v2280 = vlaneseq
  %v2281 = vshrl.u32 %v2280, 7
  %v2282 = vsub.s32 %v2279, %v2281
  %v2283 = vrot.slane %v2270, %v2282
  %v2285 = vunpack.c.l.s4 1983009808
  %v2286 = vunpack.c.0.s8 %v2285
  %v2287 = vlaneseq
  %v2288 = vshrl.u32 %v2287, 7
  %v2289 = vsub.s32 %v2286, %v2288
  %v2290 = vrot.slane %v2276, %v2289
  %v2291 = vcombine.high %v2271, %v2271
  %v2293 = vunpack.c.l.s4 1983009808
  %v2294 = vunpack.c.0.s8 %v2293
  %v2295 = vlaneseq
  %v2296 = vshrl.u32 %v2295, 7
  %v2297 = vsub.s32 %v2294, %v2296
  %v2298 = vrot.slane %v2271, %v2297
  %v2300 = vunpack.c.l.s4 1983009808
  %v2301 = vunpack.c.0.s8 %v2300
  %v2302 = vlaneseq
  %v2303 = vshrl.u32 %v2302, 7
  %v2304 = vsub.s32 %v2301, %v2303
  %v2305 = vrot.slane %v2291, %v2304
  %v2306 = vcombine.high %v2272, %v2272
  %v2308 = vunpack.c.l.s4 1983009808
  %v2309 = vunpack.c.0.s8 %v2308
  %v2310 = vlaneseq
  %v2311 = vshrl.u32 %v2310, 7
  %v2312 = vsub.s32 %v2309, %v2311
  %v2313 = vrot.slane %v2272, %v2312
  %v2315 = vunpack.c.l.s4 1983009808
  %v2316 = vunpack.c.0.s8 %v2315
  %v2317 = vlaneseq
  %v2318 = vshrl.u32 %v2317, 7
  %v2319 = vsub.s32 %v2316, %v2318
  %v2320 = vrot.slane %v2306, %v2319
  %2321 = vrot.lane.b32.xlu0 %v2283, 124
  %v2322 = vpop.permute.xlu0 %2321
  %2323 = vrot.lane.b32.xlu0 %v2290, 124
  %v2324 = vpop.permute.xlu0 %2323
  %2325 = vrot.lane.b32.xlu0 %v2298, 124
  %v2326 = vpop.permute.xlu0 %2325
  %2327 = vrot.lane.b32.xlu0 %v2305, 124
  %v2328 = vpop.permute.xlu0 %2327
  %2329 = vrot.lane.b32.xlu0 %v2313, 124
  %v2330 = vpop.permute.xlu0 %2329
  %2331 = vrot.lane.b32.xlu0 %v2320, 124
  %v2332 = vpop.permute.xlu0 %2331
  %v2333 = vrot.slane %v2322, 4
  %v2334 = vrot.slane %v2324, 4
  %v2335 = vrot.slane %v2326, 4
  %v2336 = vrot.slane %v2328, 4
  %v2337 = vrot.slane %v2330, 4
  %v2338 = vrot.slane %v2332, 4
  %v2339 = vsel %vm139, %v2333, %v2334
  %v2340 = vsel %vm1257, %v2322, %v2339
  %v2341 = vsel %vm139, %v2334, %v2335
  %v2342 = vsel %vm1257, %v2324, %v2341
  %v2343 = vsel %vm139, %v2335, %v2336
  %v2344 = vsel %vm1257, %v2326, %v2343
  %v2345 = vsel %vm139, %v2336, %v2337
  %v2346 = vsel %vm1257, %v2328, %v2345
  %v2347 = vsel %vm139, %v2337, %v2338
  %v2348 = vsel %vm1257, %v2330, %v2347
  %v2349 = vsel %vm1257, %v2332, %v2338
  %2356 = vst [vmem:[#allocation2 + $0x210] sm:$0x33] %v2340
  %2357 = vst [vmem:[#allocation2 + $0x218] sm:$0x33] %v2342
  %2358 = vst [vmem:[#allocation2 + $0x220] sm:$0x33] %v2344
  %2359 = vst [vmem:[#allocation2 + $0x228] sm:$0x33] %v2346
  %2360 = vst [vmem:[#allocation2 + $0x230] sm:$0x33] %v2348
  %2361 = vst [vmem:[#allocation2 + $0x238] sm:$0x3] %v2349
  %v2362 = vld [vmem:[%s0 + $0x4] sm:$0xff]
  %v2363 = vld [vmem:[%s0 + $0xc] sm:$0xff]
  %v2364 = vld [vmem:[%s0 + $0x14] sm:$0xff]
  %v2368 = vcombine.low %v2362, %v2362
  %v2370 = vunpack.c.l.s4 1983009808
  %v2371 = vunpack.c.0.s8 %v2370
  %v2372 = vlaneseq
  %v2373 = vshrl.u32 %v2372, 7
  %v2374 = vsub.s32 %v2371, %v2373
  %v2375 = vrot.slane %v2368, %v2374
  %v2377 = vunpack.c.l.s4 1983009808
  %v2378 = vunpack.c.0.s8 %v2377
  %v2379 = vlaneseq
  %v2380 = vshrl.u32 %v2379, 7
  %v2381 = vsub.s32 %v2378, %v2380
  %v2382 = vrot.slane %v2362, %v2381
  %v2383 = vcombine.low %v2363, %v2363
  %v2385 = vunpack.c.l.s4 1983009808
  %v2386 = vunpack.c.0.s8 %v2385
  %v2387 = vlaneseq
  %v2388 = vshrl.u32 %v2387, 7
  %v2389 = vsub.s32 %v2386, %v2388
  %v2390 = vrot.slane %v2383, %v2389
  %v2392 = vunpack.c.l.s4 1983009808
  %v2393 = vunpack.c.0.s8 %v2392
  %v2394 = vlaneseq
  %v2395 = vshrl.u32 %v2394, 7
  %v2396 = vsub.s32 %v2393, %v2395
  %v2397 = vrot.slane %v2363, %v2396
  %v2398 = vcombine.low %v2364, %v2364
  %v2400 = vunpack.c.l.s4 1983009808
  %v2401 = vunpack.c.0.s8 %v2400
  %v2402 = vlaneseq
  %v2403 = vshrl.u32 %v2402, 7
  %v2404 = vsub.s32 %v2401, %v2403
  %v2405 = vrot.slane %v2398, %v2404
  %v2407 = vunpack.c.l.s4 1983009808
  %v2408 = vunpack.c.0.s8 %v2407
  %v2409 = vlaneseq
  %v2410 = vshrl.u32 %v2409, 7
  %v2411 = vsub.s32 %v2408, %v2410
  %v2412 = vrot.slane %v2364, %v2411
  %2413 = vrot.lane.b32.xlu0 %v2375, 119
  %v2414 = vpop.permute.xlu0 %2413
  %2415 = vrot.lane.b32.xlu0 %v2382, 119
  %v2416 = vpop.permute.xlu0 %2415
  %2417 = vrot.lane.b32.xlu0 %v2390, 119
  %v2418 = vpop.permute.xlu0 %2417
  %2419 = vrot.lane.b32.xlu0 %v2397, 119
  %v2420 = vpop.permute.xlu0 %2419
  %2421 = vrot.lane.b32.xlu0 %v2405, 119
  %v2422 = vpop.permute.xlu0 %2421
  %2423 = vrot.lane.b32.xlu0 %v2412, 119
  %v2424 = vpop.permute.xlu0 %2423
  %v2425 = vrot.slane %v2414, 4
  %v2426 = vrot.slane %v2416, 4
  %v2427 = vrot.slane %v2418, 4
  %v2428 = vrot.slane %v2420, 4
  %v2429 = vrot.slane %v2422, 4
  %v2430 = vrot.slane %v2424, 4
  %v2431 = vsel %vm139, %v2425, %v2426
  %vm2432 = vcmask 973824
  %v2433 = vsel %vm2432, %v2414, %v2431
  %v2434 = vsel %vm139, %v2426, %v2427
  %v2435 = vsel %vm2432, %v2416, %v2434
  %v2436 = vsel %vm139, %v2427, %v2428
  %v2437 = vsel %vm2432, %v2418, %v2436
  %v2438 = vsel %vm139, %v2428, %v2429
  %v2439 = vsel %vm2432, %v2420, %v2438
  %v2440 = vsel %vm139, %v2429, %v2430
  %v2441 = vsel %vm2432, %v2422, %v2440
  %v2442 = vsel %vm2432, %v2424, %v2430
  %2449 = vst [vmem:[#allocation2 + $0x210] sm:$0xcc] %v2433
  %2450 = vst [vmem:[#allocation2 + $0x218] sm:$0xcc] %v2435
  %2451 = vst [vmem:[#allocation2 + $0x220] sm:$0xcc] %v2437
  %2452 = vst [vmem:[#allocation2 + $0x228] sm:$0xcc] %v2439
  %2453 = vst [vmem:[#allocation2 + $0x230] sm:$0xcc] %v2441
  %2454 = vst [vmem:[#allocation2 + $0x238] sm:$0xc] %v2442
  %v2455 = vld [vmem:[%s0 + $0x4] sm:$0xff]
  %v2456 = vld [vmem:[%s0 + $0xc] sm:$0xff]
  %v2457 = vld [vmem:[%s0 + $0x14] sm:$0xff]
  %v2461 = vcombine.high %v2455, %v2455
  %v2463 = vunpack.c.l.s4 1983009808
  %v2464 = vunpack.c.0.s8 %v2463
  %v2465 = vlaneseq
  %v2466 = vshrl.u32 %v2465, 7
  %v2467 = vsub.s32 %v2464, %v2466
  %v2468 = vrot.slane %v2455, %v2467
  %v2470 = vunpack.c.l.s4 1983009808
  %v2471 = vunpack.c.0.s8 %v2470
  %v2472 = vlaneseq
  %v2473 = vshrl.u32 %v2472, 7
  %v2474 = vsub.s32 %v2471, %v2473
  %v2475 = vrot.slane %v2461, %v2474
  %v2476 = vcombine.high %v2456, %v2456
  %v2478 = vunpack.c.l.s4 1983009808
  %v2479 = vunpack.c.0.s8 %v2478
  %v2480 = vlaneseq
  %v2481 = vshrl.u32 %v2480, 7
  %v2482 = vsub.s32 %v2479, %v2481
  %v2483 = vrot.slane %v2456, %v2482
  %v2485 = vunpack.c.l.s4 1983009808
  %v2486 = vunpack.c.0.s8 %v2485
  %v2487 = vlaneseq
  %v2488 = vshrl.u32 %v2487, 7
  %v2489 = vsub.s32 %v2486, %v2488
  %v2490 = vrot.slane %v2476, %v2489
  %v2491 = vcombine.high %v2457, %v2457
  %v2493 = vunpack.c.l.s4 1983009808
  %v2494 = vunpack.c.0.s8 %v2493
  %v2495 = vlaneseq
  %v2496 = vshrl.u32 %v2495, 7
  %v2497 = vsub.s32 %v2494, %v2496
  %v2498 = vrot.slane %v2457, %v2497
  %v2500 = vunpack.c.l.s4 1983009808
  %v2501 = vunpack.c.0.s8 %v2500
  %v2502 = vlaneseq
  %v2503 = vshrl.u32 %v2502, 7
  %v2504 = vsub.s32 %v2501, %v2503
  %v2505 = vrot.slane %v2491, %v2504
  %2506 = vrot.lane.b32.xlu0 %v2468, 114
  %v2507 = vpop.permute.xlu0 %2506
  %2508 = vrot.lane.b32.xlu0 %v2475, 114
  %v2509 = vpop.permute.xlu0 %2508
  %2510 = vrot.lane.b32.xlu0 %v2483, 114
  %v2511 = vpop.permute.xlu0 %2510
  %2512 = vrot.lane.b32.xlu0 %v2490, 114
  %v2513 = vpop.permute.xlu0 %2512
  %2514 = vrot.lane.b32.xlu0 %v2498, 114
  %v2515 = vpop.permute.xlu0 %2514
  %2516 = vrot.lane.b32.xlu0 %v2505, 114
  %v2517 = vpop.permute.xlu0 %2516
  %v2518 = vrot.slane %v2507, 4
  %v2519 = vrot.slane %v2509, 4
  %v2520 = vrot.slane %v2511, 4
  %v2521 = vrot.slane %v2513, 4
  %v2522 = vrot.slane %v2515, 4
  %v2523 = vrot.slane %v2517, 4
  %v2524 = vsel %vm139, %v2518, %v2519
  %vm2525 = vcmask 932864
  %v2526 = vsel %vm2525, %v2507, %v2524
  %v2527 = vsel %vm139, %v2519, %v2520
  %v2528 = vsel %vm2525, %v2509, %v2527
  %v2529 = vsel %vm139, %v2520, %v2521
  %v2530 = vsel %vm2525, %v2511, %v2529
  %v2531 = vsel %vm139, %v2521, %v2522
  %v2532 = vsel %vm2525, %v2513, %v2531
  %v2533 = vsel %vm139, %v2522, %v2523
  %v2534 = vsel %vm2525, %v2515, %v2533
  %v2535 = vsel %vm2525, %v2517, %v2523
  %2542 = vst [vmem:[#allocation2 + $0x23c] sm:$0x33] %v2526
  %2543 = vst [vmem:[#allocation2 + $0x244] sm:$0x33] %v2528
  %2544 = vst [vmem:[#allocation2 + $0x24c] sm:$0x33] %v2530
  %2545 = vst [vmem:[#allocation2 + $0x254] sm:$0x33] %v2532
  %2546 = vst [vmem:[#allocation2 + $0x25c] sm:$0x33] %v2534
  %2547 = vst [vmem:[#allocation2 + $0x264] sm:$0x3] %v2535
  %v2548 = vld [vmem:[%s1] sm:$0xf]
  %v2549 = vld [vmem:[#allocation2] sm:$0xff]
  %v2550 = vld [vmem:[#allocation2 + $0x8] sm:$0xff]
  %v2551 = vld [vmem:[#allocation2 + $0x10] sm:$0xff]
  %v2552 = vld [vmem:[#allocation2 + $0x18] sm:$0xff]
  %v2553 = vld [vmem:[#allocation2 + $0x20] sm:$0xff]
  %v2554 = vld [vmem:[#allocation2 + $0x28] sm:$0xf]
  %v2555 = vld [vmem:[#allocation2 + $0x2c] sm:$0xff]
  %v2556 = vld [vmem:[#allocation2 + $0x34] sm:$0xff]
  %v2557 = vld [vmem:[#allocation2 + $0x3c] sm:$0xff]
  %v2558 = vld [vmem:[#allocation2 + $0x44] sm:$0xff]
  %v2559 = vld [vmem:[#allocation2 + $0x4c] sm:$0xff]
  %v2560 = vld [vmem:[#allocation2 + $0x54] sm:$0xf]
  %v2561 = vld [vmem:[#allocation2 + $0x58] sm:$0xff]
  %v2562 = vld [vmem:[#allocation2 + $0x60] sm:$0xff]
  %v2563 = vld [vmem:[#allocation2 + $0x68] sm:$0xff]
  %v2564 = vld [vmem:[#allocation2 + $0x70] sm:$0xff]
  %v2565 = vld [vmem:[#allocation2 + $0x78] sm:$0xff]
  %v2566 = vld [vmem:[#allocation2 + $0x80] sm:$0xf]
  %v2567 = vld [vmem:[#allocation2 + $0x84] sm:$0xff]
  %v2568 = vld [vmem:[#allocation2 + $0x8c] sm:$0xff]
  %v2569 = vld [vmem:[#allocation2 + $0x94] sm:$0xff]
  %v2570 = vld [vmem:[#allocation2 + $0x9c] sm:$0xff]
  %v2571 = vld [vmem:[#allocation2 + $0xa4] sm:$0xff]
  %v2572 = vld [vmem:[#allocation2 + $0xac] sm:$0xf]
  %v2573 = vld [vmem:[#allocation2 + $0xb0] sm:$0xff]
  %v2574 = vld [vmem:[#allocation2 + $0xb8] sm:$0xff]
  %v2575 = vld [vmem:[#allocation2 + $0xc0] sm:$0xff]
  %v2576 = vld [vmem:[#allocation2 + $0xc8] sm:$0xff]
  %v2577 = vld [vmem:[#allocation2 + $0xd0] sm:$0xff]
  %v2578 = vld [vmem:[#allocation2 + $0xd8] sm:$0xf]
  %v2579 = vld [vmem:[#allocation2 + $0xdc] sm:$0xff]
  %v2580 = vld [vmem:[#allocation2 + $0xe4] sm:$0xff]
  %v2581 = vld [vmem:[#allocation2 + $0xec] sm:$0xff]
  %v2582 = vld [vmem:[#allocation2 + $0xf4] sm:$0xff]
  %v2583 = vld [vmem:[#allocation2 + $0xfc] sm:$0xff]
  %v2584 = vld [vmem:[#allocation2 + $0x104] sm:$0xf]
  %v2585 = vld [vmem:[#allocation2 + $0x108] sm:$0xff]
  %v2586 = vld [vmem:[#allocation2 + $0x110] sm:$0xff]
  %v2587 = vld [vmem:[#allocation2 + $0x118] sm:$0xff]
  %v2588 = vld [vmem:[#allocation2 + $0x120] sm:$0xff]
  %v2589 = vld [vmem:[#allocation2 + $0x128] sm:$0xff]
  %v2590 = vld [vmem:[#allocation2 + $0x130] sm:$0xf]
  %v2591 = vld [vmem:[#allocation2 + $0x134] sm:$0xff]
  %v2592 = vld [vmem:[#allocation2 + $0x13c] sm:$0xff]
  %v2593 = vld [vmem:[#allocation2 + $0x144] sm:$0xff]
  %v2594 = vld [vmem:[#allocation2 + $0x14c] sm:$0xff]
  %v2595 = vld [vmem:[#allocation2 + $0x154] sm:$0xff]
  %v2596 = vld [vmem:[#allocation2 + $0x15c] sm:$0xf]
  %v2597 = vld [vmem:[#allocation2 + $0x160] sm:$0xff]
  %v2598 = vld [vmem:[#allocation2 + $0x168] sm:$0xff]
  %v2599 = vld [vmem:[#allocation2 + $0x170] sm:$0xff]
  %v2600 = vld [vmem:[#allocation2 + $0x178] sm:$0xff]
  %v2601 = vld [vmem:[#allocation2 + $0x180] sm:$0xff]
  %v2602 = vld [vmem:[#allocation2 + $0x188] sm:$0xf]
  %v2603 = vld [vmem:[#allocation2 + $0x18c] sm:$0xff]
  %v2604 = vld [vmem:[#allocation2 + $0x194] sm:$0xff]
  %v2605 = vld [vmem:[#allocation2 + $0x19c] sm:$0xff]
  %v2606 = vld [vmem:[#allocation2 + $0x1a4] sm:$0xff]
  %v2607 = vld [vmem:[#allocation2 + $0x1ac] sm:$0xff]
  %v2608 = vld [vmem:[#allocation2 + $0x1b4] sm:$0xf]
  %v2609 = vld [vmem:[#allocation2 + $0x1b8] sm:$0xff]
  %v2610 = vld [vmem:[#allocation2 + $0x1c0] sm:$0xff]
  %v2611 = vld [vmem:[#allocation2 + $0x1c8] sm:$0xff]
  %v2612 = vld [vmem:[#allocation2 + $0x1d0] sm:$0xff]
  %v2613 = vld [vmem:[#allocation2 + $0x1d8] sm:$0xff]
  %v2614 = vld [vmem:[#allocation2 + $0x1e0] sm:$0xf]
  %v2615 = vld [vmem:[#allocation2 + $0x1e4] sm:$0xff]
  %v2616 = vld [vmem:[#allocation2 + $0x1ec] sm:$0xff]
  %v2617 = vld [vmem:[#allocation2 + $0x1f4] sm:$0xff]
  %v2618 = vld [vmem:[#allocation2 + $0x1fc] sm:$0xff]
  %v2619 = vld [vmem:[#allocation2 + $0x204] sm:$0xff]
  %v2620 = vld [vmem:[#allocation2 + $0x20c] sm:$0xf]
  %v2621 = vld [vmem:[#allocation2 + $0x210] sm:$0xff]
  %v2622 = vld [vmem:[#allocation2 + $0x218] sm:$0xff]
  %v2623 = vld [vmem:[#allocation2 + $0x220] sm:$0xff]
  %v2624 = vld [vmem:[#allocation2 + $0x228] sm:$0xff]
  %v2625 = vld [vmem:[#allocation2 + $0x230] sm:$0xff]
  %v2626 = vld [vmem:[#allocation2 + $0x238] sm:$0xf]
  %v2627 = vld [vmem:[#allocation2 + $0x23c] sm:$0x33]
  %v2628 = vld [vmem:[#allocation2 + $0x244] sm:$0x33]
  %v2629 = vld [vmem:[#allocation2 + $0x24c] sm:$0x33]
  %v2630 = vld [vmem:[#allocation2 + $0x254] sm:$0x33]
  %v2631 = vld [vmem:[#allocation2 + $0x25c] sm:$0x33]
  %v2632 = vld [vmem:[#allocation2 + $0x264] sm:$0x3]
  %v2717 = vunpack.c.l.b16 %v2549
  %v2718 = vunpack.c.h.b16 %v2549
  %v2719 = vunpack.c.l.b16 %v2550
  %v2720 = vunpack.c.h.b16 %v2550
  %v2721 = vunpack.c.l.b16 %v2551
  %v2722 = vunpack.c.h.b16 %v2551
  %v2723 = vunpack.c.l.b16 %v2552
  %v2724 = vunpack.c.h.b16 %v2552
  %v2725 = vunpack.c.l.b16 %v2553
  %v2726 = vunpack.c.h.b16 %v2553
  %v2727 = vunpack.c.l.b16 %v2554
  %v2728 = vunpack.c.l.b16 %v2555
  %v2729 = vunpack.c.h.b16 %v2555
  %v2730 = vunpack.c.l.b16 %v2556
  %v2731 = vunpack.c.h.b16 %v2556
  %v2732 = vunpack.c.l.b16 %v2557
  %v2733 = vunpack.c.h.b16 %v2557
  %v2734 = vunpack.c.l.b16 %v2558
  %v2735 = vunpack.c.h.b16 %v2558
  %v2736 = vunpack.c.l.b16 %v2559
  %v2737 = vunpack.c.h.b16 %v2559
  %v2738 = vunpack.c.l.b16 %v2560
  %v2739 = vunpack.c.l.b16 %v2561
  %v2740 = vunpack.c.h.b16 %v2561
  %v2741 = vunpack.c.l.b16 %v2562
  %v2742 = vunpack.c.h.b16 %v2562
  %v2743 = vunpack.c.l.b16 %v2563
  %v2744 = vunpack.c.h.b16 %v2563
  %v2745 = vunpack.c.l.b16 %v2564
  %v2746 = vunpack.c.h.b16 %v2564
  %v2747 = vunpack.c.l.b16 %v2565
  %v2748 = vunpack.c.h.b16 %v2565
  %v2749 = vunpack.c.l.b16 %v2566
  %v2750 = vunpack.c.l.b16 %v2567
  %v2751 = vunpack.c.h.b16 %v2567
  %v2752 = vunpack.c.l.b16 %v2568
  %v2753 = vunpack.c.h.b16 %v2568
  %v2754 = vunpack.c.l.b16 %v2569
  %v2755 = vunpack.c.h.b16 %v2569
  %v2756 = vunpack.c.l.b16 %v2570
  %v2757 = vunpack.c.h.b16 %v2570
  %v2758 = vunpack.c.l.b16 %v2571
  %v2759 = vunpack.c.h.b16 %v2571
  %v2760 = vunpack.c.l.b16 %v2572
  %v2761 = vunpack.c.l.b16 %v2573
  %v2762 = vunpack.c.h.b16 %v2573
  %v2763 = vunpack.c.l.b16 %v2574
  %v2764 = vunpack.c.h.b16 %v2574
  %v2765 = vunpack.c.l.b16 %v2575
  %v2766 = vunpack.c.h.b16 %v2575
  %v2767 = vunpack.c.l.b16 %v2576
  %v2768 = vunpack.c.h.b16 %v2576
  %v2769 = vunpack.c.l.b16 %v2577
  %v2770 = vunpack.c.h.b16 %v2577
  %v2771 = vunpack.c.l.b16 %v2578
  %v2772 = vunpack.c.l.b16 %v2579
  %v2773 = vunpack.c.h.b16 %v2579
  %v2774 = vunpack.c.l.b16 %v2580
  %v2775 = vunpack.c.h.b16 %v2580
  %v2776 = vunpack.c.l.b16 %v2581
  %v2777 = vunpack.c.h.b16 %v2581
  %v2778 = vunpack.c.l.b16 %v2582
  %v2779 = vunpack.c.h.b16 %v2582
  %v2780 = vunpack.c.l.b16 %v2583
  %v2781 = vunpack.c.h.b16 %v2583
  %v2782 = vunpack.c.l.b16 %v2584
  %v2783 = vunpack.c.l.b16 %v2585
  %v2784 = vunpack.c.h.b16 %v2585
  %v2785 = vunpack.c.l.b16 %v2586
  %v2786 = vunpack.c.h.b16 %v2586
  %v2787 = vunpack.c.l.b16 %v2587
  %v2788 = vunpack.c.h.b16 %v2587
  %v2789 = vunpack.c.l.b16 %v2588
  %v2790 = vunpack.c.h.b16 %v2588
  %v2791 = vunpack.c.l.b16 %v2589
  %v2792 = vunpack.c.h.b16 %v2589
  %v2793 = vunpack.c.l.b16 %v2590
  %v2794 = vunpack.c.l.b16 %v2591
  %v2795 = vunpack.c.h.b16 %v2591
  %v2796 = vunpack.c.l.b16 %v2592
  %v2797 = vunpack.c.h.b16 %v2592
  %v2798 = vunpack.c.l.b16 %v2593
  %v2799 = vunpack.c.h.b16 %v2593
  %v2800 = vunpack.c.l.b16 %v2594
  %v2801 = vunpack.c.h.b16 %v2594
  %v2802 = vunpack.c.l.b16 %v2595
  %v2803 = vunpack.c.h.b16 %v2595
  %v2804 = vunpack.c.l.b16 %v2596
  %v2805 = vunpack.c.l.b16 %v2597
  %v2806 = vunpack.c.h.b16 %v2597
  %v2807 = vunpack.c.l.b16 %v2598
  %v2808 = vunpack.c.h.b16 %v2598
  %v2809 = vunpack.c.l.b16 %v2599
  %v2810 = vunpack.c.h.b16 %v2599
  %v2811 = vunpack.c.l.b16 %v2600
  %v2812 = vunpack.c.h.b16 %v2600
  %v2813 = vunpack.c.l.b16 %v2601
  %v2814 = vunpack.c.h.b16 %v2601
  %v2815 = vunpack.c.l.b16 %v2602
  %v2816 = vunpack.c.l.b16 %v2603
  %v2817 = vunpack.c.h.b16 %v2603
  %v2818 = vunpack.c.l.b16 %v2604
  %v2819 = vunpack.c.h.b16 %v2604
  %v2820 = vunpack.c.l.b16 %v2605
  %v2821 = vunpack.c.h.b16 %v2605
  %v2822 = vunpack.c.l.b16 %v2606
  %v2823 = vunpack.c.h.b16 %v2606
  %v2824 = vunpack.c.l.b16 %v2607
  %v2825 = vunpack.c.h.b16 %v2607
  %v2826 = vunpack.c.l.b16 %v2608
  %v2827 = vunpack.c.l.b16 %v2609
  %v2828 = vunpack.c.h.b16 %v2609
  %v2829 = vunpack.c.l.b16 %v2610
  %v2830 = vunpack.c.h.b16 %v2610
  %v2831 = vunpack.c.l.b16 %v2611
  %v2832 = vunpack.c.h.b16 %v2611
  %v2833 = vunpack.c.l.b16 %v2612
  %v2834 = vunpack.c.h.b16 %v2612
  %v2835 = vunpack.c.l.b16 %v2613
  %v2836 = vunpack.c.h.b16 %v2613
  %v2837 = vunpack.c.l.b16 %v2614
  %v2838 = vunpack.c.l.b16 %v2615
  %v2839 = vunpack.c.h.b16 %v2615
  %v2840 = vunpack.c.l.b16 %v2616
  %v2841 = vunpack.c.h.b16 %v2616
  %v2842 = vunpack.c.l.b16 %v2617
  %v2843 = vunpack.c.h.b16 %v2617
  %v2844 = vunpack.c.l.b16 %v2618
  %v2845 = vunpack.c.h.b16 %v2618
  %v2846 = vunpack.c.l.b16 %v2619
  %v2847 = vunpack.c.h.b16 %v2619
  %v2848 = vunpack.c.l.b16 %v2620
  %v2849 = vunpack.c.l.b16 %v2621
  %v2850 = vunpack.c.h.b16 %v2621
  %v2851 = vunpack.c.l.b16 %v2622
  %v2852 = vunpack.c.h.b16 %v2622
  %v2853 = vunpack.c.l.b16 %v2623
  %v2854 = vunpack.c.h.b16 %v2623
  %v2855 = vunpack.c.l.b16 %v2624
  %v2856 = vunpack.c.h.b16 %v2624
  %v2857 = vunpack.c.l.b16 %v2625
  %v2858 = vunpack.c.h.b16 %v2625
  %v2859 = vunpack.c.l.b16 %v2626
  %v2860 = vunpack.c.l.b16 %v2627
  %v2861 = vunpack.c.h.b16 %v2627
  %v2862 = vunpack.c.l.b16 %v2628
  %v2863 = vunpack.c.h.b16 %v2628
  %v2864 = vunpack.c.l.b16 %v2629
  %v2865 = vunpack.c.h.b16 %v2629
  %v2866 = vunpack.c.l.b16 %v2630
  %v2867 = vunpack.c.h.b16 %v2630
  %v2868 = vunpack.c.l.b16 %v2631
  %v2869 = vunpack.c.h.b16 %v2631
  %v2870 = vunpack.c.l.b16 %v2632
  %v2871 = vpack.c.b16 %v2728, %v2717
  %v2872 = vpack.c.b16 %v2729, %v2718
  %v2873 = vpack.c.b16 %v2730, %v2719
  %v2874 = vpack.c.b16 %v2731, %v2720
  %v2875 = vpack.c.b16 %v2732, %v2721
  %v2876 = vpack.c.b16 %v2733, %v2722
  %v2877 = vpack.c.b16 %v2734, %v2723
  %v2878 = vpack.c.b16 %v2735, %v2724
  %v2879 = vpack.c.b16 %v2736, %v2725
  %v2880 = vpack.c.b16 %v2737, %v2726
  %v2881 = vpack.c.b16 %v2738, %v2727
  %v2882 = vpack.c.b16 %v2750, %v2739
  %v2883 = vpack.c.b16 %v2751, %v2740
  %v2884 = vpack.c.b16 %v2752, %v2741
  %v2885 = vpack.c.b16 %v2753, %v2742
  %v2886 = vpack.c.b16 %v2754, %v2743
  %v2887 = vpack.c.b16 %v2755, %v2744
  %v2888 = vpack.c.b16 %v2756, %v2745
  %v2889 = vpack.c.b16 %v2757, %v2746
  %v2890 = vpack.c.b16 %v2758, %v2747
  %v2891 = vpack.c.b16 %v2759, %v2748
  %v2892 = vpack.c.b16 %v2760, %v2749
  %v2893 = vpack.c.b16 %v2772, %v2761
  %v2894 = vpack.c.b16 %v2773, %v2762
  %v2895 = vpack.c.b16 %v2774, %v2763
  %v2896 = vpack.c.b16 %v2775, %v2764
  %v2897 = vpack.c.b16 %v2776, %v2765
  %v2898 = vpack.c.b16 %v2777, %v2766
  %v2899 = vpack.c.b16 %v2778, %v2767
  %v2900 = vpack.c.b16 %v2779, %v2768
  %v2901 = vpack.c.b16 %v2780, %v2769
  %v2902 = vpack.c.b16 %v2781, %v2770
  %v2903 = vpack.c.b16 %v2782, %v2771
  %v2904 = vpack.c.b16 %v2794, %v2783
  %v2905 = vpack.c.b16 %v2795, %v2784
  %v2906 = vpack.c.b16 %v2796, %v2785
  %v2907 = vpack.c.b16 %v2797, %v2786
  %v2908 = vpack.c.b16 %v2798, %v2787
  %v2909 = vpack.c.b16 %v2799, %v2788
  %v2910 = vpack.c.b16 %v2800, %v2789
  %v2911 = vpack.c.b16 %v2801, %v2790
  %v2912 = vpack.c.b16 %v2802, %v2791
  %v2913 = vpack.c.b16 %v2803, %v2792
  %v2914 = vpack.c.b16 %v2804, %v2793
  %v2915 = vpack.c.b16 %v2816, %v2805
  %v2916 = vpack.c.b16 %v2817, %v2806
  %v2917 = vpack.c.b16 %v2818, %v2807
  %v2918 = vpack.c.b16 %v2819, %v2808
  %v2919 = vpack.c.b16 %v2820, %v2809
  %v2920 = vpack.c.b16 %v2821, %v2810
  %v2921 = vpack.c.b16 %v2822, %v2811
  %v2922 = vpack.c.b16 %v2823, %v2812
  %v2923 = vpack.c.b16 %v2824, %v2813
  %v2924 = vpack.c.b16 %v2825, %v2814
  %v2925 = vpack.c.b16 %v2826, %v2815
  %v2926 = vpack.c.b16 %v2838, %v2827
  %v2927 = vpack.c.b16 %v2839, %v2828
  %v2928 = vpack.c.b16 %v2840, %v2829
  %v2929 = vpack.c.b16 %v2841, %v2830
  %v2930 = vpack.c.b16 %v2842, %v2831
  %v2931 = vpack.c.b16 %v2843, %v2832
  %v2932 = vpack.c.b16 %v2844, %v2833
  %v2933 = vpack.c.b16 %v2845, %v2834
  %v2934 = vpack.c.b16 %v2846, %v2835
  %v2935 = vpack.c.b16 %v2847, %v2836
  %v2936 = vpack.c.b16 %v2848, %v2837
  %v2937 = vpack.c.b16 %v2860, %v2849
  %v2938 = vpack.c.b16 %v2861, %v2850
  %v2939 = vpack.c.b16 %v2862, %v2851
  %v2940 = vpack.c.b16 %v2863, %v2852
  %v2941 = vpack.c.b16 %v2864, %v2853
  %v2942 = vpack.c.b16 %v2865, %v2854
  %v2943 = vpack.c.b16 %v2866, %v2855
  %v2944 = vpack.c.b16 %v2867, %v2856
  %v2945 = vpack.c.b16 %v2868, %v2857
  %v2946 = vpack.c.b16 %v2869, %v2858
  %v2947 = vpack.c.b16 %v2870, %v2859
  %vm3014 = vcmask 883712
  %v3016 = vsel %vm3014, %v2548, 0
  %vm3018 = vcmask 1045504
  %v3020 = vsel %vm3018, %v2937, 0
  %v3023 = vsel %vm3018, %v2938, 0
  %v3026 = vsel %vm3018, %v2939, 0
  %v3029 = vsel %vm3018, %v2940, 0
  %v3032 = vsel %vm3018, %v2941, 0
  %v3035 = vsel %vm3018, %v2942, 0
  %v3038 = vsel %vm3018, %v2943, 0
  %v3041 = vsel %vm3018, %v2944, 0
  %v3044 = vsel %vm3018, %v2945, 0
  %v3047 = vsel %vm3018, %v2946, 0
  %v3050 = vsel %vm3018, %v2947, 0
  %3052 = vmatprep.subr.bf16.mxu0 %v2872
  %3053 = vmatpush1.bf16.msra.mxu0 %v2871
  %3054 = vmatprep.subr.bf16.mxu0 %v2883
  %3055 = vmatpush1.bf16.msra.mxu0 %v2882
  %3056 = vmatprep.subr.bf16.mxu0 %v2894
  %3057 = vmatpush1.bf16.msra.mxu0 %v2893
  %3058 = vmatprep.subr.bf16.mxu0 %v2905
  %3059 = vmatpush1.bf16.msra.mxu0 %v2904
  %3060 = vmatprep.subr.bf16.mxu0 %v2916
  %3061 = vmatpush1.bf16.msra.mxu0 %v2915
  %3062 = vmatprep.subr.bf16.mxu0 %v2927
  %3063 = vmatpush1.bf16.msra.mxu0 %v2926
  %3064 = vmatprep.subr.bf16.mxu0 %v3023
  %3065 = vmatpush1.bf16.msra.mxu0 %v3020
  %3066 = vmatprep.subr.bf16.mxu0 0
  %3067 = vmatpush1.bf16.msra.mxu0 0
  %3068 = vmatprep.subr.bf16.mxu0 0
  %3069 = vmatpush1.bf16.msra.mxu0 0
  %3070 = vmatprep.subr.bf16.mxu0 0
  %3071 = vmatpush1.bf16.msra.mxu0 0
  %3072 = vmatprep.subr.bf16.mxu0 0
  %3073 = vmatpush1.bf16.msra.mxu0 0
  %3074 = vmatprep.subr.bf16.mxu0 0
  %3075 = vmatpush1.bf16.msra.mxu0 0
  %3076 = vmatprep.subr.bf16.mxu0 0
  %3077 = vmatpush1.bf16.msra.mxu0 0
  %3078 = vmatprep.subr.bf16.mxu0 0
  %3079 = vmatpush1.bf16.msra.mxu0 0
  %3080 = vmatprep.subr.bf16.mxu0 0
  %3081 = vmatpush1.bf16.msra.mxu0 0
  %3082 = vmatprep.subr.bf16.mxu0 0
  %3083 = vmatpush1.bf16.msra.mxu0 0
  %3084 = vmatprep.mubr.bf16.mxu0 0
  %3085 = vmatmul.mubr.bf16.gmra.mrb[0].mxu0 %v3016
  %v3086 = vpop.f32.mrb[0].mxu0
  %v3087 = vadd.f32 0.0, %v3086
  %v3088 = vpop.f32.mrb[0].mxu0
  %v3089 = vadd.f32 0.0, %v3088
  %v3090 = vpop.f32.mrb[0].mxu0
  %v3091 = vpop.f32.mrb[0].mxu0
  %3092 = vdwg.mxu0
  %3093 = vmatprep.subr.bf16.mxu0 %v2874
  %3094 = vmatpush1.bf16.msra.mxu0 %v2873
  %3095 = vmatprep.subr.bf16.mxu0 %v2885
  %3096 = vmatpush1.bf16.msra.mxu0 %v2884
  %3097 = vmatprep.subr.bf16.mxu0 %v2896
  %3098 = vmatpush1.bf16.msra.mxu0 %v2895
  %3099 = vmatprep.subr.bf16.mxu0 %v2907
  %3100 = vmatpush1.bf16.msra.mxu0 %v2906
  %3101 = vmatprep.subr.bf16.mxu0 %v2918
  %3102 = vmatpush1.bf16.msra.mxu0 %v2917
  %3103 = vmatprep.subr.bf16.mxu0 %v2929
  %3104 = vmatpush1.bf16.msra.mxu0 %v2928
  %3105 = vmatprep.subr.bf16.mxu0 %v3029
  %3106 = vmatpush1.bf16.msra.mxu0 %v3026
  %3107 = vmatprep.subr.bf16.mxu0 0
  %3108 = vmatpush1.bf16.msra.mxu0 0
  %3109 = vmatprep.subr.bf16.mxu0 0
  %3110 = vmatpush1.bf16.msra.mxu0 0
  %3111 = vmatprep.subr.bf16.mxu0 0
  %3112 = vmatpush1.bf16.msra.mxu0 0
  %3113 = vmatprep.subr.bf16.mxu0 0
  %3114 = vmatpush1.bf16.msra.mxu0 0
  %3115 = vmatprep.subr.bf16.mxu0 0
  %3116 = vmatpush1.bf16.msra.mxu0 0
  %3117 = vmatprep.subr.bf16.mxu0 0
  %3118 = vmatpush1.bf16.msra.mxu0 0
  %3119 = vmatprep.subr.bf16.mxu0 0
  %3120 = vmatpush1.bf16.msra.mxu0 0
  %3121 = vmatprep.subr.bf16.mxu0 0
  %3122 = vmatpush1.bf16.msra.mxu0 0
  %3123 = vmatprep.subr.bf16.mxu0 0
  %3124 = vmatpush1.bf16.msra.mxu0 0
  %3125 = vmatprep.mubr.bf16.mxu0 0
  %3126 = vmatmul.mubr.bf16.gmra.mrb[0].mxu0 %v3016
  %v3127 = vpop.f32.mrb[0].mxu0
  %v3128 = vadd.f32 0.0, %v3127
  %v3129 = vpop.f32.mrb[0].mxu0
  %v3130 = vadd.f32 0.0, %v3129
  %v3131 = vpop.f32.mrb[0].mxu0
  %v3132 = vpop.f32.mrb[0].mxu0
  %3133 = vdwg.mxu0
  %3134 = vmatprep.subr.bf16.mxu0 %v2876
  %3135 = vmatpush1.bf16.msra.mxu0 %v2875
  %3136 = vmatprep.subr.bf16.mxu0 %v2887
  %3137 = vmatpush1.bf16.msra.mxu0 %v2886
  %3138 = vmatprep.subr.bf16.mxu0 %v2898
  %3139 = vmatpush1.bf16.msra.mxu0 %v2897
  %3140 = vmatprep.subr.bf16.mxu0 %v2909
  %3141 = vmatpush1.bf16.msra.mxu0 %v2908
  %3142 = vmatprep.subr.bf16.mxu0 %v2920
  %3143 = vmatpush1.bf16.msra.mxu0 %v2919
  %3144 = vmatprep.subr.bf16.mxu0 %v2931
  %3145 = vmatpush1.bf16.msra.mxu0 %v2930
  %3146 = vmatprep.subr.bf16.mxu0 %v3035
  %3147 = vmatpush1.bf16.msra.mxu0 %v3032
  %3148 = vmatprep.subr.bf16.mxu0 0
  %3149 = vmatpush1.bf16.msra.mxu0 0
  %3150 = vmatprep.subr.bf16.mxu0 0
  %3151 = vmatpush1.bf16.msra.mxu0 0
  %3152 = vmatprep.subr.bf16.mxu0 0
  %3153 = vmatpush1.bf16.msra.mxu0 0
  %3154 = vmatprep.subr.bf16.mxu0 0
  %3155 = vmatpush1.bf16.msra.mxu0 0
  %3156 = vmatprep.subr.bf16.mxu0 0
  %3157 = vmatpush1.bf16.msra.mxu0 0
  %3158 = vmatprep.subr.bf16.mxu0 0
  %3159 = vmatpush1.bf16.msra.mxu0 0
  %3160 = vmatprep.subr.bf16.mxu0 0
  %3161 = vmatpush1.bf16.msra.mxu0 0
  %3162 = vmatprep.subr.bf16.mxu0 0
  %3163 = vmatpush1.bf16.msra.mxu0 0
  %3164 = vmatprep.subr.bf16.mxu0 0
  %3165 = vmatpush1.bf16.msra.mxu0 0
  %3166 = vmatprep.mubr.bf16.mxu0 0
  %3167 = vmatmul.mubr.bf16.gmra.mrb[0].mxu0 %v3016
  %v3168 = vpop.f32.mrb[0].mxu0
  %v3169 = vadd.f32 0.0, %v3168
  %v3170 = vpop.f32.mrb[0].mxu0
  %v3171 = vadd.f32 0.0, %v3170
  %v3172 = vpop.f32.mrb[0].mxu0
  %v3173 = vpop.f32.mrb[0].mxu0
  %3174 = vdwg.mxu0
  %3175 = vmatprep.subr.bf16.mxu0 %v2878
  %3176 = vmatpush1.bf16.msra.mxu0 %v2877
  %3177 = vmatprep.subr.bf16.mxu0 %v2889
  %3178 = vmatpush1.bf16.msra.mxu0 %v2888
  %3179 = vmatprep.subr.bf16.mxu0 %v2900
  %3180 = vmatpush1.bf16.msra.mxu0 %v2899
  %3181 = vmatprep.subr.bf16.mxu0 %v2911
  %3182 = vmatpush1.bf16.msra.mxu0 %v2910
  %3183 = vmatprep.subr.bf16.mxu0 %v2922
  %3184 = vmatpush1.bf16.msra.mxu0 %v2921
  %3185 = vmatprep.subr.bf16.mxu0 %v2933
  %3186 = vmatpush1.bf16.msra.mxu0 %v2932
  %3187 = vmatprep.subr.bf16.mxu0 %v3041
  %3188 = vmatpush1.bf16.msra.mxu0 %v3038
  %3189 = vmatprep.subr.bf16.mxu0 0
  %3190 = vmatpush1.bf16.msra.mxu0 0
  %3191 = vmatprep.subr.bf16.mxu0 0
  %3192 = vmatpush1.bf16.msra.mxu0 0
  %3193 = vmatprep.subr.bf16.mxu0 0
  %3194 = vmatpush1.bf16.msra.mxu0 0
  %3195 = vmatprep.subr.bf16.mxu0 0
  %3196 = vmatpush1.bf16.msra.mxu0 0
  %3197 = vmatprep.subr.bf16.mxu0 0
  %3198 = vmatpush1.bf16.msra.mxu0 0
  %3199 = vmatprep.subr.bf16.mxu0 0
  %3200 = vmatpush1.bf16.msra.mxu0 0
  %3201 = vmatprep.subr.bf16.mxu0 0
  %3202 = vmatpush1.bf16.msra.mxu0 0
  %3203 = vmatprep.subr.bf16.mxu0 0
  %3204 = vmatpush1.bf16.msra.mxu0 0
  %3205 = vmatprep.subr.bf16.mxu0 0
  %3206 = vmatpush1.bf16.msra.mxu0 0
  %3207 = vmatprep.mubr.bf16.mxu0 0
  %3208 = vmatmul.mubr.bf16.gmra.mrb[0].mxu0 %v3016
  %v3209 = vpop.f32.mrb[0].mxu0
  %v3210 = vadd.f32 0.0, %v3209
  %v3211 = vpop.f32.mrb[0].mxu0
  %v3212 = vadd.f32 0.0, %v3211
  %v3213 = vpop.f32.mrb[0].mxu0
  %v3214 = vpop.f32.mrb[0].mxu0
  %3215 = vdwg.mxu0
  %3216 = vmatprep.subr.bf16.mxu0 %v2880
  %3217 = vmatpush1.bf16.msra.mxu0 %v2879
  %3218 = vmatprep.subr.bf16.mxu0 %v2891
  %3219 = vmatpush1.bf16.msra.mxu0 %v2890
  %3220 = vmatprep.subr.bf16.mxu0 %v2902
  %3221 = vmatpush1.bf16.msra.mxu0 %v2901
  %3222 = vmatprep.subr.bf16.mxu0 %v2913
  %3223 = vmatpush1.bf16.msra.mxu0 %v2912
  %3224 = vmatprep.subr.bf16.mxu0 %v2924
  %3225 = vmatpush1.bf16.msra.mxu0 %v2923
  %3226 = vmatprep.subr.bf16.mxu0 %v2935
  %3227 = vmatpush1.bf16.msra.mxu0 %v2934
  %3228 = vmatprep.subr.bf16.mxu0 %v3047
  %3229 = vmatpush1.bf16.msra.mxu0 %v3044
  %3230 = vmatprep.subr.bf16.mxu0 0
  %3231 = vmatpush1.bf16.msra.mxu0 0
  %3232 = vmatprep.subr.bf16.mxu0 0
  %3233 = vmatpush1.bf16.msra.mxu0 0
  %3234 = vmatprep.subr.bf16.mxu0 0
  %3235 = vmatpush1.bf16.msra.mxu0 0
  %3236 = vmatprep.subr.bf16.mxu0 0
  %3237 = vmatpush1.bf16.msra.mxu0 0
  %3238 = vmatprep.subr.bf16.mxu0 0
  %3239 = vmatpush1.bf16.msra.mxu0 0
  %3240 = vmatprep.subr.bf16.mxu0 0
  %3241 = vmatpush1.bf16.msra.mxu0 0
  %3242 = vmatprep.subr.bf16.mxu0 0
  %3243 = vmatpush1.bf16.msra.mxu0 0
  %3244 = vmatprep.subr.bf16.mxu0 0
  %3245 = vmatpush1.bf16.msra.mxu0 0
  %3246 = vmatprep.subr.bf16.mxu0 0
  %3247 = vmatpush1.bf16.msra.mxu0 0
  %3248 = vmatprep.mubr.bf16.mxu0 0
  %3249 = vmatmul.mubr.bf16.gmra.mrb[0].mxu0 %v3016
  %v3250 = vpop.f32.mrb[0].mxu0
  %v3251 = vadd.f32 0.0, %v3250
  %v3252 = vpop.f32.mrb[0].mxu0
  %v3253 = vadd.f32 0.0, %v3252
  %v3254 = vpop.f32.mrb[0].mxu0
  %v3255 = vpop.f32.mrb[0].mxu0
  %3256 = vdwg.mxu0
  %3257 = vmatprep.subr.bf16.mxu0 0
  %3258 = vmatpush1.bf16.msra.mxu0 %v2881
  %3259 = vmatprep.subr.bf16.mxu0 0
  %3260 = vmatpush1.bf16.msra.mxu0 %v2892
  %3261 = vmatprep.subr.bf16.mxu0 0
  %3262 = vmatpush1.bf16.msra.mxu0 %v2903
  %3263 = vmatprep.subr.bf16.mxu0 0
  %3264 = vmatpush1.bf16.msra.mxu0 %v2914
  %3265 = vmatprep.subr.bf16.mxu0 0
  %3266 = vmatpush1.bf16.msra.mxu0 %v2925
  %3267 = vmatprep.subr.bf16.mxu0 0
  %3268 = vmatpush1.bf16.msra.mxu0 %v2936
  %3269 = vmatprep.subr.bf16.mxu0 0
  %3270 = vmatpush1.bf16.msra.mxu0 %v3050
  %3271 = vmatprep.subr.bf16.mxu0 0
  %3272 = vmatpush1.bf16.msra.mxu0 0
  %3273 = vmatprep.subr.bf16.mxu0 0
  %3274 = vmatpush1.bf16.msra.mxu0 0
  %3275 = vmatprep.subr.bf16.mxu0 0
  %3276 = vmatpush1.bf16.msra.mxu0 0
  %3277 = vmatprep.subr.bf16.mxu0 0
  %3278 = vmatpush1.bf16.msra.mxu0 0
  %3279 = vmatprep.subr.bf16.mxu0 0
  %3280 = vmatpush1.bf16.msra.mxu0 0
  %3281 = vmatprep.subr.bf16.mxu0 0
  %3282 = vmatpush1.bf16.msra.mxu0 0
  %3283 = vmatprep.subr.bf16.mxu0 0
  %3284 = vmatpush1.bf16.msra.mxu0 0
  %3285 = vmatprep.subr.bf16.mxu0 0
  %3286 = vmatpush1.bf16.msra.mxu0 0
  %3287 = vmatprep.subr.bf16.mxu0 0
  %3288 = vmatpush1.bf16.msra.mxu0 0
  %3289 = vmatprep.mubr.bf16.mxu0 0
  %3290 = vmatmul.mubr.bf16.gmra.mrb[0].mxu0 %v3016
  %v3291 = vpop.f32.mrb[0].mxu0
  %v3292 = vadd.f32 0.0, %v3291
  %v3293 = vpop.f32.mrb[0].mxu0
  %v3294 = vpop.f32.mrb[0].mxu0
  %v3295 = vpop.f32.mrb[0].mxu0
  %3296 = vdwg.mxu0
  %v3297 = vld [vmem:[%s2] sm:$0xff]
  %v3298 = vld [vmem:[%s3] sm:$0xff]
  %v3301 = vlaneseq
  %v3302 = vshrl.u32 %v3301, 7
  %v3303 = vsub.s32 0, %v3302
  %v3304 = vrot.slane %v68, %v3303
  %v3305 = vlaneseq
  %v3306 = vshrl.u32 %v3305, 7
  %v3307 = vsub.s32 1, %v3306
  %v3308 = vrot.slane %v68, %v3307
  %v3309 = vlaneseq
  %v3310 = vshrl.u32 %v3309, 7
  %v3311 = vsub.s32 2, %v3310
  %v3312 = vrot.slane %v68, %v3311
  %v3313 = vlaneseq
  %v3314 = vshrl.u32 %v3313, 7
  %v3315 = vsub.s32 3, %v3314
  %v3316 = vrot.slane %v68, %v3315
  %v3317 = vlaneseq
  %v3318 = vshrl.u32 %v3317, 7
  %v3319 = vsub.s32 4, %v3318
  %v3320 = vrot.slane %v68, %v3319
  %v3321 = vlaneseq
  %v3322 = vshrl.u32 %v3321, 7
  %v3323 = vsub.s32 5, %v3322
  %v3324 = vrot.slane %v68, %v3323
  %v3325 = vlaneseq
  %v3326 = vshrl.u32 %v3325, 7
  %v3327 = vsub.s32 6, %v3326
  %v3328 = vrot.slane %v68, %v3327
  %v3329 = vlaneseq
  %v3330 = vshrl.u32 %v3329, 7
  %v3331 = vsub.s32 7, %v3330
  %v3332 = vrot.slane %v68, %v3331
  %v3333 = vlaneseq
  %v3334 = vshrl.u32 %v3333, 7
  %v3335 = vsub.s32 0, %v3334
  %v3336 = vrot.slane %v69, %v3335
  %v3337 = vlaneseq
  %v3338 = vshrl.u32 %v3337, 7
  %v3339 = vsub.s32 1, %v3338
  %v3340 = vrot.slane %v69, %v3339
  %v3341 = vlaneseq
  %v3342 = vshrl.u32 %v3341, 7
  %v3343 = vsub.s32 2, %v3342
  %v3344 = vrot.slane %v69, %v3343
  %v3356 = vmul.f32 %v3087, %v3304
  %v3357 = vmul.f32 %v3089, %v3308
  %v3358 = vmul.f32 %v3128, %v3312
  %v3359 = vmul.f32 %v3130, %v3316
  %v3360 = vmul.f32 %v3169, %v3320
  %v3361 = vmul.f32 %v3171, %v3324
  %v3362 = vmul.f32 %v3210, %v3328
  %v3363 = vmul.f32 %v3212, %v3332
  %v3364 = vmul.f32 %v3251, %v3336
  %v3365 = vmul.f32 %v3253, %v3340
  %v3366 = vmul.f32 %v3292, %v3344
  %v3367 = vadd.f32 %v3356, %v3357
  %v3368 = vadd.f32 %v3367, %v3358
  %v3369 = vadd.f32 %v3368, %v3359
  %v3370 = vadd.f32 %v3369, %v3360
  %v3371 = vadd.f32 %v3370, %v3361
  %v3372 = vadd.f32 %v3371, %v3362
  %v3373 = vadd.f32 %v3372, %v3363
  %v3374 = vadd.f32 %v3373, %v3364
  %v3375 = vadd.f32 %v3374, %v3365
  %v3376 = vadd.f32 %v3375, %v3366
  %3377 = vadd.xlane.f32.xlu0 %v3376
  %v3378 = vpop.xlane.xlu0 %3377
  %v3379 = vmul.f32 %v3356, %v3087
  %v3380 = vmul.f32 %v3357, %v3089
  %v3381 = vmul.f32 %v3358, %v3128
  %v3382 = vmul.f32 %v3359, %v3130
  %v3383 = vmul.f32 %v3360, %v3169
  %v3384 = vmul.f32 %v3361, %v3171
  %v3385 = vmul.f32 %v3362, %v3210
  %v3386 = vmul.f32 %v3363, %v3212
  %v3387 = vmul.f32 %v3364, %v3251
  %v3388 = vmul.f32 %v3365, %v3253
  %v3389 = vmul.f32 %v3366, %v3292
  %v3390 = vadd.f32 %v3379, %v3380
  %v3391 = vadd.f32 %v3390, %v3381
  %v3392 = vadd.f32 %v3391, %v3382
  %v3393 = vadd.f32 %v3392, %v3383
  %v3394 = vadd.f32 %v3393, %v3384
  %v3395 = vadd.f32 %v3394, %v3385
  %v3396 = vadd.f32 %v3395, %v3386
  %v3397 = vadd.f32 %v3396, %v3387
  %v3398 = vadd.f32 %v3397, %v3388
  %v3399 = vadd.f32 %v3398, %v3389
  %3400 = vadd.xlane.f32.xlu0 %v3399
  %v3401 = vpop.xlane.xlu0 %3400
  %v3402 = vmul.f32 %v3378, 0.001953125
  %v3403 = vmul.f32 %v3401, 0.001953125
  %v3404 = vmul.f32 %v3402, %v3402
  %v3405 = vsub.f32 %v3403, %v3404
  %v3406 = vmax.f32 %v3405, 0.0
  %v3407 = vadd.f32 %v3406, 1e-05
  %v3408 = vrsqrt.pop %v3407
  %v3409 = vmul.f32 %v3297, %v3408
  %v3410 = vmul.f32 %v3402, %v3409
  %v3411 = vsub.f32 %v3298, %v3410
  %3413 = vset.pattern.permute.xlu0 0
  %3414 = vperm.xlu0 %3413, %v3409
  %v3415 = vpop.permute.xlu0 %3414
  %v3417 = vmul.f32 %v3087, %v3415
  %v3418 = vmul.f32 %v3089, %v3415
  %v3419 = vmul.f32 %v3128, %v3415
  %v3420 = vmul.f32 %v3130, %v3415
  %v3421 = vmul.f32 %v3169, %v3415
  %v3422 = vmul.f32 %v3171, %v3415
  %v3423 = vmul.f32 %v3210, %v3415
  %v3424 = vmul.f32 %v3212, %v3415
  %v3425 = vmul.f32 %v3251, %v3415
  %v3426 = vmul.f32 %v3253, %v3415
  %v3427 = vmul.f32 %v3292, %v3415
  %3429 = vset.pattern.permute.xlu0 0
  %3430 = vperm.xlu0 %3429, %v3411
  %v3431 = vpop.permute.xlu0 %3430
  %v3433 = vadd.f32 %v3417, %v3431
  %v3434 = vadd.f32 %v3418, %v3431
  %v3435 = vadd.f32 %v3419, %v3431
  %v3436 = vadd.f32 %v3420, %v3431
  %v3437 = vadd.f32 %v3421, %v3431
  %v3438 = vadd.f32 %v3422, %v3431
  %v3439 = vadd.f32 %v3423, %v3431
  %v3440 = vadd.f32 %v3424, %v3431
  %v3441 = vadd.f32 %v3425, %v3431
  %v3442 = vadd.f32 %v3426, %v3431
  %v3443 = vadd.f32 %v3427, %v3431
  %v3444 = vmax.f32 %v3433, 0.0
  %v3445 = vmax.f32 %v3434, 0.0
  %v3446 = vmax.f32 %v3435, 0.0
  %v3447 = vmax.f32 %v3436, 0.0
  %v3448 = vmax.f32 %v3437, 0.0
  %v3449 = vmax.f32 %v3438, 0.0
  %v3450 = vmax.f32 %v3439, 0.0
  %v3451 = vmax.f32 %v3440, 0.0
  %v3452 = vmax.f32 %v3441, 0.0
  %v3453 = vmax.f32 %v3442, 0.0
  %v3454 = vmax.f32 %v3443, 0.0
  %v3455 = vpack.c.bf16 %v3444, %v3444
  %v3456 = vpack.c.bf16 %v3445, %v3445
  %v3457 = vpack.c.bf16 %v3446, %v3446
  %v3458 = vpack.c.bf16 %v3447, %v3447
  %v3459 = vpack.c.bf16 %v3448, %v3448
  %v3460 = vpack.c.bf16 %v3449, %v3449
  %v3461 = vpack.c.bf16 %v3450, %v3450
  %v3462 = vpack.c.bf16 %v3451, %v3451
  %v3463 = vpack.c.bf16 %v3452, %v3452
  %v3464 = vpack.c.bf16 %v3453, %v3453
  %v3465 = vpack.c.bf16 %v3454, %v3454
  %v3466 = vld [vmem:[%s8] sm:$0xf]
  %v3467 = vld [vmem:[%s8 + $0x4] sm:$0xf]
  %v3468 = vld [vmem:[%s8 + $0x8] sm:$0xf]
  %v3469 = vld [vmem:[%s8 + $0xc] sm:$0xf]
  %v3470 = vld [vmem:[%s8 + $0x10] sm:$0xf]
  %v3471 = vld [vmem:[%s8 + $0x14] sm:$0xf]
  %v3472 = vld [vmem:[%s8 + $0x18] sm:$0xf]
  %v3473 = vld [vmem:[%s8 + $0x1c] sm:$0xf]
  %v3474 = vld [vmem:[%s8 + $0x20] sm:$0xf]
  %v3475 = vld [vmem:[%s8 + $0x24] sm:$0xf]
  %v3476 = vld [vmem:[%s8 + $0x28] sm:$0xf]
  %v3477 = vld [vmem:[%s8 + $0x2c] sm:$0xf]
  %v3478 = vld [vmem:[%s8 + $0x30] sm:$0xf]
  %v3479 = vld [vmem:[%s8 + $0x34] sm:$0xf]
  %v3480 = vld [vmem:[%s8 + $0x38] sm:$0xf]
  %v3481 = vld [vmem:[%s8 + $0x3c] sm:$0xf]
  %v3482 = vld [vmem:[%s8 + $0x40] sm:$0xf]
  %v3483 = vld [vmem:[%s8 + $0x44] sm:$0xf]
  %v3484 = vld [vmem:[%s8 + $0x48] sm:$0xf]
  %v3485 = vld [vmem:[%s8 + $0x4c] sm:$0xf]
  %v3486 = vld [vmem:[%s8 + $0x50] sm:$0xf]
  %v3487 = vld [vmem:[%s8 + $0x54] sm:$0xf]
  %v3488 = vld [vmem:[%s8 + $0x58] sm:$0xf]
  %v3489 = vld [vmem:[%s8 + $0x5c] sm:$0xf]
  %v3490 = vld [vmem:[%s8 + $0x60] sm:$0xf]
  %v3491 = vld [vmem:[%s8 + $0x64] sm:$0xf]
  %v3492 = vld [vmem:[%s8 + $0x68] sm:$0xf]
  %v3493 = vld [vmem:[%s8 + $0x6c] sm:$0xf]
  %v3494 = vld [vmem:[%s8 + $0x70] sm:$0xf]
  %v3495 = vld [vmem:[%s8 + $0x74] sm:$0xf]
  %v3496 = vld [vmem:[%s8 + $0x78] sm:$0xf]
  %v3497 = vld [vmem:[%s8 + $0x7c] sm:$0xf]
  %v3498 = vld [vmem:[%s8 + $0x80] sm:$0xf]
  %v3499 = vld [vmem:[%s8 + $0x84] sm:$0xf]
  %v3500 = vld [vmem:[%s8 + $0x88] sm:$0xf]
  %v3501 = vld [vmem:[%s8 + $0x8c] sm:$0xf]
  %v3502 = vld [vmem:[%s8 + $0x90] sm:$0xf]
  %v3503 = vld [vmem:[%s8 + $0x94] sm:$0xf]
  %v3504 = vld [vmem:[%s8 + $0x98] sm:$0xf]
  %v3505 = vld [vmem:[%s8 + $0x9c] sm:$0xf]
  %v3506 = vld [vmem:[%s8 + $0xa0] sm:$0xf]
  %v3507 = vld [vmem:[%s8 + $0xa4] sm:$0xf]
  %v3508 = vld [vmem:[%s8 + $0xa8] sm:$0xf]
  %v3509 = vld [vmem:[%s8 + $0xac] sm:$0xf]
  %v3510 = vld [vmem:[%s8 + $0xb0] sm:$0xf]
  %v3511 = vld [vmem:[%s8 + $0xb4] sm:$0xf]
  %v3512 = vld [vmem:[%s8 + $0xb8] sm:$0xf]
  %v3513 = vld [vmem:[%s8 + $0xbc] sm:$0xf]
  %v3514 = vld [vmem:[%s8 + $0xc0] sm:$0xf]
  %v3515 = vld [vmem:[%s8 + $0xc4] sm:$0xf]
  %v3516 = vld [vmem:[%s8 + $0xc8] sm:$0xf]
  %v3517 = vld [vmem:[%s8 + $0xcc] sm:$0xf]
  %v3518 = vld [vmem:[%s8 + $0xd0] sm:$0xf]
  %v3519 = vld [vmem:[%s8 + $0xd4] sm:$0xf]
  %v3520 = vld [vmem:[%s8 + $0xd8] sm:$0xf]
  %v3521 = vld [vmem:[%s8 + $0xdc] sm:$0xf]
  %v3522 = vld [vmem:[%s8 + $0xe0] sm:$0xf]
  %v3523 = vld [vmem:[%s8 + $0xe4] sm:$0xf]
  %v3524 = vld [vmem:[%s8 + $0xe8] sm:$0xf]
  %v3525 = vld [vmem:[%s8 + $0xec] sm:$0xf]
  %v3526 = vld [vmem:[%s8 + $0xf0] sm:$0xf]
  %v3527 = vld [vmem:[%s8 + $0xf4] sm:$0xf]
  %v3528 = vld [vmem:[%s8 + $0xf8] sm:$0xf]
  %v3529 = vld [vmem:[%s8 + $0xfc] sm:$0xf]
  %v3530 = vld [vmem:[%s8 + $0x100] sm:$0xf]
  %v3531 = vld [vmem:[%s8 + $0x104] sm:$0xf]
  %v3532 = vld [vmem:[%s8 + $0x108] sm:$0xf]
  %v3533 = vld [vmem:[%s8 + $0x10c] sm:$0xf]
  %v3534 = vld [vmem:[%s8 + $0x110] sm:$0xf]
  %v3535 = vld [vmem:[%s8 + $0x114] sm:$0xf]
  %v3536 = vld [vmem:[%s8 + $0x118] sm:$0xf]
  %v3537 = vld [vmem:[%s8 + $0x11c] sm:$0xf]
  %v3538 = vld [vmem:[%s8 + $0x120] sm:$0xf]
  %v3539 = vld [vmem:[%s8 + $0x124] sm:$0xf]
  %v3540 = vld [vmem:[%s8 + $0x128] sm:$0xf]
  %v3541 = vld [vmem:[%s8 + $0x12c] sm:$0xf]
  %v3542 = vld [vmem:[%s8 + $0x130] sm:$0xf]
  %v3543 = vld [vmem:[%s8 + $0x134] sm:$0xf]
  %v3544 = vld [vmem:[%s8 + $0x138] sm:$0xf]
  %v3545 = vld [vmem:[%s8 + $0x13c] sm:$0xf]
  %v3546 = vld [vmem:[%s8 + $0x140] sm:$0xf]
  %v3547 = vld [vmem:[%s8 + $0x144] sm:$0xf]
  %v3548 = vld [vmem:[%s8 + $0x148] sm:$0xf]
  %v3549 = vld [vmem:[%s8 + $0x14c] sm:$0xf]
  %v3550 = vld [vmem:[%s8 + $0x150] sm:$0xf]
  %v3551 = vld [vmem:[%s8 + $0x154] sm:$0xf]
  %v3552 = vld [vmem:[%s8 + $0x158] sm:$0xf]
  %v3553 = vld [vmem:[%s8 + $0x15c] sm:$0xf]
  %v3554 = vld [vmem:[%s8 + $0x160] sm:$0xf]
  %v3555 = vld [vmem:[%s8 + $0x164] sm:$0xf]
  %v3556 = vld [vmem:[%s8 + $0x168] sm:$0xf]
  %v3557 = vld [vmem:[%s8 + $0x16c] sm:$0xf]
  %v3558 = vld [vmem:[%s8 + $0x170] sm:$0xf]
  %v3559 = vld [vmem:[%s8 + $0x174] sm:$0xf]
  %v3560 = vld [vmem:[%s8 + $0x178] sm:$0xf]
  %v3561 = vld [vmem:[%s8 + $0x17c] sm:$0xf]
  %v3562 = vld [vmem:[%s8 + $0x180] sm:$0xf]
  %v3563 = vld [vmem:[%s8 + $0x184] sm:$0xf]
  %v3564 = vld [vmem:[%s8 + $0x188] sm:$0xf]
  %v3565 = vld [vmem:[%s8 + $0x18c] sm:$0xf]
  %v3566 = vld [vmem:[%s8 + $0x190] sm:$0xf]
  %v3567 = vld [vmem:[%s8 + $0x194] sm:$0xf]
  %v3568 = vld [vmem:[%s8 + $0x198] sm:$0xf]
  %v3569 = vld [vmem:[%s8 + $0x19c] sm:$0xf]
  %v3570 = vld [vmem:[%s8 + $0x1a0] sm:$0xf]
  %v3571 = vld [vmem:[%s8 + $0x1a4] sm:$0xf]
  %v3572 = vld [vmem:[%s8 + $0x1a8] sm:$0xf]
  %v3573 = vld [vmem:[%s8 + $0x1ac] sm:$0xf]
  %v3574 = vld [vmem:[%s8 + $0x1b0] sm:$0xf]
  %v3575 = vld [vmem:[%s8 + $0x1b4] sm:$0xf]
  %v3576 = vld [vmem:[%s8 + $0x1b8] sm:$0xf]
  %v3577 = vld [vmem:[%s8 + $0x1bc] sm:$0xf]
  %v3578 = vld [vmem:[%s8 + $0x1c0] sm:$0xf]
  %v3579 = vld [vmem:[%s8 + $0x1c4] sm:$0xf]
  %v3580 = vld [vmem:[%s8 + $0x1c8] sm:$0xf]
  %v3581 = vld [vmem:[%s8 + $0x1cc] sm:$0xf]
  %v3582 = vld [vmem:[%s8 + $0x1d0] sm:$0xf]
  %v3583 = vld [vmem:[%s8 + $0x1d4] sm:$0xf]
  %v3584 = vld [vmem:[%s8 + $0x1d8] sm:$0xf]
  %v3585 = vld [vmem:[%s8 + $0x1dc] sm:$0xf]
  %v3586 = vld [vmem:[%s8 + $0x1e0] sm:$0xf]
  %v3587 = vld [vmem:[%s8 + $0x1e4] sm:$0xf]
  %v3588 = vld [vmem:[%s8 + $0x1e8] sm:$0xf]
  %v3589 = vld [vmem:[%s8 + $0x1ec] sm:$0xf]
  %v3590 = vld [vmem:[%s8 + $0x1f0] sm:$0xf]
  %v3591 = vld [vmem:[%s8 + $0x1f4] sm:$0xf]
  %v3592 = vld [vmem:[%s8 + $0x1f8] sm:$0xf]
  %v3593 = vld [vmem:[%s8 + $0x1fc] sm:$0xf]
  %v3594 = vld [vmem:[%s8 + $0x200] sm:$0xf]
  %v3595 = vld [vmem:[%s8 + $0x204] sm:$0xf]
  %v3596 = vld [vmem:[%s8 + $0x208] sm:$0xf]
  %v3597 = vld [vmem:[%s8 + $0x20c] sm:$0xf]
  %v3598 = vld [vmem:[%s8 + $0x210] sm:$0xf]
  %v3599 = vld [vmem:[%s8 + $0x214] sm:$0xf]
  %v3600 = vld [vmem:[%s8 + $0x218] sm:$0xf]
  %v3601 = vld [vmem:[%s8 + $0x21c] sm:$0xf]
  %v3602 = vld [vmem:[%s8 + $0x220] sm:$0xf]
  %v3603 = vld [vmem:[%s8 + $0x224] sm:$0xf]
  %v3604 = vld [vmem:[%s8 + $0x228] sm:$0xf]
  %v3605 = vld [vmem:[%s8 + $0x22c] sm:$0xf]
  %v3606 = vld [vmem:[%s8 + $0x230] sm:$0xf]
  %v3607 = vld [vmem:[%s8 + $0x234] sm:$0xf]
  %v3608 = vld [vmem:[%s8 + $0x238] sm:$0xf]
  %v3609 = vld [vmem:[%s8 + $0x23c] sm:$0xf]
  %v3610 = vld [vmem:[%s8 + $0x240] sm:$0xf]
  %v3611 = vld [vmem:[%s8 + $0x244] sm:$0xf]
  %v3612 = vld [vmem:[%s8 + $0x248] sm:$0xf]
  %v3613 = vld [vmem:[%s8 + $0x24c] sm:$0xf]
  %v3614 = vld [vmem:[%s8 + $0x250] sm:$0xf]
  %v3615 = vld [vmem:[%s8 + $0x254] sm:$0xf]
  %v3616 = vld [vmem:[%s8 + $0x258] sm:$0xf]
  %v3617 = vld [vmem:[%s8 + $0x25c] sm:$0xf]
  %v3618 = vld [vmem:[%s8 + $0x260] sm:$0xf]
  %v3619 = vld [vmem:[%s8 + $0x264] sm:$0xf]
  %v3620 = vld [vmem:[%s8 + $0x268] sm:$0xf]
  %v3621 = vld [vmem:[%s8 + $0x26c] sm:$0xf]
  %v3622 = vld [vmem:[%s8 + $0x270] sm:$0xf]
  %v3623 = vld [vmem:[%s8 + $0x274] sm:$0xf]
  %v3624 = vld [vmem:[%s8 + $0x278] sm:$0xf]
  %v3625 = vld [vmem:[%s8 + $0x27c] sm:$0xf]
  %v3626 = vld [vmem:[%s8 + $0x280] sm:$0xf]
  %v3627 = vld [vmem:[%s8 + $0x284] sm:$0xf]
  %v3628 = vld [vmem:[%s8 + $0x288] sm:$0xf]
  %v3629 = vld [vmem:[%s8 + $0x28c] sm:$0xf]
  %v3630 = vld [vmem:[%s8 + $0x290] sm:$0xf]
  %v3631 = vld [vmem:[%s8 + $0x294] sm:$0xf]
  %v3632 = vld [vmem:[%s8 + $0x298] sm:$0xf]
  %v3633 = vld [vmem:[%s8 + $0x29c] sm:$0xf]
  %v3634 = vld [vmem:[%s8 + $0x2a0] sm:$0xf]
  %v3635 = vld [vmem:[%s8 + $0x2a4] sm:$0xf]
  %v3636 = vld [vmem:[%s8 + $0x2a8] sm:$0xf]
  %v3637 = vld [vmem:[%s8 + $0x2ac] sm:$0xf]
  %v3638 = vld [vmem:[%s8 + $0x2b0] sm:$0xf]
  %v3639 = vld [vmem:[%s8 + $0x2b4] sm:$0xf]
  %v3640 = vld [vmem:[%s8 + $0x2b8] sm:$0xf]
  %v3641 = vld [vmem:[%s8 + $0x2bc] sm:$0xf]
  %v3818 = vunpack.c.l.b16 %v3466
  %v3819 = vunpack.c.l.b16 %v3467
  %v3820 = vunpack.c.l.b16 %v3468
  %v3821 = vunpack.c.l.b16 %v3469
  %v3822 = vunpack.c.l.b16 %v3470
  %v3823 = vunpack.c.l.b16 %v3471
  %v3824 = vunpack.c.l.b16 %v3472
  %v3825 = vunpack.c.l.b16 %v3473
  %v3826 = vunpack.c.l.b16 %v3474
  %v3827 = vunpack.c.l.b16 %v3475
  %v3828 = vunpack.c.l.b16 %v3476
  %v3829 = vunpack.c.l.b16 %v3477
  %v3830 = vunpack.c.l.b16 %v3478
  %v3831 = vunpack.c.l.b16 %v3479
  %v3832 = vunpack.c.l.b16 %v3480
  %v3833 = vunpack.c.l.b16 %v3481
  %v3834 = vunpack.c.l.b16 %v3482
  %v3835 = vunpack.c.l.b16 %v3483
  %v3836 = vunpack.c.l.b16 %v3484
  %v3837 = vunpack.c.l.b16 %v3485
  %v3838 = vunpack.c.l.b16 %v3486
  %v3839 = vunpack.c.l.b16 %v3487
  %v3840 = vunpack.c.l.b16 %v3488
  %v3841 = vunpack.c.l.b16 %v3489
  %v3842 = vunpack.c.l.b16 %v3490
  %v3843 = vunpack.c.l.b16 %v3491
  %v3844 = vunpack.c.l.b16 %v3492
  %v3845 = vunpack.c.l.b16 %v3493
  %v3846 = vunpack.c.l.b16 %v3494
  %v3847 = vunpack.c.l.b16 %v3495
  %v3848 = vunpack.c.l.b16 %v3496
  %v3849 = vunpack.c.l.b16 %v3497
  %v3850 = vunpack.c.l.b16 %v3498
  %v3851 = vunpack.c.l.b16 %v3499
  %v3852 = vunpack.c.l.b16 %v3500
  %v3853 = vunpack.c.l.b16 %v3501
  %v3854 = vunpack.c.l.b16 %v3502
  %v3855 = vunpack.c.l.b16 %v3503
  %v3856 = vunpack.c.l.b16 %v3504
  %v3857 = vunpack.c.l.b16 %v3505
  %v3858 = vunpack.c.l.b16 %v3506
  %v3859 = vunpack.c.l.b16 %v3507
  %v3860 = vunpack.c.l.b16 %v3508
  %v3861 = vunpack.c.l.b16 %v3509
  %v3862 = vunpack.c.l.b16 %v3510
  %v3863 = vunpack.c.l.b16 %v3511
  %v3864 = vunpack.c.l.b16 %v3512
  %v3865 = vunpack.c.l.b16 %v3513
  %v3866 = vunpack.c.l.b16 %v3514
  %v3867 = vunpack.c.l.b16 %v3515
  %v3868 = vunpack.c.l.b16 %v3516
  %v3869 = vunpack.c.l.b16 %v3517
  %v3870 = vunpack.c.l.b16 %v3518
  %v3871 = vunpack.c.l.b16 %v3519
  %v3872 = vunpack.c.l.b16 %v3520
  %v3873 = vunpack.c.l.b16 %v3521
  %v3874 = vunpack.c.l.b16 %v3522
  %v3875 = vunpack.c.l.b16 %v3523
  %v3876 = vunpack.c.l.b16 %v3524
  %v3877 = vunpack.c.l.b16 %v3525
  %v3878 = vunpack.c.l.b16 %v3526
  %v3879 = vunpack.c.l.b16 %v3527
  %v3880 = vunpack.c.l.b16 %v3528
  %v3881 = vunpack.c.l.b16 %v3529
  %v3882 = vunpack.c.l.b16 %v3530
  %v3883 = vunpack.c.l.b16 %v3531
  %v3884 = vunpack.c.l.b16 %v3532
  %v3885 = vunpack.c.l.b16 %v3533
  %v3886 = vunpack.c.l.b16 %v3534
  %v3887 = vunpack.c.l.b16 %v3535
  %v3888 = vunpack.c.l.b16 %v3536
  %v3889 = vunpack.c.l.b16 %v3537
  %v3890 = vunpack.c.l.b16 %v3538
  %v3891 = vunpack.c.l.b16 %v3539
  %v3892 = vunpack.c.l.b16 %v3540
  %v3893 = vunpack.c.l.b16 %v3541
  %v3894 = vunpack.c.l.b16 %v3542
  %v3895 = vunpack.c.l.b16 %v3543
  %v3896 = vunpack.c.l.b16 %v3544
  %v3897 = vunpack.c.l.b16 %v3545
  %v3898 = vunpack.c.l.b16 %v3546
  %v3899 = vunpack.c.l.b16 %v3547
  %v3900 = vunpack.c.l.b16 %v3548
  %v3901 = vunpack.c.l.b16 %v3549
  %v3902 = vunpack.c.l.b16 %v3550
  %v3903 = vunpack.c.l.b16 %v3551
  %v3904 = vunpack.c.l.b16 %v3552
  %v3905 = vunpack.c.l.b16 %v3553
  %v3906 = vunpack.c.l.b16 %v3554
  %v3907 = vunpack.c.l.b16 %v3555
  %v3908 = vunpack.c.l.b16 %v3556
  %v3909 = vunpack.c.l.b16 %v3557
  %v3910 = vunpack.c.l.b16 %v3558
  %v3911 = vunpack.c.l.b16 %v3559
  %v3912 = vunpack.c.l.b16 %v3560
  %v3913 = vunpack.c.l.b16 %v3561
  %v3914 = vunpack.c.l.b16 %v3562
  %v3915 = vunpack.c.l.b16 %v3563
  %v3916 = vunpack.c.l.b16 %v3564
  %v3917 = vunpack.c.l.b16 %v3565
  %v3918 = vunpack.c.l.b16 %v3566
  %v3919 = vunpack.c.l.b16 %v3567
  %v3920 = vunpack.c.l.b16 %v3568
  %v3921 = vunpack.c.l.b16 %v3569
  %v3922 = vunpack.c.l.b16 %v3570
  %v3923 = vunpack.c.l.b16 %v3571
  %v3924 = vunpack.c.l.b16 %v3572
  %v3925 = vunpack.c.l.b16 %v3573
  %v3926 = vunpack.c.l.b16 %v3574
  %v3927 = vunpack.c.l.b16 %v3575
  %v3928 = vunpack.c.l.b16 %v3576
  %v3929 = vunpack.c.l.b16 %v3577
  %v3930 = vunpack.c.l.b16 %v3578
  %v3931 = vunpack.c.l.b16 %v3579
  %v3932 = vunpack.c.l.b16 %v3580
  %v3933 = vunpack.c.l.b16 %v3581
  %v3934 = vunpack.c.l.b16 %v3582
  %v3935 = vunpack.c.l.b16 %v3583
  %v3936 = vunpack.c.l.b16 %v3584
  %v3937 = vunpack.c.l.b16 %v3585
  %v3938 = vunpack.c.l.b16 %v3586
  %v3939 = vunpack.c.l.b16 %v3587
  %v3940 = vunpack.c.l.b16 %v3588
  %v3941 = vunpack.c.l.b16 %v3589
  %v3942 = vunpack.c.l.b16 %v3590
  %v3943 = vunpack.c.l.b16 %v3591
  %v3944 = vunpack.c.l.b16 %v3592
  %v3945 = vunpack.c.l.b16 %v3593
  %v3946 = vunpack.c.l.b16 %v3594
  %v3947 = vunpack.c.l.b16 %v3595
  %v3948 = vunpack.c.l.b16 %v3596
  %v3949 = vunpack.c.l.b16 %v3597
  %v3950 = vunpack.c.l.b16 %v3598
  %v3951 = vunpack.c.l.b16 %v3599
  %v3952 = vunpack.c.l.b16 %v3600
  %v3953 = vunpack.c.l.b16 %v3601
  %v3954 = vunpack.c.l.b16 %v3602
  %v3955 = vunpack.c.l.b16 %v3603
  %v3956 = vunpack.c.l.b16 %v3604
  %v3957 = vunpack.c.l.b16 %v3605
  %v3958 = vunpack.c.l.b16 %v3606
  %v3959 = vunpack.c.l.b16 %v3607
  %v3960 = vunpack.c.l.b16 %v3608
  %v3961 = vunpack.c.l.b16 %v3609
  %v3962 = vunpack.c.l.b16 %v3610
  %v3963 = vunpack.c.l.b16 %v3611
  %v3964 = vunpack.c.l.b16 %v3612
  %v3965 = vunpack.c.l.b16 %v3613
  %v3966 = vunpack.c.l.b16 %v3614
  %v3967 = vunpack.c.l.b16 %v3615
  %v3968 = vunpack.c.l.b16 %v3616
  %v3969 = vunpack.c.l.b16 %v3617
  %v3970 = vunpack.c.l.b16 %v3618
  %v3971 = vunpack.c.l.b16 %v3619
  %v3972 = vunpack.c.l.b16 %v3620
  %v3973 = vunpack.c.l.b16 %v3621
  %v3974 = vunpack.c.l.b16 %v3622
  %v3975 = vunpack.c.l.b16 %v3623
  %v3976 = vunpack.c.l.b16 %v3624
  %v3977 = vunpack.c.l.b16 %v3625
  %v3978 = vunpack.c.l.b16 %v3626
  %v3979 = vunpack.c.l.b16 %v3627
  %v3980 = vunpack.c.l.b16 %v3628
  %v3981 = vunpack.c.l.b16 %v3629
  %v3982 = vunpack.c.l.b16 %v3630
  %v3983 = vunpack.c.l.b16 %v3631
  %v3984 = vunpack.c.l.b16 %v3632
  %v3985 = vunpack.c.l.b16 %v3633
  %v3986 = vunpack.c.l.b16 %v3634
  %v3987 = vunpack.c.l.b16 %v3635
  %v3988 = vunpack.c.l.b16 %v3636
  %v3989 = vunpack.c.l.b16 %v3637
  %v3990 = vunpack.c.l.b16 %v3638
  %v3991 = vunpack.c.l.b16 %v3639
  %v3992 = vunpack.c.l.b16 %v3640
  %v3993 = vunpack.c.l.b16 %v3641
  %v3994 = vpack.c.b16 %v3819, %v3818
  %v3995 = vpack.c.b16 %v3821, %v3820
  %v3996 = vpack.c.b16 %v3823, %v3822
  %v3997 = vpack.c.b16 %v3825, %v3824
  %v3998 = vpack.c.b16 %v3827, %v3826
  %v3999 = vpack.c.b16 %v3829, %v3828
  %v4000 = vpack.c.b16 %v3831, %v3830
  %v4001 = vpack.c.b16 %v3833, %v3832
  %v4002 = vpack.c.b16 %v3835, %v3834
  %v4003 = vpack.c.b16 %v3837, %v3836
  %v4004 = vpack.c.b16 %v3839, %v3838
  %v4005 = vpack.c.b16 %v3841, %v3840
  %v4006 = vpack.c.b16 %v3843, %v3842
  %v4007 = vpack.c.b16 %v3845, %v3844
  %v4008 = vpack.c.b16 %v3847, %v3846
  %v4009 = vpack.c.b16 %v3849, %v3848
  %v4010 = vpack.c.b16 %v3851, %v3850
  %v4011 = vpack.c.b16 %v3853, %v3852
  %v4012 = vpack.c.b16 %v3855, %v3854
  %v4013 = vpack.c.b16 %v3857, %v3856
  %v4014 = vpack.c.b16 %v3859, %v3858
  %v4015 = vpack.c.b16 %v3861, %v3860
  %v4016 = vpack.c.b16 %v3863, %v3862
  %v4017 = vpack.c.b16 %v3865, %v3864
  %v4018 = vpack.c.b16 %v3867, %v3866
  %v4019 = vpack.c.b16 %v3869, %v3868
  %v4020 = vpack.c.b16 %v3871, %v3870
  %v4021 = vpack.c.b16 %v3873, %v3872
  %v4022 = vpack.c.b16 %v3875, %v3874
  %v4023 = vpack.c.b16 %v3877, %v3876
  %v4024 = vpack.c.b16 %v3879, %v3878
  %v4025 = vpack.c.b16 %v3881, %v3880
  %v4026 = vpack.c.b16 %v3883, %v3882
  %v4027 = vpack.c.b16 %v3885, %v3884
  %v4028 = vpack.c.b16 %v3887, %v3886
  %v4029 = vpack.c.b16 %v3889, %v3888
  %v4030 = vpack.c.b16 %v3891, %v3890
  %v4031 = vpack.c.b16 %v3893, %v3892
  %v4032 = vpack.c.b16 %v3895, %v3894
  %v4033 = vpack.c.b16 %v3897, %v3896
  %v4034 = vpack.c.b16 %v3899, %v3898
  %v4035 = vpack.c.b16 %v3901, %v3900
  %v4036 = vpack.c.b16 %v3903, %v3902
  %v4037 = vpack.c.b16 %v3905, %v3904
  %v4038 = vpack.c.b16 %v3907, %v3906
  %v4039 = vpack.c.b16 %v3909, %v3908
  %v4040 = vpack.c.b16 %v3911, %v3910
  %v4041 = vpack.c.b16 %v3913, %v3912
  %v4042 = vpack.c.b16 %v3915, %v3914
  %v4043 = vpack.c.b16 %v3917, %v3916
  %v4044 = vpack.c.b16 %v3919, %v3918
  %v4045 = vpack.c.b16 %v3921, %v3920
  %v4046 = vpack.c.b16 %v3923, %v3922
  %v4047 = vpack.c.b16 %v3925, %v3924
  %v4048 = vpack.c.b16 %v3927, %v3926
  %v4049 = vpack.c.b16 %v3929, %v3928
  %v4050 = vpack.c.b16 %v3931, %v3930
  %v4051 = vpack.c.b16 %v3933, %v3932
  %v4052 = vpack.c.b16 %v3935, %v3934
  %v4053 = vpack.c.b16 %v3937, %v3936
  %v4054 = vpack.c.b16 %v3939, %v3938
  %v4055 = vpack.c.b16 %v3941, %v3940
  %v4056 = vpack.c.b16 %v3943, %v3942
  %v4057 = vpack.c.b16 %v3945, %v3944
  %v4058 = vpack.c.b16 %v3947, %v3946
  %v4059 = vpack.c.b16 %v3949, %v3948
  %v4060 = vpack.c.b16 %v3951, %v3950
  %v4061 = vpack.c.b16 %v3953, %v3952
  %v4062 = vpack.c.b16 %v3955, %v3954
  %v4063 = vpack.c.b16 %v3957, %v3956
  %v4064 = vpack.c.b16 %v3959, %v3958
  %v4065 = vpack.c.b16 %v3961, %v3960
  %v4066 = vpack.c.b16 %v3963, %v3962
  %v4067 = vpack.c.b16 %v3965, %v3964
  %v4068 = vpack.c.b16 %v3967, %v3966
  %v4069 = vpack.c.b16 %v3969, %v3968
  %v4070 = vpack.c.b16 %v3971, %v3970
  %v4071 = vpack.c.b16 %v3973, %v3972
  %v4072 = vpack.c.b16 %v3975, %v3974
  %v4073 = vpack.c.b16 %v3977, %v3976
  %v4074 = vpack.c.b16 %v3979, %v3978
  %v4075 = vpack.c.b16 %v3981, %v3980
  %v4076 = vpack.c.b16 %v3983, %v3982
  %v4077 = vpack.c.b16 %v3985, %v3984
  %v4078 = vpack.c.b16 %v3987, %v3986
  %v4079 = vpack.c.b16 %v3989, %v3988
  %v4080 = vpack.c.b16 %v3991, %v3990
  %v4081 = vpack.c.b16 %v3993, %v3992
  %4170 = vmatprep.subr.bf16.mxu0 0
  %4171 = vmatpush1.bf16.msra.mxu0 %v3994
  %4172 = vmatprep.subr.bf16.mxu0 0
  %4173 = vmatpush1.bf16.msra.mxu0 %v3995
  %4174 = vmatprep.subr.bf16.mxu0 0
  %4175 = vmatpush1.bf16.msra.mxu0 %v3996
  %4176 = vmatprep.subr.bf16.mxu0 0
  %4177 = vmatpush1.bf16.msra.mxu0 %v3997
  %4178 = vmatprep.subr.bf16.mxu0 0
  %4179 = vmatpush1.bf16.msra.mxu0 %v3998
  %4180 = vmatprep.subr.bf16.mxu0 0
  %4181 = vmatpush1.bf16.msra.mxu0 %v3999
  %4182 = vmatprep.subr.bf16.mxu0 0
  %4183 = vmatpush1.bf16.msra.mxu0 %v4000
  %4184 = vmatprep.subr.bf16.mxu0 0
  %4185 = vmatpush1.bf16.msra.mxu0 %v4001
  %4186 = vmatprep.subr.bf16.mxu0 0
  %4187 = vmatpush1.bf16.msra.mxu0 %v4002
  %4188 = vmatprep.subr.bf16.mxu0 0
  %4189 = vmatpush1.bf16.msra.mxu0 %v4003
  %4190 = vmatprep.subr.bf16.mxu0 0
  %4191 = vmatpush1.bf16.msra.mxu0 %v4004
  %4192 = vmatprep.subr.bf16.mxu0 0
  %4193 = vmatpush1.bf16.msra.mxu0 %v4005
  %4194 = vmatprep.subr.bf16.mxu0 0
  %4195 = vmatpush1.bf16.msra.mxu0 %v4006
  %4196 = vmatprep.subr.bf16.mxu0 0
  %4197 = vmatpush1.bf16.msra.mxu0 %v4007
  %4198 = vmatprep.subr.bf16.mxu0 0
  %4199 = vmatpush1.bf16.msra.mxu0 %v4008
  %4200 = vmatprep.subr.bf16.mxu0 0
  %4201 = vmatpush1.bf16.msra.mxu0 %v4009
  %4202 = vmatprep.mubr.bf16.mxu0 %v3456
  %4203 = vmatmul.mubr.bf16.gmra.mrb[0].mxu0 %v3455
  %v4204 = vpop.f32.mrb[0].mxu0
  %v4205 = vadd.f32 0.0, %v4204
  %v4206 = vpop.f32.mrb[0].mxu0
  %v4207 = vpop.f32.mrb[0].mxu0
  %v4208 = vpop.f32.mrb[0].mxu0
  %4209 = vdwg.mxu0
  %4210 = vmatprep.subr.bf16.mxu0 0
  %4211 = vmatpush1.bf16.msra.mxu0 %v4010
  %4212 = vmatprep.subr.bf16.mxu0 0
  %4213 = vmatpush1.bf16.msra.mxu0 %v4011
  %4214 = vmatprep.subr.bf16.mxu0 0
  %4215 = vmatpush1.bf16.msra.mxu0 %v4012
  %4216 = vmatprep.subr.bf16.mxu0 0
  %4217 = vmatpush1.bf16.msra.mxu0 %v4013
  %4218 = vmatprep.subr.bf16.mxu0 0
  %4219 = vmatpush1.bf16.msra.mxu0 %v4014
  %4220 = vmatprep.subr.bf16.mxu0 0
  %4221 = vmatpush1.bf16.msra.mxu0 %v4015
  %4222 = vmatprep.subr.bf16.mxu0 0
  %4223 = vmatpush1.bf16.msra.mxu0 %v4016
  %4224 = vmatprep.subr.bf16.mxu0 0
  %4225 = vmatpush1.bf16.msra.mxu0 %v4017
  %4226 = vmatprep.subr.bf16.mxu0 0
  %4227 = vmatpush1.bf16.msra.mxu0 %v4018
  %4228 = vmatprep.subr.bf16.mxu0 0
  %4229 = vmatpush1.bf16.msra.mxu0 %v4019
  %4230 = vmatprep.subr.bf16.mxu0 0
  %4231 = vmatpush1.bf16.msra.mxu0 %v4020
  %4232 = vmatprep.subr.bf16.mxu0 0
  %4233 = vmatpush1.bf16.msra.mxu0 %v4021
  %4234 = vmatprep.subr.bf16.mxu0 0
  %4235 = vmatpush1.bf16.msra.mxu0 %v4022
  %4236 = vmatprep.subr.bf16.mxu0 0
  %4237 = vmatpush1.bf16.msra.mxu0 %v4023
  %4238 = vmatprep.subr.bf16.mxu0 0
  %4239 = vmatpush1.bf16.msra.mxu0 %v4024
  %4240 = vmatprep.subr.bf16.mxu0 0
  %4241 = vmatpush1.bf16.msra.mxu0 %v4025
  %4242 = vmatprep.mubr.bf16.mxu0 %v3458
  %4243 = vmatmul.mubr.bf16.gmra.mrb[0].mxu0 %v3457
  %v4244 = vpop.f32.mrb[0].mxu0
  %v4245 = vadd.f32 %v4205, %v4244
  %v4246 = vpop.f32.mrb[0].mxu0
  %v4247 = vpop.f32.mrb[0].mxu0
  %v4248 = vpop.f32.mrb[0].mxu0
  %4249 = vdwg.mxu0
  %4250 = vmatprep.subr.bf16.mxu0 0
  %4251 = vmatpush1.bf16.msra.mxu0 %v4026
  %4252 = vmatprep.subr.bf16.mxu0 0
  %4253 = vmatpush1.bf16.msra.mxu0 %v4027
  %4254 = vmatprep.subr.bf16.mxu0 0
  %4255 = vmatpush1.bf16.msra.mxu0 %v4028
  %4256 = vmatprep.subr.bf16.mxu0 0
  %4257 = vmatpush1.bf16.msra.mxu0 %v4029
  %4258 = vmatprep.subr.bf16.mxu0 0
  %4259 = vmatpush1.bf16.msra.mxu0 %v4030
  %4260 = vmatprep.subr.bf16.mxu0 0
  %4261 = vmatpush1.bf16.msra.mxu0 %v4031
  %4262 = vmatprep.subr.bf16.mxu0 0
  %4263 = vmatpush1.bf16.msra.mxu0 %v4032
  %4264 = vmatprep.subr.bf16.mxu0 0
  %4265 = vmatpush1.bf16.msra.mxu0 %v4033
  %4266 = vmatprep.subr.bf16.mxu0 0
  %4267 = vmatpush1.bf16.msra.mxu0 %v4034
  %4268 = vmatprep.subr.bf16.mxu0 0
  %4269 = vmatpush1.bf16.msra.mxu0 %v4035
  %4270 = vmatprep.subr.bf16.mxu0 0
  %4271 = vmatpush1.bf16.msra.mxu0 %v4036
  %4272 = vmatprep.subr.bf16.mxu0 0
  %4273 = vmatpush1.bf16.msra.mxu0 %v4037
  %4274 = vmatprep.subr.bf16.mxu0 0
  %4275 = vmatpush1.bf16.msra.mxu0 %v4038
  %4276 = vmatprep.subr.bf16.mxu0 0
  %4277 = vmatpush1.bf16.msra.mxu0 %v4039
  %4278 = vmatprep.subr.bf16.mxu0 0
  %4279 = vmatpush1.bf16.msra.mxu0 %v4040
  %4280 = vmatprep.subr.bf16.mxu0 0
  %4281 = vmatpush1.bf16.msra.mxu0 %v4041
  %4282 = vmatprep.mubr.bf16.mxu0 %v3460
  %4283 = vmatmul.mubr.bf16.gmra.mrb[0].mxu0 %v3459
  %v4284 = vpop.f32.mrb[0].mxu0
  %v4285 = vadd.f32 %v4245, %v4284
  %v4286 = vpop.f32.mrb[0].mxu0
  %v4287 = vpop.f32.mrb[0].mxu0
  %v4288 = vpop.f32.mrb[0].mxu0
  %4289 = vdwg.mxu0
  %4290 = vmatprep.subr.bf16.mxu0 0
  %4291 = vmatpush1.bf16.msra.mxu0 %v4042
  %4292 = vmatprep.subr.bf16.mxu0 0
  %4293 = vmatpush1.bf16.msra.mxu0 %v4043
  %4294 = vmatprep.subr.bf16.mxu0 0
  %4295 = vmatpush1.bf16.msra.mxu0 %v4044
  %4296 = vmatprep.subr.bf16.mxu0 0
  %4297 = vmatpush1.bf16.msra.mxu0 %v4045
  %4298 = vmatprep.subr.bf16.mxu0 0
  %4299 = vmatpush1.bf16.msra.mxu0 %v4046
  %4300 = vmatprep.subr.bf16.mxu0 0
  %4301 = vmatpush1.bf16.msra.mxu0 %v4047
  %4302 = vmatprep.subr.bf16.mxu0 0
  %4303 = vmatpush1.bf16.msra.mxu0 %v4048
  %4304 = vmatprep.subr.bf16.mxu0 0
  %4305 = vmatpush1.bf16.msra.mxu0 %v4049
  %4306 = vmatprep.subr.bf16.mxu0 0
  %4307 = vmatpush1.bf16.msra.mxu0 %v4050
  %4308 = vmatprep.subr.bf16.mxu0 0
  %4309 = vmatpush1.bf16.msra.mxu0 %v4051
  %4310 = vmatprep.subr.bf16.mxu0 0
  %4311 = vmatpush1.bf16.msra.mxu0 %v4052
  %4312 = vmatprep.subr.bf16.mxu0 0
  %4313 = vmatpush1.bf16.msra.mxu0 %v4053
  %4314 = vmatprep.subr.bf16.mxu0 0
  %4315 = vmatpush1.bf16.msra.mxu0 %v4054
  %4316 = vmatprep.subr.bf16.mxu0 0
  %4317 = vmatpush1.bf16.msra.mxu0 %v4055
  %4318 = vmatprep.subr.bf16.mxu0 0
  %4319 = vmatpush1.bf16.msra.mxu0 %v4056
  %4320 = vmatprep.subr.bf16.mxu0 0
  %4321 = vmatpush1.bf16.msra.mxu0 %v4057
  %4322 = vmatprep.mubr.bf16.mxu0 %v3462
  %4323 = vmatmul.mubr.bf16.gmra.mrb[0].mxu0 %v3461
  %v4324 = vpop.f32.mrb[0].mxu0
  %v4325 = vadd.f32 %v4285, %v4324
  %v4326 = vpop.f32.mrb[0].mxu0
  %v4327 = vpop.f32.mrb[0].mxu0
  %v4328 = vpop.f32.mrb[0].mxu0
  %4329 = vdwg.mxu0
  %4330 = vmatprep.subr.bf16.mxu0 0
  %4331 = vmatpush1.bf16.msra.mxu0 %v4058
  %4332 = vmatprep.subr.bf16.mxu0 0
  %4333 = vmatpush1.bf16.msra.mxu0 %v4059
  %4334 = vmatprep.subr.bf16.mxu0 0
  %4335 = vmatpush1.bf16.msra.mxu0 %v4060
  %4336 = vmatprep.subr.bf16.mxu0 0
  %4337 = vmatpush1.bf16.msra.mxu0 %v4061
  %4338 = vmatprep.subr.bf16.mxu0 0
  %4339 = vmatpush1.bf16.msra.mxu0 %v4062
  %4340 = vmatprep.subr.bf16.mxu0 0
  %4341 = vmatpush1.bf16.msra.mxu0 %v4063
  %4342 = vmatprep.subr.bf16.mxu0 0
  %4343 = vmatpush1.bf16.msra.mxu0 %v4064
  %4344 = vmatprep.subr.bf16.mxu0 0
  %4345 = vmatpush1.bf16.msra.mxu0 %v4065
  %4346 = vmatprep.subr.bf16.mxu0 0
  %4347 = vmatpush1.bf16.msra.mxu0 %v4066
  %4348 = vmatprep.subr.bf16.mxu0 0
  %4349 = vmatpush1.bf16.msra.mxu0 %v4067
  %4350 = vmatprep.subr.bf16.mxu0 0
  %4351 = vmatpush1.bf16.msra.mxu0 %v4068
  %4352 = vmatprep.subr.bf16.mxu0 0
  %4353 = vmatpush1.bf16.msra.mxu0 %v4069
  %4354 = vmatprep.subr.bf16.mxu0 0
  %4355 = vmatpush1.bf16.msra.mxu0 %v4070
  %4356 = vmatprep.subr.bf16.mxu0 0
  %4357 = vmatpush1.bf16.msra.mxu0 %v4071
  %4358 = vmatprep.subr.bf16.mxu0 0
  %4359 = vmatpush1.bf16.msra.mxu0 %v4072
  %4360 = vmatprep.subr.bf16.mxu0 0
  %4361 = vmatpush1.bf16.msra.mxu0 %v4073
  %4362 = vmatprep.mubr.bf16.mxu0 %v3464
  %4363 = vmatmul.mubr.bf16.gmra.mrb[0].mxu0 %v3463
  %v4364 = vpop.f32.mrb[0].mxu0
  %v4365 = vadd.f32 %v4325, %v4364
  %v4366 = vpop.f32.mrb[0].mxu0
  %v4367 = vpop.f32.mrb[0].mxu0
  %v4368 = vpop.f32.mrb[0].mxu0
  %4369 = vdwg.mxu0
  %4370 = vmatprep.subr.bf16.mxu0 0
  %4371 = vmatpush1.bf16.msra.mxu0 %v4074
  %4372 = vmatprep.subr.bf16.mxu0 0
  %4373 = vmatpush1.bf16.msra.mxu0 %v4075
  %4374 = vmatprep.subr.bf16.mxu0 0
  %4375 = vmatpush1.bf16.msra.mxu0 %v4076
  %4376 = vmatprep.subr.bf16.mxu0 0
  %4377 = vmatpush1.bf16.msra.mxu0 %v4077
  %4378 = vmatprep.subr.bf16.mxu0 0
  %4379 = vmatpush1.bf16.msra.mxu0 %v4078
  %4380 = vmatprep.subr.bf16.mxu0 0
  %4381 = vmatpush1.bf16.msra.mxu0 %v4079
  %4382 = vmatprep.subr.bf16.mxu0 0
  %4383 = vmatpush1.bf16.msra.mxu0 %v4080
  %4384 = vmatprep.subr.bf16.mxu0 0
  %4385 = vmatpush1.bf16.msra.mxu0 %v4081
  %4386 = vmatprep.subr.bf16.mxu0 0
  %4387 = vmatpush1.bf16.msra.mxu0 0
  %4388 = vmatprep.subr.bf16.mxu0 0
  %4389 = vmatpush1.bf16.msra.mxu0 0
  %4390 = vmatprep.subr.bf16.mxu0 0
  %4391 = vmatpush1.bf16.msra.mxu0 0
  %4392 = vmatprep.subr.bf16.mxu0 0
  %4393 = vmatpush1.bf16.msra.mxu0 0
  %4394 = vmatprep.subr.bf16.mxu0 0
  %4395 = vmatpush1.bf16.msra.mxu0 0
  %4396 = vmatprep.subr.bf16.mxu0 0
  %4397 = vmatpush1.bf16.msra.mxu0 0
  %4398 = vmatprep.subr.bf16.mxu0 0
  %4399 = vmatpush1.bf16.msra.mxu0 0
  %4400 = vmatprep.subr.bf16.mxu0 0
  %4401 = vmatpush1.bf16.msra.mxu0 0
  %4402 = vmatprep.mubr.bf16.mxu0 0
  %4403 = vmatmul.mubr.bf16.gmra.mrb[0].mxu0 %v3465
  %v4404 = vpop.f32.mrb[0].mxu0
  %v4405 = vadd.f32 %v4365, %v4404
  %v4406 = vpop.f32.mrb[0].mxu0
  %v4407 = vpop.f32.mrb[0].mxu0
  %v4408 = vpop.f32.mrb[0].mxu0
  %4409 = vdwg.mxu0
  %v4410 = vld [vmem:[%s10] sm:$0x1]
  %v4412 = vlaneseq
  %v4413 = vshrl.u32 %v4412, 7
  %v4414 = vsub.s32 0, %v4413
  %v4415 = vrot.slane %v4410, %v4414
  %v4417 = vmul.f32 %v4405, %v4415
  %v4418 = vld [vmem:[%s12] sm:$0xff]
  %v4419 = vld [vmem:[%s12 + $0x8] sm:$0x1]
  %v4420 = vld [vmem:[%s12 + $0x9] sm:$0xff]
  %v4421 = vld [vmem:[%s12 + $0x11] sm:$0x1]
  %v4422 = vld [vmem:[%s13] sm:$0x1]
  %v4424 = vlaneseq
  %v4425 = vshrl.u32 %v4424, 7
  %v4426 = vsub.s32 0, %v4425
  %v4427 = vrot.slane %v4422, %v4426
  %vm4429 = vcmask 72704
  %v4431 = vsel %vm4429, %v4417, 0
  %vm4433 = vcmask 1040384
  %v4435 = vsel %vm4433, %v4421, 0
  %4437 = vmatprep.subr.mxu0 0.0
  %4438 = vmatpush1.msra.mxu0 %v4420
  %4439 = vmatprep.subr.mxu0 0.0
  %4440 = vmatpush1.msra.mxu0 %v4435
  %4441 = vmatprep.subr.mxu0 0.0
  %4442 = vmatpush1.msra.mxu0 0.0
  %4443 = vmatprep.subr.mxu0 0.0
  %4444 = vmatpush1.msra.mxu0 0.0
  %4445 = vmatprep.subr.mxu0 0.0
  %4446 = vmatpush1.msra.mxu0 0.0
  %4447 = vmatprep.subr.mxu0 0.0
  %4448 = vmatpush1.msra.mxu0 0.0
  %4449 = vmatprep.subr.mxu0 0.0
  %4450 = vmatpush1.msra.mxu0 0.0
  %4451 = vmatprep.subr.mxu0 0.0
  %4452 = vmatpush1.msra.mxu0 0.0
  %4453 = vmatprep.subr.mxu0 0.0
  %4454 = vmatpush1.msra.mxu0 0.0
  %4455 = vmatprep.subr.mxu0 0.0
  %4456 = vmatpush1.msra.mxu0 0.0
  %4457 = vmatprep.subr.mxu0 0.0
  %4458 = vmatpush1.msra.mxu0 0.0
  %4459 = vmatprep.subr.mxu0 0.0
  %4460 = vmatpush1.msra.mxu0 0.0
  %4461 = vmatprep.subr.mxu0 0.0
  %4462 = vmatpush1.msra.mxu0 0.0
  %4463 = vmatprep.subr.mxu0 0.0
  %4464 = vmatpush1.msra.mxu0 0.0
  %4465 = vmatprep.subr.mxu0 0.0
  %4466 = vmatpush1.msra.mxu0 0.0
  %4467 = vmatprep.subr.mxu0 0.0
  %4468 = vmatpush1.msra.mxu0 0.0
  %4469 = vmatprep.subr.mxu0 0.0
  %4470 = vmatpush1.msra.mxu0 0.0
  %4471 = vmatprep.subr.mxu0 0.0
  %4472 = vmatpush1.msra.mxu0 0.0
  %4473 = vmatprep.subr.mxu0 0.0
  %4474 = vmatpush1.msra.mxu0 0.0
  %4475 = vmatprep.subr.mxu0 0.0
  %4476 = vmatpush1.msra.mxu0 0.0
  %4477 = vmatprep.subr.mxu0 0.0
  %4478 = vmatpush1.msra.mxu0 0.0
  %4479 = vmatprep.subr.mxu0 0.0
  %4480 = vmatpush1.msra.mxu0 0.0
  %4481 = vmatprep.subr.mxu0 0.0
  %4482 = vmatpush1.msra.mxu0 0.0
  %4483 = vmatprep.subr.mxu0 0.0
  %4484 = vmatpush1.msra.mxu0 0.0
  %4485 = vmatprep.subr.mxu0 0.0
  %4486 = vmatpush1.msra.mxu0 0.0
  %4487 = vmatprep.subr.mxu0 0.0
  %4488 = vmatpush1.msra.mxu0 0.0
  %4489 = vmatprep.subr.mxu0 0.0
  %4490 = vmatpush1.msra.mxu0 0.0
  %4491 = vmatprep.subr.mxu0 0.0
  %4492 = vmatpush1.msra.mxu0 0.0
  %4493 = vmatprep.subr.mxu0 0.0
  %4494 = vmatpush1.msra.mxu0 0.0
  %4495 = vmatprep.subr.mxu0 0.0
  %4496 = vmatpush1.msra.mxu0 0.0
  %4497 = vmatprep.subr.mxu0 0.0
  %4498 = vmatpush1.msra.mxu0 0.0
  %4499 = vmatprep.subr.mxu0 0.0
  %4500 = vmatpush1.msra.mxu0 0.0
  %4501 = vmatprep.mubr.f32.mxu0 0.0
  %4502 = vmatmul.mubr.f32.gmra.mrb[0].mxu0 %v4431
  %v4503 = vpop.f32.mrb[0].mxu0
  %v4504 = vadd.f32 %v4427, %v4503
  %v4505 = vpop.f32.mrb[0].mxu0
  %4506 = vdwg.mxu0
  %v4507 = vld [vmem:[%s9] ss:$8 sm:$0xf]
  %v4508 = vld [vmem:[%s9] ss:$8 sm:$0x30]
  %v4509 = vor.u32 %v4507, %v4508
  %v4511 = vlaneseq
  %v4512 = vshrl.u32 %v4511, 7
  %v4513 = vsub.s32 0, %v4512
  %v4514 = vrot.slane %v4509, %v4513
  %v4515 = vlaneseq
  %v4516 = vshrl.u32 %v4515, 7
  %v4517 = vsub.s32 1, %v4516
  %v4518 = vrot.slane %v4509, %v4517
  %v4519 = vlaneseq
  %v4520 = vshrl.u32 %v4519, 7
  %v4521 = vsub.s32 2, %v4520
  %v4522 = vrot.slane %v4509, %v4521
  %v4523 = vlaneseq
  %v4524 = vshrl.u32 %v4523, 7
  %v4525 = vsub.s32 3, %v4524
  %v4526 = vrot.slane %v4509, %v4525
  %v4527 = vlaneseq
  %v4528 = vshrl.u32 %v4527, 7
  %v4529 = vsub.s32 4, %v4528
  %v4530 = vrot.slane %v4509, %v4529
  %v4531 = vlaneseq
  %v4532 = vshrl.u32 %v4531, 7
  %v4533 = vsub.s32 5, %v4532
  %v4534 = vrot.slane %v4509, %v4533
  %v4541 = vmul.f32 %v3444, %v4514
  %v4542 = vmul.f32 %v3445, %v4518
  %v4543 = vmul.f32 %v3446, %v4522
  %v4544 = vmul.f32 %v3447, %v4526
  %v4545 = vmul.f32 %v3448, %v4530
  %v4546 = vmul.f32 %v3449, %v4534
  %v4547 = vmax.f32 %v4541, %v4545
  %vm4548 = vcmask 293888
  %v4549 = vsel %vm4548, %v4546, -inf
  %v4550 = vmax.f32 %v4542, %v4549
  %v4551 = vmax.f32 %v4547, %v4550
  %v4552 = vmax.f32 %v4543, %v4544
  %v4553 = vmax.f32 %v4551, %v4552
  %4554 = vmax.xlane.f32.xlu0 %v4553
  %v4555 = vpop.xlane.xlu0 %4554
  %v4556 = vlaneseq
  %v4557 = vshrl.u32 %v4556, 7
  %v4558 = vsub.s32 0, %v4557
  %v4559 = vrot.slane %v4418, %v4558
  %v4560 = vmul.f32 %v4555, %v4559
  %v4561 = vadd.f32 %v4504, %v4560
  %s4562 = scalar_lea.vmem %s9, 1
  %v4563 = vld [vmem:[%s4562] ss:$8 sm:$0xf]
  %v4564 = vld [vmem:[%s4562] ss:$8 sm:$0x30]
  %v4565 = vor.u32 %v4563, %v4564
  %v4567 = vlaneseq
  %v4568 = vshrl.u32 %v4567, 7
  %v4569 = vsub.s32 0, %v4568
  %v4570 = vrot.slane %v4565, %v4569
  %v4571 = vlaneseq
  %v4572 = vshrl.u32 %v4571, 7
  %v4573 = vsub.s32 1, %v4572
  %v4574 = vrot.slane %v4565, %v4573
  %v4575 = vlaneseq
  %v4576 = vshrl.u32 %v4575, 7
  %v4577 = vsub.s32 2, %v4576
  %v4578 = vrot.slane %v4565, %v4577
  %v4579 = vlaneseq
  %v4580 = vshrl.u32 %v4579, 7
  %v4581 = vsub.s32 3, %v4580
  %v4582 = vrot.slane %v4565, %v4581
  %v4583 = vlaneseq
  %v4584 = vshrl.u32 %v4583, 7
  %v4585 = vsub.s32 4, %v4584
  %v4586 = vrot.slane %v4565, %v4585
  %v4587 = vlaneseq
  %v4588 = vshrl.u32 %v4587, 7
  %v4589 = vsub.s32 5, %v4588
  %v4590 = vrot.slane %v4565, %v4589
  %v4597 = vmul.f32 %v3444, %v4570
  %v4598 = vmul.f32 %v3445, %v4574
  %v4599 = vmul.f32 %v3446, %v4578
  %v4600 = vmul.f32 %v3447, %v4582
  %v4601 = vmul.f32 %v3448, %v4586
  %v4602 = vmul.f32 %v3449, %v4590
  %v4603 = vmax.f32 %v4597, %v4601
  %v4604 = vsel %vm4548, %v4602, -inf
  %v4605 = vmax.f32 %v4598, %v4604
  %v4606 = vmax.f32 %v4603, %v4605
  %v4607 = vmax.f32 %v4599, %v4600
  %v4608 = vmax.f32 %v4606, %v4607
  %4609 = vmax.xlane.f32.xlu0 %v4608
  %v4610 = vpop.xlane.xlu0 %4609
  %v4611 = vlaneseq
  %v4612 = vshrl.u32 %v4611, 7
  %v4613 = vsub.s32 1, %v4612
  %v4614 = vrot.slane %v4418, %v4613
  %v4615 = vmul.f32 %v4610, %v4614
  %v4616 = vadd.f32 %v4561, %v4615
  %s4617 = scalar_lea.vmem %s9, 2
  %v4618 = vld [vmem:[%s4617] ss:$8 sm:$0xf]
  %v4619 = vld [vmem:[%s4617] ss:$8 sm:$0x30]
  %v4620 = vor.u32 %v4618, %v4619
  %v4622 = vlaneseq
  %v4623 = vshrl.u32 %v4622, 7
  %v4624 = vsub.s32 0, %v4623
  %v4625 = vrot.slane %v4620, %v4624
  %v4626 = vlaneseq
  %v4627 = vshrl.u32 %v4626, 7
  %v4628 = vsub.s32 1, %v4627
  %v4629 = vrot.slane %v4620, %v4628
  %v4630 = vlaneseq
  %v4631 = vshrl.u32 %v4630, 7
  %v4632 = vsub.s32 2, %v4631
  %v4633 = vrot.slane %v4620, %v4632
  %v4634 = vlaneseq
  %v4635 = vshrl.u32 %v4634, 7
  %v4636 = vsub.s32 3, %v4635
  %v4637 = vrot.slane %v4620, %v4636
  %v4638 = vlaneseq
  %v4639 = vshrl.u32 %v4638, 7
  %v4640 = vsub.s32 4, %v4639
  %v4641 = vrot.slane %v4620, %v4640
  %v4642 = vlaneseq
  %v4643 = vshrl.u32 %v4642, 7
  %v4644 = vsub.s32 5, %v4643
  %v4645 = vrot.slane %v4620, %v4644
  %v4652 = vmul.f32 %v3444, %v4625
  %v4653 = vmul.f32 %v3445, %v4629
  %v4654 = vmul.f32 %v3446, %v4633
  %v4655 = vmul.f32 %v3447, %v4637
  %v4656 = vmul.f32 %v3448, %v4641
  %v4657 = vmul.f32 %v3449, %v4645
  %v4658 = vmax.f32 %v4652, %v4656
  %v4659 = vsel %vm4548, %v4657, -inf
  %v4660 = vmax.f32 %v4653, %v4659
  %v4661 = vmax.f32 %v4658, %v4660
  %v4662 = vmax.f32 %v4654, %v4655
  %v4663 = vmax.f32 %v4661, %v4662
  %4664 = vmax.xlane.f32.xlu0 %v4663
  %v4665 = vpop.xlane.xlu0 %4664
  %v4666 = vlaneseq
  %v4667 = vshrl.u32 %v4666, 7
  %v4668 = vsub.s32 2, %v4667
  %v4669 = vrot.slane %v4418, %v4668
  %v4670 = vmul.f32 %v4665, %v4669
  %v4671 = vadd.f32 %v4616, %v4670
  %s4672 = scalar_lea.vmem %s9, 3
  %v4673 = vld [vmem:[%s4672] ss:$8 sm:$0xf]
  %v4674 = vld [vmem:[%s4672] ss:$8 sm:$0x30]
  %v4675 = vor.u32 %v4673, %v4674
  %v4677 = vlaneseq
  %v4678 = vshrl.u32 %v4677, 7
  %v4679 = vsub.s32 0, %v4678
  %v4680 = vrot.slane %v4675, %v4679
  %v4681 = vlaneseq
  %v4682 = vshrl.u32 %v4681, 7
  %v4683 = vsub.s32 1, %v4682
  %v4684 = vrot.slane %v4675, %v4683
  %v4685 = vlaneseq
  %v4686 = vshrl.u32 %v4685, 7
  %v4687 = vsub.s32 2, %v4686
  %v4688 = vrot.slane %v4675, %v4687
  %v4689 = vlaneseq
  %v4690 = vshrl.u32 %v4689, 7
  %v4691 = vsub.s32 3, %v4690
  %v4692 = vrot.slane %v4675, %v4691
  %v4693 = vlaneseq
  %v4694 = vshrl.u32 %v4693, 7
  %v4695 = vsub.s32 4, %v4694
  %v4696 = vrot.slane %v4675, %v4695
  %v4697 = vlaneseq
  %v4698 = vshrl.u32 %v4697, 7
  %v4699 = vsub.s32 5, %v4698
  %v4700 = vrot.slane %v4675, %v4699
  %v4707 = vmul.f32 %v3444, %v4680
  %v4708 = vmul.f32 %v3445, %v4684
  %v4709 = vmul.f32 %v3446, %v4688
  %v4710 = vmul.f32 %v3447, %v4692
  %v4711 = vmul.f32 %v3448, %v4696
  %v4712 = vmul.f32 %v3449, %v4700
  %v4713 = vmax.f32 %v4707, %v4711
  %v4714 = vsel %vm4548, %v4712, -inf
  %v4715 = vmax.f32 %v4708, %v4714
  %v4716 = vmax.f32 %v4713, %v4715
  %v4717 = vmax.f32 %v4709, %v4710
  %v4718 = vmax.f32 %v4716, %v4717
  %4719 = vmax.xlane.f32.xlu0 %v4718
  %v4720 = vpop.xlane.xlu0 %4719
  %v4721 = vlaneseq
  %v4722 = vshrl.u32 %v4721, 7
  %v4723 = vsub.s32 3, %v4722
  %v4724 = vrot.slane %v4418, %v4723
  %v4725 = vmul.f32 %v4720, %v4724
  %v4726 = vadd.f32 %v4671, %v4725
  %s4727 = scalar_lea.vmem %s9, 4
  %v4728 = vld [vmem:[%s4727] ss:$8 sm:$0xf]
  %v4729 = vld [vmem:[%s4727] ss:$8 sm:$0x30]
  %v4730 = vor.u32 %v4728, %v4729
  %v4732 = vlaneseq
  %v4733 = vshrl.u32 %v4732, 7
  %v4734 = vsub.s32 0, %v4733
  %v4735 = vrot.slane %v4730, %v4734
  %v4736 = vlaneseq
  %v4737 = vshrl.u32 %v4736, 7
  %v4738 = vsub.s32 1, %v4737
  %v4739 = vrot.slane %v4730, %v4738
  %v4740 = vlaneseq
  %v4741 = vshrl.u32 %v4740, 7
  %v4742 = vsub.s32 2, %v4741
  %v4743 = vrot.slane %v4730, %v4742
  %v4744 = vlaneseq
  %v4745 = vshrl.u32 %v4744, 7
  %v4746 = vsub.s32 3, %v4745
  %v4747 = vrot.slane %v4730, %v4746
  %v4748 = vlaneseq
  %v4749 = vshrl.u32 %v4748, 7
  %v4750 = vsub.s32 4, %v4749
  %v4751 = vrot.slane %v4730, %v4750
  %v4752 = vlaneseq
  %v4753 = vshrl.u32 %v4752, 7
  %v4754 = vsub.s32 5, %v4753
  %v4755 = vrot.slane %v4730, %v4754
  %v4762 = vmul.f32 %v3444, %v4735
  %v4763 = vmul.f32 %v3445, %v4739
  %v4764 = vmul.f32 %v3446, %v4743
  %v4765 = vmul.f32 %v3447, %v4747
  %v4766 = vmul.f32 %v3448, %v4751
  %v4767 = vmul.f32 %v3449, %v4755
  %v4768 = vmax.f32 %v4762, %v4766
  %v4769 = vsel %vm4548, %v4767, -inf
  %v4770 = vmax.f32 %v4763, %v4769
  %v4771 = vmax.f32 %v4768, %v4770
  %v4772 = vmax.f32 %v4764, %v4765
  %v4773 = vmax.f32 %v4771, %v4772
  %4774 = vmax.xlane.f32.xlu0 %v4773
  %v4775 = vpop.xlane.xlu0 %4774
  %v4776 = vlaneseq
  %v4777 = vshrl.u32 %v4776, 7
  %v4778 = vsub.s32 4, %v4777
  %v4779 = vrot.slane %v4418, %v4778
  %v4780 = vmul.f32 %v4775, %v4779
  %v4781 = vadd.f32 %v4726, %v4780
  %s4782 = scalar_lea.vmem %s9, 5
  %v4783 = vld [vmem:[%s4782] ss:$8 sm:$0xf]
  %v4784 = vld [vmem:[%s4782] ss:$8 sm:$0x30]
  %v4785 = vor.u32 %v4783, %v4784
  %v4787 = vlaneseq
  %v4788 = vshrl.u32 %v4787, 7
  %v4789 = vsub.s32 0, %v4788
  %v4790 = vrot.slane %v4785, %v4789
  %v4791 = vlaneseq
  %v4792 = vshrl.u32 %v4791, 7
  %v4793 = vsub.s32 1, %v4792
  %v4794 = vrot.slane %v4785, %v4793
  %v4795 = vlaneseq
  %v4796 = vshrl.u32 %v4795, 7
  %v4797 = vsub.s32 2, %v4796
  %v4798 = vrot.slane %v4785, %v4797
  %v4799 = vlaneseq
  %v4800 = vshrl.u32 %v4799, 7
  %v4801 = vsub.s32 3, %v4800
  %v4802 = vrot.slane %v4785, %v4801
  %v4803 = vlaneseq
  %v4804 = vshrl.u32 %v4803, 7
  %v4805 = vsub.s32 4, %v4804
  %v4806 = vrot.slane %v4785, %v4805
  %v4807 = vlaneseq
  %v4808 = vshrl.u32 %v4807, 7
  %v4809 = vsub.s32 5, %v4808
  %v4810 = vrot.slane %v4785, %v4809
  %v4817 = vmul.f32 %v3444, %v4790
  %v4818 = vmul.f32 %v3445, %v4794
  %v4819 = vmul.f32 %v3446, %v4798
  %v4820 = vmul.f32 %v3447, %v4802
  %v4821 = vmul.f32 %v3448, %v4806
  %v4822 = vmul.f32 %v3449, %v4810
  %v4823 = vmax.f32 %v4817, %v4821
  %v4824 = vsel %vm4548, %v4822, -inf
  %v4825 = vmax.f32 %v4818, %v4824
  %v4826 = vmax.f32 %v4823, %v4825
  %v4827 = vmax.f32 %v4819, %v4820
  %v4828 = vmax.f32 %v4826, %v4827
  %4829 = vmax.xlane.f32.xlu0 %v4828
  %v4830 = vpop.xlane.xlu0 %4829
  %v4831 = vlaneseq
  %v4832 = vshrl.u32 %v4831, 7
  %v4833 = vsub.s32 5, %v4832
  %v4834 = vrot.slane %v4418, %v4833
  %v4835 = vmul.f32 %v4830, %v4834
  %v4836 = vadd.f32 %v4781, %v4835
  %s4837 = scalar_lea.vmem %s9, 6
  %v4838 = vld [vmem:[%s4837] ss:$8 sm:$0xf]
  %v4839 = vld [vmem:[%s4837] ss:$8 sm:$0x30]
  %v4840 = vor.u32 %v4838, %v4839
  %v4842 = vlaneseq
  %v4843 = vshrl.u32 %v4842, 7
  %v4844 = vsub.s32 0, %v4843
  %v4845 = vrot.slane %v4840, %v4844
  %v4846 = vlaneseq
  %v4847 = vshrl.u32 %v4846, 7
  %v4848 = vsub.s32 1, %v4847
  %v4849 = vrot.slane %v4840, %v4848
  %v4850 = vlaneseq
  %v4851 = vshrl.u32 %v4850, 7
  %v4852 = vsub.s32 2, %v4851
  %v4853 = vrot.slane %v4840, %v4852
  %v4854 = vlaneseq
  %v4855 = vshrl.u32 %v4854, 7
  %v4856 = vsub.s32 3, %v4855
  %v4857 = vrot.slane %v4840, %v4856
  %v4858 = vlaneseq
  %v4859 = vshrl.u32 %v4858, 7
  %v4860 = vsub.s32 4, %v4859
  %v4861 = vrot.slane %v4840, %v4860
  %v4862 = vlaneseq
  %v4863 = vshrl.u32 %v4862, 7
  %v4864 = vsub.s32 5, %v4863
  %v4865 = vrot.slane %v4840, %v4864
  %v4872 = vmul.f32 %v3444, %v4845
  %v4873 = vmul.f32 %v3445, %v4849
  %v4874 = vmul.f32 %v3446, %v4853
  %v4875 = vmul.f32 %v3447, %v4857
  %v4876 = vmul.f32 %v3448, %v4861
  %v4877 = vmul.f32 %v3449, %v4865
  %v4878 = vmax.f32 %v4872, %v4876
  %v4879 = vsel %vm4548, %v4877, -inf
  %v4880 = vmax.f32 %v4873, %v4879
  %v4881 = vmax.f32 %v4878, %v4880
  %v4882 = vmax.f32 %v4874, %v4875
  %v4883 = vmax.f32 %v4881, %v4882
  %4884 = vmax.xlane.f32.xlu0 %v4883
  %v4885 = vpop.xlane.xlu0 %4884
  %v4886 = vlaneseq
  %v4887 = vshrl.u32 %v4886, 7
  %v4888 = vsub.s32 6, %v4887
  %v4889 = vrot.slane %v4418, %v4888
  %v4890 = vmul.f32 %v4885, %v4889
  %v4891 = vadd.f32 %v4836, %v4890
  %s4892 = scalar_lea.vmem %s9, 7
  %v4893 = vld [vmem:[%s4892] ss:$8 sm:$0xf]
  %v4894 = vld [vmem:[%s4892] ss:$8 sm:$0x30]
  %v4895 = vor.u32 %v4893, %v4894
  %v4897 = vlaneseq
  %v4898 = vshrl.u32 %v4897, 7
  %v4899 = vsub.s32 0, %v4898
  %v4900 = vrot.slane %v4895, %v4899
  %v4901 = vlaneseq
  %v4902 = vshrl.u32 %v4901, 7
  %v4903 = vsub.s32 1, %v4902
  %v4904 = vrot.slane %v4895, %v4903
  %v4905 = vlaneseq
  %v4906 = vshrl.u32 %v4905, 7
  %v4907 = vsub.s32 2, %v4906
  %v4908 = vrot.slane %v4895, %v4907
  %v4909 = vlaneseq
  %v4910 = vshrl.u32 %v4909, 7
  %v4911 = vsub.s32 3, %v4910
  %v4912 = vrot.slane %v4895, %v4911
  %v4913 = vlaneseq
  %v4914 = vshrl.u32 %v4913, 7
  %v4915 = vsub.s32 4, %v4914
  %v4916 = vrot.slane %v4895, %v4915
  %v4917 = vlaneseq
  %v4918 = vshrl.u32 %v4917, 7
  %v4919 = vsub.s32 5, %v4918
  %v4920 = vrot.slane %v4895, %v4919
  %v4927 = vmul.f32 %v3444, %v4900
  %v4928 = vmul.f32 %v3445, %v4904
  %v4929 = vmul.f32 %v3446, %v4908
  %v4930 = vmul.f32 %v3447, %v4912
  %v4931 = vmul.f32 %v3448, %v4916
  %v4932 = vmul.f32 %v3449, %v4920
  %v4933 = vmax.f32 %v4927, %v4931
  %v4934 = vsel %vm4548, %v4932, -inf
  %v4935 = vmax.f32 %v4928, %v4934
  %v4936 = vmax.f32 %v4933, %v4935
  %v4937 = vmax.f32 %v4929, %v4930
  %v4938 = vmax.f32 %v4936, %v4937
  %4939 = vmax.xlane.f32.xlu0 %v4938
  %v4940 = vpop.xlane.xlu0 %4939
  %v4941 = vlaneseq
  %v4942 = vshrl.u32 %v4941, 7
  %v4943 = vsub.s32 7, %v4942
  %v4944 = vrot.slane %v4418, %v4943
  %v4945 = vmul.f32 %v4940, %v4944
  %v4946 = vadd.f32 %v4891, %v4945
  %s4947 = scalar_lea.vmem %s9, 48
  %v4948 = vld [vmem:[%s4947] ss:$8 sm:$0xf]
  %v4949 = vld [vmem:[%s4947] ss:$8 sm:$0x30]
  %v4950 = vor.u32 %v4948, %v4949
  %v4952 = vlaneseq
  %v4953 = vshrl.u32 %v4952, 7
  %v4954 = vsub.s32 0, %v4953
  %v4955 = vrot.slane %v4950, %v4954
  %v4956 = vlaneseq
  %v4957 = vshrl.u32 %v4956, 7
  %v4958 = vsub.s32 1, %v4957
  %v4959 = vrot.slane %v4950, %v4958
  %v4960 = vlaneseq
  %v4961 = vshrl.u32 %v4960, 7
  %v4962 = vsub.s32 2, %v4961
  %v4963 = vrot.slane %v4950, %v4962
  %v4964 = vlaneseq
  %v4965 = vshrl.u32 %v4964, 7
  %v4966 = vsub.s32 3, %v4965
  %v4967 = vrot.slane %v4950, %v4966
  %v4968 = vlaneseq
  %v4969 = vshrl.u32 %v4968, 7
  %v4970 = vsub.s32 4, %v4969
  %v4971 = vrot.slane %v4950, %v4970
  %v4972 = vlaneseq
  %v4973 = vshrl.u32 %v4972, 7
  %v4974 = vsub.s32 5, %v4973
  %v4975 = vrot.slane %v4950, %v4974
  %v4982 = vmul.f32 %v3444, %v4955
  %v4983 = vmul.f32 %v3445, %v4959
  %v4984 = vmul.f32 %v3446, %v4963
  %v4985 = vmul.f32 %v3447, %v4967
  %v4986 = vmul.f32 %v3448, %v4971
  %v4987 = vmul.f32 %v3449, %v4975
  %v4988 = vmax.f32 %v4982, %v4986
  %v4989 = vsel %vm4548, %v4987, -inf
  %v4990 = vmax.f32 %v4983, %v4989
  %v4991 = vmax.f32 %v4988, %v4990
  %v4992 = vmax.f32 %v4984, %v4985
  %v4993 = vmax.f32 %v4991, %v4992
  %4994 = vmax.xlane.f32.xlu0 %v4993
  %v4995 = vpop.xlane.xlu0 %4994
  %v4996 = vlaneseq
  %v4997 = vshrl.u32 %v4996, 7
  %v4998 = vsub.s32 0, %v4997
  %v4999 = vrot.slane %v4419, %v4998
  %v5000 = vmul.f32 %v4995, %v4999
  %v5001 = vadd.f32 %v4946, %v5000
  %v5002 = vmax.f32 %v5001, 0.0
  %v5003 = vld [vmem:[%s14] sm:$0x1]
  %v5005 = vlaneseq
  %v5006 = vshrl.u32 %v5005, 7
  %v5007 = vsub.s32 0, %v5006
  %v5008 = vrot.slane %v5003, %v5007
  %v5010 = vmul.f32 %v5002, %v5008
  %vm5011 = vcmask 31744
  %v5012 = vsel %vm5011, %v5010, 0.0
  %5013 = vadd.xlane.f32.xlu0 %v5012
  %v5014 = vpop.xlane.xlu0 %5013
  %v5015 = vld [vmem:[#allocation3] sm:$0x1]
  %v5017 = vlaneseq
  %v5018 = vshrl.u32 %v5017, 7
  %v5019 = vsub.s32 0, %v5018
  %v5020 = vrot.slane %v5015, %v5019
  %v5022 = vadd.f32 %v5014, %v5020
  %5023 = vrot.lane.b32.xlu0 %v4417, 119
  %v5024 = vpop.permute.xlu0 %5023
  %v5025 = vsel %vm4429, %v5024, 0
  %5027 = vmatprep.subr.mxu0 0.0
  %5028 = vmatpush1.msra.mxu0 %v4420
  %5029 = vmatprep.subr.mxu0 0.0
  %5030 = vmatpush1.msra.mxu0 %v4435
  %5031 = vmatprep.subr.mxu0 0.0
  %5032 = vmatpush1.msra.mxu0 0.0
  %5033 = vmatprep.subr.mxu0 0.0
  %5034 = vmatpush1.msra.mxu0 0.0
  %5035 = vmatprep.subr.mxu0 0.0
  %5036 = vmatpush1.msra.mxu0 0.0
  %5037 = vmatprep.subr.mxu0 0.0
  %5038 = vmatpush1.msra.mxu0 0.0
  %5039 = vmatprep.subr.mxu0 0.0
  %5040 = vmatpush1.msra.mxu0 0.0
  %5041 = vmatprep.subr.mxu0 0.0
  %5042 = vmatpush1.msra.mxu0 0.0
  %5043 = vmatprep.subr.mxu0 0.0
  %5044 = vmatpush1.msra.mxu0 0.0
  %5045 = vmatprep.subr.mxu0 0.0
  %5046 = vmatpush1.msra.mxu0 0.0
  %5047 = vmatprep.subr.mxu0 0.0
  %5048 = vmatpush1.msra.mxu0 0.0
  %5049 = vmatprep.subr.mxu0 0.0
  %5050 = vmatpush1.msra.mxu0 0.0
  %5051 = vmatprep.subr.mxu0 0.0
  %5052 = vmatpush1.msra.mxu0 0.0
  %5053 = vmatprep.subr.mxu0 0.0
  %5054 = vmatpush1.msra.mxu0 0.0
  %5055 = vmatprep.subr.mxu0 0.0
  %5056 = vmatpush1.msra.mxu0 0.0
  %5057 = vmatprep.subr.mxu0 0.0
  %5058 = vmatpush1.msra.mxu0 0.0
  %5059 = vmatprep.subr.mxu0 0.0
  %5060 = vmatpush1.msra.mxu0 0.0
  %5061 = vmatprep.subr.mxu0 0.0
  %5062 = vmatpush1.msra.mxu0 0.0
  %5063 = vmatprep.subr.mxu0 0.0
  %5064 = vmatpush1.msra.mxu0 0.0
  %5065 = vmatprep.subr.mxu0 0.0
  %5066 = vmatpush1.msra.mxu0 0.0
  %5067 = vmatprep.subr.mxu0 0.0
  %5068 = vmatpush1.msra.mxu0 0.0
  %5069 = vmatprep.subr.mxu0 0.0
  %5070 = vmatpush1.msra.mxu0 0.0
  %5071 = vmatprep.subr.mxu0 0.0
  %5072 = vmatpush1.msra.mxu0 0.0
  %5073 = vmatprep.subr.mxu0 0.0
  %5074 = vmatpush1.msra.mxu0 0.0
  %5075 = vmatprep.subr.mxu0 0.0
  %5076 = vmatpush1.msra.mxu0 0.0
  %5077 = vmatprep.subr.mxu0 0.0
  %5078 = vmatpush1.msra.mxu0 0.0
  %5079 = vmatprep.subr.mxu0 0.0
  %5080 = vmatpush1.msra.mxu0 0.0
  %5081 = vmatprep.subr.mxu0 0.0
  %5082 = vmatpush1.msra.mxu0 0.0
  %5083 = vmatprep.subr.mxu0 0.0
  %5084 = vmatpush1.msra.mxu0 0.0
  %5085 = vmatprep.subr.mxu0 0.0
  %5086 = vmatpush1.msra.mxu0 0.0
  %5087 = vmatprep.subr.mxu0 0.0
  %5088 = vmatpush1.msra.mxu0 0.0
  %5089 = vmatprep.subr.mxu0 0.0
  %5090 = vmatpush1.msra.mxu0 0.0
  %5091 = vmatprep.mubr.f32.mxu0 0.0
  %5092 = vmatmul.mubr.f32.gmra.mrb[0].mxu0 %v5025
  %v5093 = vpop.f32.mrb[0].mxu0
  %v5094 = vadd.f32 %v4427, %v5093
  %v5095 = vpop.f32.mrb[0].mxu0
  %5096 = vdwg.mxu0
  %5097 = vrot.lane.b32.xlu0 %v4514, 36
  %v5098 = vpop.permute.xlu0 %5097
  %5099 = vrot.lane.b32.xlu0 %v4518, 36
  %v5100 = vpop.permute.xlu0 %5099
  %5101 = vrot.lane.b32.xlu0 %v4522, 36
  %v5102 = vpop.permute.xlu0 %5101
  %5103 = vrot.lane.b32.xlu0 %v4526, 36
  %v5104 = vpop.permute.xlu0 %5103
  %5105 = vrot.lane.b32.xlu0 %v4530, 36
  %v5106 = vpop.permute.xlu0 %5105
  %5107 = vrot.lane.b32.xlu0 %v4534, 36
  %v5108 = vpop.permute.xlu0 %5107
  %v5109 = vsel %vm4548, %v5098, %v5100
  %v5110 = vsel %vm4548, %v5100, %v5102
  %v5111 = vsel %vm4548, %v5102, %v5104
  %v5112 = vsel %vm4548, %v5104, %v5106
  %v5113 = vsel %vm4548, %v5106, %v5108
  %v5120 = vmul.f32 %v3449, %v5098
  %v5121 = vmul.f32 %v3450, %v5109
  %v5122 = vmul.f32 %v3451, %v5110
  %v5123 = vmul.f32 %v3452, %v5111
  %v5124 = vmul.f32 %v3453, %v5112
  %v5125 = vmul.f32 %v3454, %v5113
  %vm5126 = vcmask 1047840
  %v5127 = vsel %vm5126, %v5120, -inf
  %v5128 = vmax.f32 %v5127, %v5124
  %vm5129 = vcmask 588800
  %v5130 = vsel %vm5129, %v5125, -inf
  %v5131 = vmax.f32 %v5121, %v5130
  %v5132 = vmax.f32 %v5128, %v5131
  %v5133 = vmax.f32 %v5122, %v5123
  %v5134 = vmax.f32 %v5132, %v5133
  %5135 = vmax.xlane.f32.xlu0 %v5134
  %v5136 = vpop.xlane.xlu0 %5135
  %v5137 = vmul.f32 %v5136, %v4559
  %v5138 = vadd.f32 %v5094, %v5137
  %5139 = vrot.lane.b32.xlu0 %v4570, 36
  %v5140 = vpop.permute.xlu0 %5139
  %5141 = vrot.lane.b32.xlu0 %v4574, 36
  %v5142 = vpop.permute.xlu0 %5141
  %5143 = vrot.lane.b32.xlu0 %v4578, 36
  %v5144 = vpop.permute.xlu0 %5143
  %5145 = vrot.lane.b32.xlu0 %v4582, 36
  %v5146 = vpop.permute.xlu0 %5145
  %5147 = vrot.lane.b32.xlu0 %v4586, 36
  %v5148 = vpop.permute.xlu0 %5147
  %5149 = vrot.lane.b32.xlu0 %v4590, 36
  %v5150 = vpop.permute.xlu0 %5149
  %v5151 = vsel %vm4548, %v5140, %v5142
  %v5152 = vsel %vm4548, %v5142, %v5144
  %v5153 = vsel %vm4548, %v5144, %v5146
  %v5154 = vsel %vm4548, %v5146, %v5148
  %v5155 = vsel %vm4548, %v5148, %v5150
  %v5162 = vmul.f32 %v3449, %v5140
  %v5163 = vmul.f32 %v3450, %v5151
  %v5164 = vmul.f32 %v3451, %v5152
  %v5165 = vmul.f32 %v3452, %v5153
  %v5166 = vmul.f32 %v3453, %v5154
  %v5167 = vmul.f32 %v3454, %v5155
  %v5168 = vsel %vm5126, %v5162, -inf
  %v5169 = vmax.f32 %v5168, %v5166
  %v5170 = vsel %vm5129, %v5167, -inf
  %v5171 = vmax.f32 %v5163, %v5170
  %v5172 = vmax.f32 %v5169, %v5171
  %v5173 = vmax.f32 %v5164, %v5165
  %v5174 = vmax.f32 %v5172, %v5173
  %5175 = vmax.xlane.f32.xlu0 %v5174
  %v5176 = vpop.xlane.xlu0 %5175
  %v5177 = vmul.f32 %v5176, %v4614
  %v5178 = vadd.f32 %v5138, %v5177
  %5179 = vrot.lane.b32.xlu0 %v4625, 36
  %v5180 = vpop.permute.xlu0 %5179
  %5181 = vrot.lane.b32.xlu0 %v4629, 36
  %v5182 = vpop.permute.xlu0 %5181
  %5183 = vrot.lane.b32.xlu0 %v4633, 36
  %v5184 = vpop.permute.xlu0 %5183
  %5185 = vrot.lane.b32.xlu0 %v4637, 36
  %v5186 = vpop.permute.xlu0 %5185
  %5187 = vrot.lane.b32.xlu0 %v4641, 36
  %v5188 = vpop.permute.xlu0 %5187
  %5189 = vrot.lane.b32.xlu0 %v4645, 36
  %v5190 = vpop.permute.xlu0 %5189
  %v5191 = vsel %vm4548, %v5180, %v5182
  %v5192 = vsel %vm4548, %v5182, %v5184
  %v5193 = vsel %vm4548, %v5184, %v5186
  %v5194 = vsel %vm4548, %v5186, %v5188
  %v5195 = vsel %vm4548, %v5188, %v5190
  %v5202 = vmul.f32 %v3449, %v5180
  %v5203 = vmul.f32 %v3450, %v5191
  %v5204 = vmul.f32 %v3451, %v5192
  %v5205 = vmul.f32 %v3452, %v5193
  %v5206 = vmul.f32 %v3453, %v5194
  %v5207 = vmul.f32 %v3454, %v5195
  %v5208 = vsel %vm5126, %v5202, -inf
  %v5209 = vmax.f32 %v5208, %v5206
  %v5210 = vsel %vm5129, %v5207, -inf
  %v5211 = vmax.f32 %v5203, %v5210
  %v5212 = vmax.f32 %v5209, %v5211
  %v5213 = vmax.f32 %v5204, %v5205
  %v5214 = vmax.f32 %v5212, %v5213
  %5215 = vmax.xlane.f32.xlu0 %v5214
  %v5216 = vpop.xlane.xlu0 %5215
  %v5217 = vmul.f32 %v5216, %v4669
  %v5218 = vadd.f32 %v5178, %v5217
  %5219 = vrot.lane.b32.xlu0 %v4680, 36
  %v5220 = vpop.permute.xlu0 %5219
  %5221 = vrot.lane.b32.xlu0 %v4684, 36
  %v5222 = vpop.permute.xlu0 %5221
  %5223 = vrot.lane.b32.xlu0 %v4688, 36
  %v5224 = vpop.permute.xlu0 %5223
  %5225 = vrot.lane.b32.xlu0 %v4692, 36
  %v5226 = vpop.permute.xlu0 %5225
  %5227 = vrot.lane.b32.xlu0 %v4696, 36
  %v5228 = vpop.permute.xlu0 %5227
  %5229 = vrot.lane.b32.xlu0 %v4700, 36
  %v5230 = vpop.permute.xlu0 %5229
  %v5231 = vsel %vm4548, %v5220, %v5222
  %v5232 = vsel %vm4548, %v5222, %v5224
  %v5233 = vsel %vm4548, %v5224, %v5226
  %v5234 = vsel %vm4548, %v5226, %v5228
  %v5235 = vsel %vm4548, %v5228, %v5230
  %v5242 = vmul.f32 %v3449, %v5220
  %v5243 = vmul.f32 %v3450, %v5231
  %v5244 = vmul.f32 %v3451, %v5232
  %v5245 = vmul.f32 %v3452, %v5233
  %v5246 = vmul.f32 %v3453, %v5234
  %v5247 = vmul.f32 %v3454, %v5235
  %v5248 = vsel %vm5126, %v5242, -inf
  %v5249 = vmax.f32 %v5248, %v5246
  %v5250 = vsel %vm5129, %v5247, -inf
  %v5251 = vmax.f32 %v5243, %v5250
  %v5252 = vmax.f32 %v5249, %v5251
  %v5253 = vmax.f32 %v5244, %v5245
  %v5254 = vmax.f32 %v5252, %v5253
  %5255 = vmax.xlane.f32.xlu0 %v5254
  %v5256 = vpop.xlane.xlu0 %5255
  %v5257 = vmul.f32 %v5256, %v4724
  %v5258 = vadd.f32 %v5218, %v5257
  %5259 = vrot.lane.b32.xlu0 %v4735, 36
  %v5260 = vpop.permute.xlu0 %5259
  %5261 = vrot.lane.b32.xlu0 %v4739, 36
  %v5262 = vpop.permute.xlu0 %5261
  %5263 = vrot.lane.b32.xlu0 %v4743, 36
  %v5264 = vpop.permute.xlu0 %5263
  %5265 = vrot.lane.b32.xlu0 %v4747, 36
  %v5266 = vpop.permute.xlu0 %5265
  %5267 = vrot.lane.b32.xlu0 %v4751, 36
  %v5268 = vpop.permute.xlu0 %5267
  %5269 = vrot.lane.b32.xlu0 %v4755, 36
  %v5270 = vpop.permute.xlu0 %5269
  %v5271 = vsel %vm4548, %v5260, %v5262
  %v5272 = vsel %vm4548, %v5262, %v5264
  %v5273 = vsel %vm4548, %v5264, %v5266
  %v5274 = vsel %vm4548, %v5266, %v5268
  %v5275 = vsel %vm4548, %v5268, %v5270
  %v5282 = vmul.f32 %v3449, %v5260
  %v5283 = vmul.f32 %v3450, %v5271
  %v5284 = vmul.f32 %v3451, %v5272
  %v5285 = vmul.f32 %v3452, %v5273
  %v5286 = vmul.f32 %v3453, %v5274
  %v5287 = vmul.f32 %v3454, %v5275
  %v5288 = vsel %vm5126, %v5282, -inf
  %v5289 = vmax.f32 %v5288, %v5286
  %v5290 = vsel %vm5129, %v5287, -inf
  %v5291 = vmax.f32 %v5283, %v5290
  %v5292 = vmax.f32 %v5289, %v5291
  %v5293 = vmax.f32 %v5284, %v5285
  %v5294 = vmax.f32 %v5292, %v5293
  %5295 = vmax.xlane.f32.xlu0 %v5294
  %v5296 = vpop.xlane.xlu0 %5295
  %v5297 = vmul.f32 %v5296, %v4779
  %v5298 = vadd.f32 %v5258, %v5297
  %5299 = vrot.lane.b32.xlu0 %v4790, 36
  %v5300 = vpop.permute.xlu0 %5299
  %5301 = vrot.lane.b32.xlu0 %v4794, 36
  %v5302 = vpop.permute.xlu0 %5301
  %5303 = vrot.lane.b32.xlu0 %v4798, 36
  %v5304 = vpop.permute.xlu0 %5303
  %5305 = vrot.lane.b32.xlu0 %v4802, 36
  %v5306 = vpop.permute.xlu0 %5305
  %5307 = vrot.lane.b32.xlu0 %v4806, 36
  %v5308 = vpop.permute.xlu0 %5307
  %5309 = vrot.lane.b32.xlu0 %v4810, 36
  %v5310 = vpop.permute.xlu0 %5309
  %v5311 = vsel %vm4548, %v5300, %v5302
  %v5312 = vsel %vm4548, %v5302, %v5304
  %v5313 = vsel %vm4548, %v5304, %v5306
  %v5314 = vsel %vm4548, %v5306, %v5308
  %v5315 = vsel %vm4548, %v5308, %v5310
  %v5322 = vmul.f32 %v3449, %v5300
  %v5323 = vmul.f32 %v3450, %v5311
  %v5324 = vmul.f32 %v3451, %v5312
  %v5325 = vmul.f32 %v3452, %v5313
  %v5326 = vmul.f32 %v3453, %v5314
  %v5327 = vmul.f32 %v3454, %v5315
  %v5328 = vsel %vm5126, %v5322, -inf
  %v5329 = vmax.f32 %v5328, %v5326
  %v5330 = vsel %vm5129, %v5327, -inf
  %v5331 = vmax.f32 %v5323, %v5330
  %v5332 = vmax.f32 %v5329, %v5331
  %v5333 = vmax.f32 %v5324, %v5325
  %v5334 = vmax.f32 %v5332, %v5333
  %5335 = vmax.xlane.f32.xlu0 %v5334
  %v5336 = vpop.xlane.xlu0 %5335
  %v5337 = vmul.f32 %v5336, %v4834
  %v5338 = vadd.f32 %v5298, %v5337
  %5339 = vrot.lane.b32.xlu0 %v4845, 36
  %v5340 = vpop.permute.xlu0 %5339
  %5341 = vrot.lane.b32.xlu0 %v4849, 36
  %v5342 = vpop.permute.xlu0 %5341
  %5343 = vrot.lane.b32.xlu0 %v4853, 36
  %v5344 = vpop.permute.xlu0 %5343
  %5345 = vrot.lane.b32.xlu0 %v4857, 36
  %v5346 = vpop.permute.xlu0 %5345
  %5347 = vrot.lane.b32.xlu0 %v4861, 36
  %v5348 = vpop.permute.xlu0 %5347
  %5349 = vrot.lane.b32.xlu0 %v4865, 36
  %v5350 = vpop.permute.xlu0 %5349
  %v5351 = vsel %vm4548, %v5340, %v5342
  %v5352 = vsel %vm4548, %v5342, %v5344
  %v5353 = vsel %vm4548, %v5344, %v5346
  %v5354 = vsel %vm4548, %v5346, %v5348
  %v5355 = vsel %vm4548, %v5348, %v5350
  %v5362 = vmul.f32 %v3449, %v5340
  %v5363 = vmul.f32 %v3450, %v5351
  %v5364 = vmul.f32 %v3451, %v5352
  %v5365 = vmul.f32 %v3452, %v5353
  %v5366 = vmul.f32 %v3453, %v5354
  %v5367 = vmul.f32 %v3454, %v5355
  %v5368 = vsel %vm5126, %v5362, -inf
  %v5369 = vmax.f32 %v5368, %v5366
  %v5370 = vsel %vm5129, %v5367, -inf
  %v5371 = vmax.f32 %v5363, %v5370
  %v5372 = vmax.f32 %v5369, %v5371
  %v5373 = vmax.f32 %v5364, %v5365
  %v5374 = vmax.f32 %v5372, %v5373
  %5375 = vmax.xlane.f32.xlu0 %v5374
  %v5376 = vpop.xlane.xlu0 %5375
  %v5377 = vmul.f32 %v5376, %v4889
  %v5378 = vadd.f32 %v5338, %v5377
  %5379 = vrot.lane.b32.xlu0 %v4900, 36
  %v5380 = vpop.permute.xlu0 %5379
  %5381 = vrot.lane.b32.xlu0 %v4904, 36
  %v5382 = vpop.permute.xlu0 %5381
  %5383 = vrot.lane.b32.xlu0 %v4908, 36
  %v5384 = vpop.permute.xlu0 %5383
  %5385 = vrot.lane.b32.xlu0 %v4912, 36
  %v5386 = vpop.permute.xlu0 %5385
  %5387 = vrot.lane.b32.xlu0 %v4916, 36
  %v5388 = vpop.permute.xlu0 %5387
  %5389 = vrot.lane.b32.xlu0 %v4920, 36
  %v5390 = vpop.permute.xlu0 %5389
  %v5391 = vsel %vm4548, %v5380, %v5382
  %v5392 = vsel %vm4548, %v5382, %v5384
  %v5393 = vsel %vm4548, %v5384, %v5386
  %v5394 = vsel %vm4548, %v5386, %v5388
  %v5395 = vsel %vm4548, %v5388, %v5390
  %v5402 = vmul.f32 %v3449, %v5380
  %v5403 = vmul.f32 %v3450, %v5391
  %v5404 = vmul.f32 %v3451, %v5392
  %v5405 = vmul.f32 %v3452, %v5393
  %v5406 = vmul.f32 %v3453, %v5394
  %v5407 = vmul.f32 %v3454, %v5395
  %v5408 = vsel %vm5126, %v5402, -inf
  %v5409 = vmax.f32 %v5408, %v5406
  %v5410 = vsel %vm5129, %v5407, -inf
  %v5411 = vmax.f32 %v5403, %v5410
  %v5412 = vmax.f32 %v5409, %v5411
  %v5413 = vmax.f32 %v5404, %v5405
  %v5414 = vmax.f32 %v5412, %v5413
  %5415 = vmax.xlane.f32.xlu0 %v5414
  %v5416 = vpop.xlane.xlu0 %5415
  %v5417 = vmul.f32 %v5416, %v4944
  %v5418 = vadd.f32 %v5378, %v5417
  %5419 = vrot.lane.b32.xlu0 %v4955, 36
  %v5420 = vpop.permute.xlu0 %5419
  %5421 = vrot.lane.b32.xlu0 %v4959, 36
  %v5422 = vpop.permute.xlu0 %5421
  %5423 = vrot.lane.b32.xlu0 %v4963, 36
  %v5424 = vpop.permute.xlu0 %5423
  %5425 = vrot.lane.b32.xlu0 %v4967, 36
  %v5426 = vpop.permute.xlu0 %5425
  %5427 = vrot.lane.b32.xlu0 %v4971, 36
  %v5428 = vpop.permute.xlu0 %5427
  %5429 = vrot.lane.b32.xlu0 %v4975, 36
  %v5430 = vpop.permute.xlu0 %5429
  %v5431 = vsel %vm4548, %v5420, %v5422
  %v5432 = vsel %vm4548, %v5422, %v5424
  %v5433 = vsel %vm4548, %v5424, %v5426
  %v5434 = vsel %vm4548, %v5426, %v5428
  %v5435 = vsel %vm4548, %v5428, %v5430
  %v5442 = vmul.f32 %v3449, %v5420
  %v5443 = vmul.f32 %v3450, %v5431
  %v5444 = vmul.f32 %v3451, %v5432
  %v5445 = vmul.f32 %v3452, %v5433
  %v5446 = vmul.f32 %v3453, %v5434
  %v5447 = vmul.f32 %v3454, %v5435
  %v5448 = vsel %vm5126, %v5442, -inf
  %v5449 = vmax.f32 %v5448, %v5446
  %v5450 = vsel %vm5129, %v5447, -inf
  %v5451 = vmax.f32 %v5443, %v5450
  %v5452 = vmax.f32 %v5449, %v5451
  %v5453 = vmax.f32 %v5444, %v5445
  %v5454 = vmax.f32 %v5452, %v5453
  %5455 = vmax.xlane.f32.xlu0 %v5454
  %v5456 = vpop.xlane.xlu0 %5455
  %v5457 = vmul.f32 %v5456, %v4999
  %v5458 = vadd.f32 %v5418, %v5457
  %v5459 = vmax.f32 %v5458, 0.0
  %v5460 = vmul.f32 %v5459, %v5008
  %v5461 = vsel %vm5011, %v5460, 0.0
  %5462 = vadd.xlane.f32.xlu0 %v5461
  %v5463 = vpop.xlane.xlu0 %5462
  %v5464 = vadd.f32 %v5463, %v5020
  %5466 = vrot.lane.b32.xlu0 %v5464, 1
  %v5467 = vpop.permute.xlu0 %5466
  %vm5469 = vcmask 7168
  %v5470 = vsel %vm5469, %v5022, %v5467
  %v5471 = vld [vmem:[%s16] sm:$0x1]
  %v5472 = vpack.c.bf16 %v5470, %v5470
  %v5473 = vld [vmem:[%s17] sm:$0x3]
  %5475 = vset.pattern.permute.xlu0 0
  %5476 = vperm.xlu0 %5475, %v5473
  %v5477 = vpop.permute.xlu0 %5476
  %vm5479 = vcmask 64512
  %v5481 = vsel %vm5479, %v5471, 0
  %vm5483 = vcmask 1043456
  %v5485 = vsel %vm5483, %v5472, 0
  %5487 = vmatprep.subr.bf16.mxu0 0
  %5488 = vmatpush1.bf16.msra.mxu0 %v5485
  %5489 = vmatprep.subr.bf16.mxu0 0
  %5490 = vmatpush1.bf16.msra.mxu0 0
  %5491 = vmatprep.subr.bf16.mxu0 0
  %5492 = vmatpush1.bf16.msra.mxu0 0
  %5493 = vmatprep.subr.bf16.mxu0 0
  %5494 = vmatpush1.bf16.msra.mxu0 0
  %5495 = vmatprep.subr.bf16.mxu0 0
  %5496 = vmatpush1.bf16.msra.mxu0 0
  %5497 = vmatprep.subr.bf16.mxu0 0
  %5498 = vmatpush1.bf16.msra.mxu0 0
  %5499 = vmatprep.subr.bf16.mxu0 0
  %5500 = vmatpush1.bf16.msra.mxu0 0
  %5501 = vmatprep.subr.bf16.mxu0 0
  %5502 = vmatpush1.bf16.msra.mxu0 0
  %5503 = vmatprep.subr.bf16.mxu0 0
  %5504 = vmatpush1.bf16.msra.mxu0 0
  %5505 = vmatprep.subr.bf16.mxu0 0
  %5506 = vmatpush1.bf16.msra.mxu0 0
  %5507 = vmatprep.subr.bf16.mxu0 0
  %5508 = vmatpush1.bf16.msra.mxu0 0
  %5509 = vmatprep.subr.bf16.mxu0 0
  %5510 = vmatpush1.bf16.msra.mxu0 0
  %5511 = vmatprep.subr.bf16.mxu0 0
  %5512 = vmatpush1.bf16.msra.mxu0 0
  %5513 = vmatprep.subr.bf16.mxu0 0
  %5514 = vmatpush1.bf16.msra.mxu0 0
  %5515 = vmatprep.subr.bf16.mxu0 0
  %5516 = vmatpush1.bf16.msra.mxu0 0
  %5517 = vmatprep.subr.bf16.mxu0 0
  %5518 = vmatpush1.bf16.msra.mxu0 0
  %5519 = vmatprep.mubr.bf16.mxu0 0
  %5520 = vmatmul.mubr.bf16.gmra.mrb[0].mxu0 %v5481
  %v5521 = vpop.f32.mrb[0].mxu0
  %v5522 = vadd.f32 %v5477, %v5521
  %v5523 = vpop.f32.mrb[0].mxu0
  %v5524 = vpop.f32.mrb[0].mxu0
  %v5525 = vpop.f32.mrb[0].mxu0
  %5526 = vdwg.mxu0
  %v5527 = vmax.f32 %v5522, 0.0
  %v5528 = vld [vmem:[%s18] sm:$0xf]
  %v5529 = vpack.c.bf16 %v5527, %v5527
  %v5530 = vld [vmem:[%s19] sm:$0xff]
  %5532 = vset.pattern.permute.xlu0 0
  %5533 = vperm.xlu0 %5532, %v5530
  %v5534 = vpop.permute.xlu0 %5533
  %vm5536 = vcmask 15360
  %v5538 = vsel %vm5536, %v5528, 0
  %v5541 = vsel %vm4433, %v5529, 0
  %5543 = vmatprep.subr.bf16.mxu0 0
  %5544 = vmatpush1.bf16.msra.mxu0 %v5541
  %5545 = vmatprep.subr.bf16.mxu0 0
  %5546 = vmatpush1.bf16.msra.mxu0 0
  %5547 = vmatprep.subr.bf16.mxu0 0
  %5548 = vmatpush1.bf16.msra.mxu0 0
  %5549 = vmatprep.subr.bf16.mxu0 0
  %5550 = vmatpush1.bf16.msra.mxu0 0
  %5551 = vmatprep.subr.bf16.mxu0 0
  %5552 = vmatpush1.bf16.msra.mxu0 0
  %5553 = vmatprep.subr.bf16.mxu0 0
  %5554 = vmatpush1.bf16.msra.mxu0 0
  %5555 = vmatprep.subr.bf16.mxu0 0
  %5556 = vmatpush1.bf16.msra.mxu0 0
  %5557 = vmatprep.subr.bf16.mxu0 0
  %5558 = vmatpush1.bf16.msra.mxu0 0
  %5559 = vmatprep.subr.bf16.mxu0 0
  %5560 = vmatpush1.bf16.msra.mxu0 0
  %5561 = vmatprep.subr.bf16.mxu0 0
  %5562 = vmatpush1.bf16.msra.mxu0 0
  %5563 = vmatprep.subr.bf16.mxu0 0
  %5564 = vmatpush1.bf16.msra.mxu0 0
  %5565 = vmatprep.subr.bf16.mxu0 0
  %5566 = vmatpush1.bf16.msra.mxu0 0
  %5567 = vmatprep.subr.bf16.mxu0 0
  %5568 = vmatpush1.bf16.msra.mxu0 0
  %5569 = vmatprep.subr.bf16.mxu0 0
  %5570 = vmatpush1.bf16.msra.mxu0 0
  %5571 = vmatprep.subr.bf16.mxu0 0
  %5572 = vmatpush1.bf16.msra.mxu0 0
  %5573 = vmatprep.subr.bf16.mxu0 0
  %5574 = vmatpush1.bf16.msra.mxu0 0
  %5575 = vmatprep.mubr.bf16.mxu0 0
  %5576 = vmatmul.mubr.bf16.gmra.mrb[0].mxu0 %v5538
  %v5577 = vpop.f32.mrb[0].mxu0
  %v5578 = vadd.f32 %v5534, %v5577
  %v5579 = vpop.f32.mrb[0].mxu0
  %v5580 = vpop.f32.mrb[0].mxu0
  %v5581 = vpop.f32.mrb[0].mxu0
  %5582 = vdwg.mxu0
  %v5583 = vxor.u32 %v5578, 2147483648
  %v5584 = vmul.f32 %v5583, 1.442695
  %v5585 = vpow.pop %v5584
  %v5586 = vadd.f32 %v5585, 1.0
  %v5587 = vrcp.pop %v5586
  %v5588 = vmul.f32 1.0, %v5587
  %v5589 = vadd.f32 %v5588, 1.0
  %v5590 = vpack.c.bf16 %v5589, %v5589
  %v5591 = vld [vmem:[%s11] sm:$0xff]
  %v5592 = vld [vmem:[%s11 + $0x8] sm:$0x7]
  %v5595 = vcombine.high %v5591, %v5591
  %v5597 = vunpack.c.l.s4 1966171168
  %v5598 = vunpack.c.0.s8 %v5597
  %v5599 = vlaneseq
  %v5600 = vshrl.u32 %v5599, 7
  %v5601 = vsub.s32 %v5598, %v5600
  %v5602 = vrot.slane %v5591, %v5601
  %v5604 = vunpack.c.l.s4 1966171168
  %v5605 = vunpack.c.0.s8 %v5604
  %v5606 = vlaneseq
  %v5607 = vshrl.u32 %v5606, 7
  %v5608 = vsub.s32 %v5605, %v5607
  %v5609 = vrot.slane %v5595, %v5608
  %v5610 = vcombine.high %v5602, %v5602
  %v5611 = vcombine.high %v5609, %v5609
  %v5613 = vunpack.c.l.s4 1966171168
  %v5614 = vunpack.c.0.s8 %v5613
  %v5615 = vlaneseq
  %v5616 = vshrl.u32 %v5615, 7
  %v5617 = vsub.s32 %v5614, %v5616
  %v5618 = vrot.slane %v5602, %v5617
  %v5620 = vunpack.c.l.s4 1966171168
  %v5621 = vunpack.c.0.s8 %v5620
  %v5622 = vlaneseq
  %v5623 = vshrl.u32 %v5622, 7
  %v5624 = vsub.s32 %v5621, %v5623
  %v5625 = vrot.slane %v5609, %v5624
  %v5627 = vunpack.c.l.s4 1966171168
  %v5628 = vunpack.c.0.s8 %v5627
  %v5629 = vlaneseq
  %v5630 = vshrl.u32 %v5629, 7
  %v5631 = vsub.s32 %v5628, %v5630
  %v5632 = vrot.slane %v5610, %v5631
  %v5634 = vunpack.c.l.s4 1966171168
  %v5635 = vunpack.c.0.s8 %v5634
  %v5636 = vlaneseq
  %v5637 = vshrl.u32 %v5636, 7
  %v5638 = vsub.s32 %v5635, %v5637
  %v5639 = vrot.slane %v5611, %v5638
  %v5640 = vcombine.high %v5618, %v5618
  %v5641 = vcombine.high %v5625, %v5625
  %v5642 = vcombine.high %v5632, %v5632
  %v5643 = vcombine.high %v5639, %v5639
  %v5645 = vunpack.c.l.s4 1966171168
  %v5646 = vunpack.c.0.s8 %v5645
  %v5647 = vlaneseq
  %v5648 = vshrl.u32 %v5647, 7
  %v5649 = vsub.s32 %v5646, %v5648
  %v5650 = vrot.slane %v5592, %v5649
  %v5651 = vcombine.high %v5650, %v5650
  %v5653 = vunpack.c.l.s4 1966171168
  %v5654 = vunpack.c.0.s8 %v5653
  %v5655 = vlaneseq
  %v5656 = vshrl.u32 %v5655, 7
  %v5657 = vsub.s32 %v5654, %v5656
  %v5658 = vrot.slane %v5650, %v5657
  %v5660 = vunpack.c.l.s4 1966171168
  %v5661 = vunpack.c.0.s8 %v5660
  %v5662 = vlaneseq
  %v5663 = vshrl.u32 %v5662, 7
  %v5664 = vsub.s32 %v5661, %v5663
  %v5665 = vrot.slane %v5651, %v5664
  %v5666 = vcombine.high %v5658, %v5658
  %v5668 = vsel %vm5536, %v5590, 0
  %v5671 = vsel %vm4433, %v5618, 0
  %v5674 = vsel %vm4433, %v5632, 0
  %v5677 = vsel %vm4433, %v5640, 0
  %v5680 = vsel %vm4433, %v5642, 0
  %v5683 = vsel %vm4433, %v5625, 0
  %v5686 = vsel %vm4433, %v5639, 0
  %v5689 = vsel %vm4433, %v5641, 0
  %v5692 = vsel %vm4433, %v5643, 0
  %v5695 = vsel %vm4433, %v5658, 0
  %v5698 = vsel %vm4433, %v5665, 0
  %v5701 = vsel %vm4433, %v5666, 0
  %5703 = vmatprep.subr.bf16.mxu0 %v5674
  %5704 = vmatpush1.bf16.msra.mxu0 %v5671
  %5705 = vmatprep.subr.bf16.mxu0 0
  %5706 = vmatpush1.bf16.msra.mxu0 0
  %5707 = vmatprep.subr.bf16.mxu0 0
  %5708 = vmatpush1.bf16.msra.mxu0 0
  %5709 = vmatprep.subr.bf16.mxu0 0
  %5710 = vmatpush1.bf16.msra.mxu0 0
  %5711 = vmatprep.subr.bf16.mxu0 0
  %5712 = vmatpush1.bf16.msra.mxu0 0
  %5713 = vmatprep.subr.bf16.mxu0 0
  %5714 = vmatpush1.bf16.msra.mxu0 0
  %5715 = vmatprep.subr.bf16.mxu0 0
  %5716 = vmatpush1.bf16.msra.mxu0 0
  %5717 = vmatprep.subr.bf16.mxu0 0
  %5718 = vmatpush1.bf16.msra.mxu0 0
  %5719 = vmatprep.subr.bf16.mxu0 0
  %5720 = vmatpush1.bf16.msra.mxu0 0
  %5721 = vmatprep.subr.bf16.mxu0 0
  %5722 = vmatpush1.bf16.msra.mxu0 0
  %5723 = vmatprep.subr.bf16.mxu0 0
  %5724 = vmatpush1.bf16.msra.mxu0 0
  %5725 = vmatprep.subr.bf16.mxu0 0
  %5726 = vmatpush1.bf16.msra.mxu0 0
  %5727 = vmatprep.subr.bf16.mxu0 0
  %5728 = vmatpush1.bf16.msra.mxu0 0
  %5729 = vmatprep.subr.bf16.mxu0 0
  %5730 = vmatpush1.bf16.msra.mxu0 0
  %5731 = vmatprep.subr.bf16.mxu0 0
  %5732 = vmatpush1.bf16.msra.mxu0 0
  %5733 = vmatprep.subr.bf16.mxu0 0
  %5734 = vmatpush1.bf16.msra.mxu0 0
  %5735 = vmatprep.mubr.bf16.mxu0 0
  %5736 = vmatmul.mubr.bf16.gmra.mrb[0].mxu0 %v5668
  %v5737 = vpop.f32.mrb[0].mxu0
  %v5738 = vadd.f32 0.0, %v5737
  %v5739 = vpop.f32.mrb[0].mxu0
  %v5740 = vadd.f32 0.0, %v5739
  %v5741 = vpop.f32.mrb[0].mxu0
  %v5742 = vpop.f32.mrb[0].mxu0
  %5743 = vdwg.mxu0
  %5744 = vmatprep.subr.bf16.mxu0 %v5680
  %5745 = vmatpush1.bf16.msra.mxu0 %v5677
  %5746 = vmatprep.subr.bf16.mxu0 0
  %5747 = vmatpush1.bf16.msra.mxu0 0
  %5748 = vmatprep.subr.bf16.mxu0 0
  %5749 = vmatpush1.bf16.msra.mxu0 0
  %5750 = vmatprep.subr.bf16.mxu0 0
  %5751 = vmatpush1.bf16.msra.mxu0 0
  %5752 = vmatprep.subr.bf16.mxu0 0
  %5753 = vmatpush1.bf16.msra.mxu0 0
  %5754 = vmatprep.subr.bf16.mxu0 0
  %5755 = vmatpush1.bf16.msra.mxu0 0
  %5756 = vmatprep.subr.bf16.mxu0 0
  %5757 = vmatpush1.bf16.msra.mxu0 0
  %5758 = vmatprep.subr.bf16.mxu0 0
  %5759 = vmatpush1.bf16.msra.mxu0 0
  %5760 = vmatprep.subr.bf16.mxu0 0
  %5761 = vmatpush1.bf16.msra.mxu0 0
  %5762 = vmatprep.subr.bf16.mxu0 0
  %5763 = vmatpush1.bf16.msra.mxu0 0
  %5764 = vmatprep.subr.bf16.mxu0 0
  %5765 = vmatpush1.bf16.msra.mxu0 0
  %5766 = vmatprep.subr.bf16.mxu0 0
  %5767 = vmatpush1.bf16.msra.mxu0 0
  %5768 = vmatprep.subr.bf16.mxu0 0
  %5769 = vmatpush1.bf16.msra.mxu0 0
  %5770 = vmatprep.subr.bf16.mxu0 0
  %5771 = vmatpush1.bf16.msra.mxu0 0
  %5772 = vmatprep.subr.bf16.mxu0 0
  %5773 = vmatpush1.bf16.msra.mxu0 0
  %5774 = vmatprep.subr.bf16.mxu0 0
  %5775 = vmatpush1.bf16.msra.mxu0 0
  %5776 = vmatprep.mubr.bf16.mxu0 0
  %5777 = vmatmul.mubr.bf16.gmra.mrb[0].mxu0 %v5668
  %v5778 = vpop.f32.mrb[0].mxu0
  %v5779 = vadd.f32 0.0, %v5778
  %v5780 = vpop.f32.mrb[0].mxu0
  %v5781 = vadd.f32 0.0, %v5780
  %v5782 = vpop.f32.mrb[0].mxu0
  %v5783 = vpop.f32.mrb[0].mxu0
  %5784 = vdwg.mxu0
  %5785 = vmatprep.subr.bf16.mxu0 %v5686
  %5786 = vmatpush1.bf16.msra.mxu0 %v5683
  %5787 = vmatprep.subr.bf16.mxu0 0
  %5788 = vmatpush1.bf16.msra.mxu0 0
  %5789 = vmatprep.subr.bf16.mxu0 0
  %5790 = vmatpush1.bf16.msra.mxu0 0
  %5791 = vmatprep.subr.bf16.mxu0 0
  %5792 = vmatpush1.bf16.msra.mxu0 0
  %5793 = vmatprep.subr.bf16.mxu0 0
  %5794 = vmatpush1.bf16.msra.mxu0 0
  %5795 = vmatprep.subr.bf16.mxu0 0
  %5796 = vmatpush1.bf16.msra.mxu0 0
  %5797 = vmatprep.subr.bf16.mxu0 0
  %5798 = vmatpush1.bf16.msra.mxu0 0
  %5799 = vmatprep.subr.bf16.mxu0 0
  %5800 = vmatpush1.bf16.msra.mxu0 0
  %5801 = vmatprep.subr.bf16.mxu0 0
  %5802 = vmatpush1.bf16.msra.mxu0 0
  %5803 = vmatprep.subr.bf16.mxu0 0
  %5804 = vmatpush1.bf16.msra.mxu0 0
  %5805 = vmatprep.subr.bf16.mxu0 0
  %5806 = vmatpush1.bf16.msra.mxu0 0
  %5807 = vmatprep.subr.bf16.mxu0 0
  %5808 = vmatpush1.bf16.msra.mxu0 0
  %5809 = vmatprep.subr.bf16.mxu0 0
  %5810 = vmatpush1.bf16.msra.mxu0 0
  %5811 = vmatprep.subr.bf16.mxu0 0
  %5812 = vmatpush1.bf16.msra.mxu0 0
  %5813 = vmatprep.subr.bf16.mxu0 0
  %5814 = vmatpush1.bf16.msra.mxu0 0
  %5815 = vmatprep.subr.bf16.mxu0 0
  %5816 = vmatpush1.bf16.msra.mxu0 0
  %5817 = vmatprep.mubr.bf16.mxu0 0
  %5818 = vmatmul.mubr.bf16.gmra.mrb[0].mxu0 %v5668
  %v5819 = vpop.f32.mrb[0].mxu0
  %v5820 = vadd.f32 0.0, %v5819
  %v5821 = vpop.f32.mrb[0].mxu0
  %v5822 = vadd.f32 0.0, %v5821
  %v5823 = vpop.f32.mrb[0].mxu0
  %v5824 = vpop.f32.mrb[0].mxu0
  %5825 = vdwg.mxu0
  %5826 = vmatprep.subr.bf16.mxu0 %v5692
  %5827 = vmatpush1.bf16.msra.mxu0 %v5689
  %5828 = vmatprep.subr.bf16.mxu0 0
  %5829 = vmatpush1.bf16.msra.mxu0 0
  %5830 = vmatprep.subr.bf16.mxu0 0
  %5831 = vmatpush1.bf16.msra.mxu0 0
  %5832 = vmatprep.subr.bf16.mxu0 0
  %5833 = vmatpush1.bf16.msra.mxu0 0
  %5834 = vmatprep.subr.bf16.mxu0 0
  %5835 = vmatpush1.bf16.msra.mxu0 0
  %5836 = vmatprep.subr.bf16.mxu0 0
  %5837 = vmatpush1.bf16.msra.mxu0 0
  %5838 = vmatprep.subr.bf16.mxu0 0
  %5839 = vmatpush1.bf16.msra.mxu0 0
  %5840 = vmatprep.subr.bf16.mxu0 0
  %5841 = vmatpush1.bf16.msra.mxu0 0
  %5842 = vmatprep.subr.bf16.mxu0 0
  %5843 = vmatpush1.bf16.msra.mxu0 0
  %5844 = vmatprep.subr.bf16.mxu0 0
  %5845 = vmatpush1.bf16.msra.mxu0 0
  %5846 = vmatprep.subr.bf16.mxu0 0
  %5847 = vmatpush1.bf16.msra.mxu0 0
  %5848 = vmatprep.subr.bf16.mxu0 0
  %5849 = vmatpush1.bf16.msra.mxu0 0
  %5850 = vmatprep.subr.bf16.mxu0 0
  %5851 = vmatpush1.bf16.msra.mxu0 0
  %5852 = vmatprep.subr.bf16.mxu0 0
  %5853 = vmatpush1.bf16.msra.mxu0 0
  %5854 = vmatprep.subr.bf16.mxu0 0
  %5855 = vmatpush1.bf16.msra.mxu0 0
  %5856 = vmatprep.subr.bf16.mxu0 0
  %5857 = vmatpush1.bf16.msra.mxu0 0
  %5858 = vmatprep.mubr.bf16.mxu0 0
  %5859 = vmatmul.mubr.bf16.gmra.mrb[0].mxu0 %v5668
  %v5860 = vpop.f32.mrb[0].mxu0
  %v5861 = vadd.f32 0.0, %v5860
  %v5862 = vpop.f32.mrb[0].mxu0
  %v5863 = vadd.f32 0.0, %v5862
  %v5864 = vpop.f32.mrb[0].mxu0
  %v5865 = vpop.f32.mrb[0].mxu0
  %5866 = vdwg.mxu0
  %5867 = vmatprep.subr.bf16.mxu0 %v5698
  %5868 = vmatpush1.bf16.msra.mxu0 %v5695
  %5869 = vmatprep.subr.bf16.mxu0 0
  %5870 = vmatpush1.bf16.msra.mxu0 0
  %5871 = vmatprep.subr.bf16.mxu0 0
  %5872 = vmatpush1.bf16.msra.mxu0 0
  %5873 = vmatprep.subr.bf16.mxu0 0
  %5874 = vmatpush1.bf16.msra.mxu0 0
  %5875 = vmatprep.subr.bf16.mxu0 0
  %5876 = vmatpush1.bf16.msra.mxu0 0
  %5877 = vmatprep.subr.bf16.mxu0 0
  %5878 = vmatpush1.bf16.msra.mxu0 0
  %5879 = vmatprep.subr.bf16.mxu0 0
  %5880 = vmatpush1.bf16.msra.mxu0 0
  %5881 = vmatprep.subr.bf16.mxu0 0
  %5882 = vmatpush1.bf16.msra.mxu0 0
  %5883 = vmatprep.subr.bf16.mxu0 0
  %5884 = vmatpush1.bf16.msra.mxu0 0
  %5885 = vmatprep.subr.bf16.mxu0 0
  %5886 = vmatpush1.bf16.msra.mxu0 0
  %5887 = vmatprep.subr.bf16.mxu0 0
  %5888 = vmatpush1.bf16.msra.mxu0 0
  %5889 = vmatprep.subr.bf16.mxu0 0
  %5890 = vmatpush1.bf16.msra.mxu0 0
  %5891 = vmatprep.subr.bf16.mxu0 0
  %5892 = vmatpush1.bf16.msra.mxu0 0
  %5893 = vmatprep.subr.bf16.mxu0 0
  %5894 = vmatpush1.bf16.msra.mxu0 0
  %5895 = vmatprep.subr.bf16.mxu0 0
  %5896 = vmatpush1.bf16.msra.mxu0 0
  %5897 = vmatprep.subr.bf16.mxu0 0
  %5898 = vmatpush1.bf16.msra.mxu0 0
  %5899 = vmatprep.mubr.bf16.mxu0 0
  %5900 = vmatmul.mubr.bf16.gmra.mrb[0].mxu0 %v5668
  %v5901 = vpop.f32.mrb[0].mxu0
  %v5902 = vadd.f32 0.0, %v5901
  %v5903 = vpop.f32.mrb[0].mxu0
  %v5904 = vadd.f32 0.0, %v5903
  %v5905 = vpop.f32.mrb[0].mxu0
  %v5906 = vpop.f32.mrb[0].mxu0
  %5907 = vdwg.mxu0
  %5908 = vmatprep.subr.bf16.mxu0 0
  %5909 = vmatpush1.bf16.msra.mxu0 %v5701
  %5910 = vmatprep.subr.bf16.mxu0 0
  %5911 = vmatpush1.bf16.msra.mxu0 0
  %5912 = vmatprep.subr.bf16.mxu0 0
  %5913 = vmatpush1.bf16.msra.mxu0 0
  %5914 = vmatprep.subr.bf16.mxu0 0
  %5915 = vmatpush1.bf16.msra.mxu0 0
  %5916 = vmatprep.subr.bf16.mxu0 0
  %5917 = vmatpush1.bf16.msra.mxu0 0
  %5918 = vmatprep.subr.bf16.mxu0 0
  %5919 = vmatpush1.bf16.msra.mxu0 0
  %5920 = vmatprep.subr.bf16.mxu0 0
  %5921 = vmatpush1.bf16.msra.mxu0 0
  %5922 = vmatprep.subr.bf16.mxu0 0
  %5923 = vmatpush1.bf16.msra.mxu0 0
  %5924 = vmatprep.subr.bf16.mxu0 0
  %5925 = vmatpush1.bf16.msra.mxu0 0
  %5926 = vmatprep.subr.bf16.mxu0 0
  %5927 = vmatpush1.bf16.msra.mxu0 0
  %5928 = vmatprep.subr.bf16.mxu0 0
  %5929 = vmatpush1.bf16.msra.mxu0 0
  %5930 = vmatprep.subr.bf16.mxu0 0
  %5931 = vmatpush1.bf16.msra.mxu0 0
  %5932 = vmatprep.subr.bf16.mxu0 0
  %5933 = vmatpush1.bf16.msra.mxu0 0
  %5934 = vmatprep.subr.bf16.mxu0 0
  %5935 = vmatpush1.bf16.msra.mxu0 0
  %5936 = vmatprep.subr.bf16.mxu0 0
  %5937 = vmatpush1.bf16.msra.mxu0 0
  %5938 = vmatprep.subr.bf16.mxu0 0
  %5939 = vmatpush1.bf16.msra.mxu0 0
  %5940 = vmatprep.mubr.bf16.mxu0 0
  %5941 = vmatmul.mubr.bf16.gmra.mrb[0].mxu0 %v5668
  %v5942 = vpop.f32.mrb[0].mxu0
  %v5943 = vadd.f32 0.0, %v5942
  %v5944 = vpop.f32.mrb[0].mxu0
  %v5945 = vpop.f32.mrb[0].mxu0
  %v5946 = vpop.f32.mrb[0].mxu0
  %5947 = vdwg.mxu0
  %v5948 = vmul.f32 %v3444, %v5738
  %v5949 = vmul.f32 %v3445, %v5740
  %v5950 = vmul.f32 %v3446, %v5779
  %v5951 = vmul.f32 %v3447, %v5781
  %v5952 = vmul.f32 %v3448, %v5820
  %v5953 = vmul.f32 %v3449, %v5822
  %v5954 = vmul.f32 %v3450, %v5861
  %v5955 = vmul.f32 %v3451, %v5863
  %v5956 = vmul.f32 %v3452, %v5902
  %v5957 = vmul.f32 %v3453, %v5904
  %v5958 = vmul.f32 %v3454, %v5943
  %v5959 = vld [vmem:[%s4] sm:$0xf]
  %v5960 = vpack.c.bf16 %v5948, %v5948
  %v5961 = vpack.c.bf16 %v5949, %v5949
  %v5962 = vpack.c.bf16 %v5950, %v5950
  %v5963 = vpack.c.bf16 %v5951, %v5951
  %v5964 = vpack.c.bf16 %v5952, %v5952
  %v5965 = vpack.c.bf16 %v5953, %v5953
  %v5966 = vpack.c.bf16 %v5954, %v5954
  %v5967 = vpack.c.bf16 %v5955, %v5955
  %v5968 = vpack.c.bf16 %v5956, %v5956
  %v5969 = vpack.c.bf16 %v5957, %v5957
  %v5970 = vpack.c.bf16 %v5958, %v5958
  %v5972 = vsel %vm5479, %v5959, 0
  %v5975 = vsel %vm5483, %v5960, 0
  %v5978 = vsel %vm5483, %v5961, 0
  %v5981 = vsel %vm5483, %v5962, 0
  %v5984 = vsel %vm5483, %v5963, 0
  %v5987 = vsel %vm5483, %v5964, 0
  %v5990 = vsel %vm5483, %v5965, 0
  %v5993 = vsel %vm5483, %v5966, 0
  %v5996 = vsel %vm5483, %v5967, 0
  %v5999 = vsel %vm5483, %v5968, 0
  %v6002 = vsel %vm5483, %v5969, 0
  %v6005 = vsel %vm5483, %v5970, 0
  %6007 = vmatprep.subr.bf16.mxu0 %v5978
  %6008 = vmatpush1.bf16.msra.mxu0 %v5975
  %6009 = vmatprep.subr.bf16.mxu0 0
  %6010 = vmatpush1.bf16.msra.mxu0 0
  %6011 = vmatprep.subr.bf16.mxu0 0
  %6012 = vmatpush1.bf16.msra.mxu0 0
  %6013 = vmatprep.subr.bf16.mxu0 0
  %6014 = vmatpush1.bf16.msra.mxu0 0
  %6015 = vmatprep.subr.bf16.mxu0 0
  %6016 = vmatpush1.bf16.msra.mxu0 0
  %6017 = vmatprep.subr.bf16.mxu0 0
  %6018 = vmatpush1.bf16.msra.mxu0 0
  %6019 = vmatprep.subr.bf16.mxu0 0
  %6020 = vmatpush1.bf16.msra.mxu0 0
  %6021 = vmatprep.subr.bf16.mxu0 0
  %6022 = vmatpush1.bf16.msra.mxu0 0
  %6023 = vmatprep.subr.bf16.mxu0 0
  %6024 = vmatpush1.bf16.msra.mxu0 0
  %6025 = vmatprep.subr.bf16.mxu0 0
  %6026 = vmatpush1.bf16.msra.mxu0 0
  %6027 = vmatprep.subr.bf16.mxu0 0
  %6028 = vmatpush1.bf16.msra.mxu0 0
  %6029 = vmatprep.subr.bf16.mxu0 0
  %6030 = vmatpush1.bf16.msra.mxu0 0
  %6031 = vmatprep.subr.bf16.mxu0 0
  %6032 = vmatpush1.bf16.msra.mxu0 0
  %6033 = vmatprep.subr.bf16.mxu0 0
  %6034 = vmatpush1.bf16.msra.mxu0 0
  %6035 = vmatprep.subr.bf16.mxu0 0
  %6036 = vmatpush1.bf16.msra.mxu0 0
  %6037 = vmatprep.subr.bf16.mxu0 0
  %6038 = vmatpush1.bf16.msra.mxu0 0
  %6039 = vmatprep.mubr.bf16.mxu0 0
  %6040 = vmatmul.mubr.bf16.gmra.mrb[0].mxu0 %v5972
  %v6041 = vpop.f32.mrb[0].mxu0
  %v6042 = vadd.f32 0.0, %v6041
  %v6043 = vpop.f32.mrb[0].mxu0
  %v6044 = vadd.f32 0.0, %v6043
  %v6045 = vpop.f32.mrb[0].mxu0
  %v6046 = vpop.f32.mrb[0].mxu0
  %6047 = vdwg.mxu0
  %6048 = vmatprep.subr.bf16.mxu0 %v5984
  %6049 = vmatpush1.bf16.msra.mxu0 %v5981
  %6050 = vmatprep.subr.bf16.mxu0 0
  %6051 = vmatpush1.bf16.msra.mxu0 0
  %6052 = vmatprep.subr.bf16.mxu0 0
  %6053 = vmatpush1.bf16.msra.mxu0 0
  %6054 = vmatprep.subr.bf16.mxu0 0
  %6055 = vmatpush1.bf16.msra.mxu0 0
  %6056 = vmatprep.subr.bf16.mxu0 0
  %6057 = vmatpush1.bf16.msra.mxu0 0
  %6058 = vmatprep.subr.bf16.mxu0 0
  %6059 = vmatpush1.bf16.msra.mxu0 0
  %6060 = vmatprep.subr.bf16.mxu0 0
  %6061 = vmatpush1.bf16.msra.mxu0 0
  %6062 = vmatprep.subr.bf16.mxu0 0
  %6063 = vmatpush1.bf16.msra.mxu0 0
  %6064 = vmatprep.subr.bf16.mxu0 0
  %6065 = vmatpush1.bf16.msra.mxu0 0
  %6066 = vmatprep.subr.bf16.mxu0 0
  %6067 = vmatpush1.bf16.msra.mxu0 0
  %6068 = vmatprep.subr.bf16.mxu0 0
  %6069 = vmatpush1.bf16.msra.mxu0 0
  %6070 = vmatprep.subr.bf16.mxu0 0
  %6071 = vmatpush1.bf16.msra.mxu0 0
  %6072 = vmatprep.subr.bf16.mxu0 0
  %6073 = vmatpush1.bf16.msra.mxu0 0
  %6074 = vmatprep.subr.bf16.mxu0 0
  %6075 = vmatpush1.bf16.msra.mxu0 0
  %6076 = vmatprep.subr.bf16.mxu0 0
  %6077 = vmatpush1.bf16.msra.mxu0 0
  %6078 = vmatprep.subr.bf16.mxu0 0
  %6079 = vmatpush1.bf16.msra.mxu0 0
  %6080 = vmatprep.mubr.bf16.mxu0 0
  %6081 = vmatmul.mubr.bf16.gmra.mrb[0].mxu0 %v5972
  %v6082 = vpop.f32.mrb[0].mxu0
  %v6083 = vadd.f32 0.0, %v6082
  %v6084 = vpop.f32.mrb[0].mxu0
  %v6085 = vadd.f32 0.0, %v6084
  %v6086 = vpop.f32.mrb[0].mxu0
  %v6087 = vpop.f32.mrb[0].mxu0
  %6088 = vdwg.mxu0
  %6089 = vmatprep.subr.bf16.mxu0 %v5990
  %6090 = vmatpush1.bf16.msra.mxu0 %v5987
  %6091 = vmatprep.subr.bf16.mxu0 0
  %6092 = vmatpush1.bf16.msra.mxu0 0
  %6093 = vmatprep.subr.bf16.mxu0 0
  %6094 = vmatpush1.bf16.msra.mxu0 0
  %6095 = vmatprep.subr.bf16.mxu0 0
  %6096 = vmatpush1.bf16.msra.mxu0 0
  %6097 = vmatprep.subr.bf16.mxu0 0
  %6098 = vmatpush1.bf16.msra.mxu0 0
  %6099 = vmatprep.subr.bf16.mxu0 0
  %6100 = vmatpush1.bf16.msra.mxu0 0
  %6101 = vmatprep.subr.bf16.mxu0 0
  %6102 = vmatpush1.bf16.msra.mxu0 0
  %6103 = vmatprep.subr.bf16.mxu0 0
  %6104 = vmatpush1.bf16.msra.mxu0 0
  %6105 = vmatprep.subr.bf16.mxu0 0
  %6106 = vmatpush1.bf16.msra.mxu0 0
  %6107 = vmatprep.subr.bf16.mxu0 0
  %6108 = vmatpush1.bf16.msra.mxu0 0
  %6109 = vmatprep.subr.bf16.mxu0 0
  %6110 = vmatpush1.bf16.msra.mxu0 0
  %6111 = vmatprep.subr.bf16.mxu0 0
  %6112 = vmatpush1.bf16.msra.mxu0 0
  %6113 = vmatprep.subr.bf16.mxu0 0
  %6114 = vmatpush1.bf16.msra.mxu0 0
  %6115 = vmatprep.subr.bf16.mxu0 0
  %6116 = vmatpush1.bf16.msra.mxu0 0
  %6117 = vmatprep.subr.bf16.mxu0 0
  %6118 = vmatpush1.bf16.msra.mxu0 0
  %6119 = vmatprep.subr.bf16.mxu0 0
  %6120 = vmatpush1.bf16.msra.mxu0 0
  %6121 = vmatprep.mubr.bf16.mxu0 0
  %6122 = vmatmul.mubr.bf16.gmra.mrb[0].mxu0 %v5972
  %v6123 = vpop.f32.mrb[0].mxu0
  %v6124 = vadd.f32 0.0, %v6123
  %v6125 = vpop.f32.mrb[0].mxu0
  %v6126 = vadd.f32 0.0, %v6125
  %v6127 = vpop.f32.mrb[0].mxu0
  %v6128 = vpop.f32.mrb[0].mxu0
  %6129 = vdwg.mxu0
  %6130 = vmatprep.subr.bf16.mxu0 %v5996
  %6131 = vmatpush1.bf16.msra.mxu0 %v5993
  %6132 = vmatprep.subr.bf16.mxu0 0
  %6133 = vmatpush1.bf16.msra.mxu0 0
  %6134 = vmatprep.subr.bf16.mxu0 0
  %6135 = vmatpush1.bf16.msra.mxu0 0
  %6136 = vmatprep.subr.bf16.mxu0 0
  %6137 = vmatpush1.bf16.msra.mxu0 0
  %6138 = vmatprep.subr.bf16.mxu0 0
  %6139 = vmatpush1.bf16.msra.mxu0 0
  %6140 = vmatprep.subr.bf16.mxu0 0
  %6141 = vmatpush1.bf16.msra.mxu0 0
  %6142 = vmatprep.subr.bf16.mxu0 0
  %6143 = vmatpush1.bf16.msra.mxu0 0
  %6144 = vmatprep.subr.bf16.mxu0 0
  %6145 = vmatpush1.bf16.msra.mxu0 0
  %6146 = vmatprep.subr.bf16.mxu0 0
  %6147 = vmatpush1.bf16.msra.mxu0 0
  %6148 = vmatprep.subr.bf16.mxu0 0
  %6149 = vmatpush1.bf16.msra.mxu0 0
  %6150 = vmatprep.subr.bf16.mxu0 0
  %6151 = vmatpush1.bf16.msra.mxu0 0
  %6152 = vmatprep.subr.bf16.mxu0 0
  %6153 = vmatpush1.bf16.msra.mxu0 0
  %6154 = vmatprep.subr.bf16.mxu0 0
  %6155 = vmatpush1.bf16.msra.mxu0 0
  %6156 = vmatprep.subr.bf16.mxu0 0
  %6157 = vmatpush1.bf16.msra.mxu0 0
  %6158 = vmatprep.subr.bf16.mxu0 0
  %6159 = vmatpush1.bf16.msra.mxu0 0
  %6160 = vmatprep.subr.bf16.mxu0 0
  %6161 = vmatpush1.bf16.msra.mxu0 0
  %6162 = vmatprep.mubr.bf16.mxu0 0
  %6163 = vmatmul.mubr.bf16.gmra.mrb[0].mxu0 %v5972
  %v6164 = vpop.f32.mrb[0].mxu0
  %v6165 = vadd.f32 0.0, %v6164
  %v6166 = vpop.f32.mrb[0].mxu0
  %v6167 = vadd.f32 0.0, %v6166
  %v6168 = vpop.f32.mrb[0].mxu0
  %v6169 = vpop.f32.mrb[0].mxu0
  %6170 = vdwg.mxu0
  %6171 = vmatprep.subr.bf16.mxu0 %v6002
  %6172 = vmatpush1.bf16.msra.mxu0 %v5999
  %6173 = vmatprep.subr.bf16.mxu0 0
  %6174 = vmatpush1.bf16.msra.mxu0 0
  %6175 = vmatprep.subr.bf16.mxu0 0
  %6176 = vmatpush1.bf16.msra.mxu0 0
  %6177 = vmatprep.subr.bf16.mxu0 0
  %6178 = vmatpush1.bf16.msra.mxu0 0
  %6179 = vmatprep.subr.bf16.mxu0 0
  %6180 = vmatpush1.bf16.msra.mxu0 0
  %6181 = vmatprep.subr.bf16.mxu0 0
  %6182 = vmatpush1.bf16.msra.mxu0 0
  %6183 = vmatprep.subr.bf16.mxu0 0
  %6184 = vmatpush1.bf16.msra.mxu0 0
  %6185 = vmatprep.subr.bf16.mxu0 0
  %6186 = vmatpush1.bf16.msra.mxu0 0
  %6187 = vmatprep.subr.bf16.mxu0 0
  %6188 = vmatpush1.bf16.msra.mxu0 0
  %6189 = vmatprep.subr.bf16.mxu0 0
  %6190 = vmatpush1.bf16.msra.mxu0 0
  %6191 = vmatprep.subr.bf16.mxu0 0
  %6192 = vmatpush1.bf16.msra.mxu0 0
  %6193 = vmatprep.subr.bf16.mxu0 0
  %6194 = vmatpush1.bf16.msra.mxu0 0
  %6195 = vmatprep.subr.bf16.mxu0 0
  %6196 = vmatpush1.bf16.msra.mxu0 0
  %6197 = vmatprep.subr.bf16.mxu0 0
  %6198 = vmatpush1.bf16.msra.mxu0 0
  %6199 = vmatprep.subr.bf16.mxu0 0
  %6200 = vmatpush1.bf16.msra.mxu0 0
  %6201 = vmatprep.subr.bf16.mxu0 0
  %6202 = vmatpush1.bf16.msra.mxu0 0
  %6203 = vmatprep.mubr.bf16.mxu0 0
  %6204 = vmatmul.mubr.bf16.gmra.mrb[0].mxu0 %v5972
  %v6205 = vpop.f32.mrb[0].mxu0
  %v6206 = vadd.f32 0.0, %v6205
  %v6207 = vpop.f32.mrb[0].mxu0
  %v6208 = vadd.f32 0.0, %v6207
  %v6209 = vpop.f32.mrb[0].mxu0
  %v6210 = vpop.f32.mrb[0].mxu0
  %6211 = vdwg.mxu0
  %6212 = vmatprep.subr.bf16.mxu0 0
  %6213 = vmatpush1.bf16.msra.mxu0 %v6005
  %6214 = vmatprep.subr.bf16.mxu0 0
  %6215 = vmatpush1.bf16.msra.mxu0 0
  %6216 = vmatprep.subr.bf16.mxu0 0
  %6217 = vmatpush1.bf16.msra.mxu0 0
  %6218 = vmatprep.subr.bf16.mxu0 0
  %6219 = vmatpush1.bf16.msra.mxu0 0
  %6220 = vmatprep.subr.bf16.mxu0 0
  %6221 = vmatpush1.bf16.msra.mxu0 0
  %6222 = vmatprep.subr.bf16.mxu0 0
  %6223 = vmatpush1.bf16.msra.mxu0 0
  %6224 = vmatprep.subr.bf16.mxu0 0
  %6225 = vmatpush1.bf16.msra.mxu0 0
  %6226 = vmatprep.subr.bf16.mxu0 0
  %6227 = vmatpush1.bf16.msra.mxu0 0
  %6228 = vmatprep.subr.bf16.mxu0 0
  %6229 = vmatpush1.bf16.msra.mxu0 0
  %6230 = vmatprep.subr.bf16.mxu0 0
  %6231 = vmatpush1.bf16.msra.mxu0 0
  %6232 = vmatprep.subr.bf16.mxu0 0
  %6233 = vmatpush1.bf16.msra.mxu0 0
  %6234 = vmatprep.subr.bf16.mxu0 0
  %6235 = vmatpush1.bf16.msra.mxu0 0
  %6236 = vmatprep.subr.bf16.mxu0 0
  %6237 = vmatpush1.bf16.msra.mxu0 0
  %6238 = vmatprep.subr.bf16.mxu0 0
  %6239 = vmatpush1.bf16.msra.mxu0 0
  %6240 = vmatprep.subr.bf16.mxu0 0
  %6241 = vmatpush1.bf16.msra.mxu0 0
  %6242 = vmatprep.subr.bf16.mxu0 0
  %6243 = vmatpush1.bf16.msra.mxu0 0
  %6244 = vmatprep.mubr.bf16.mxu0 0
  %6245 = vmatmul.mubr.bf16.gmra.mrb[0].mxu0 %v5972
  %v6246 = vpop.f32.mrb[0].mxu0
  %v6247 = vadd.f32 0.0, %v6246
  %v6248 = vpop.f32.mrb[0].mxu0
  %v6249 = vpop.f32.mrb[0].mxu0
  %v6250 = vpop.f32.mrb[0].mxu0
  %6251 = vdwg.mxu0
  %v6252 = vld [vmem:[%s5] sm:$0xff]
  %v6253 = vld [vmem:[%s6] sm:$0xff]
  %v6254 = vmul.f32 %v6042, %v3304
  %v6255 = vmul.f32 %v6044, %v3308
  %v6256 = vmul.f32 %v6083, %v3312
  %v6257 = vmul.f32 %v6085, %v3316
  %v6258 = vmul.f32 %v6124, %v3320
  %v6259 = vmul.f32 %v6126, %v3324
  %v6260 = vmul.f32 %v6165, %v3328
  %v6261 = vmul.f32 %v6167, %v3332
  %v6262 = vmul.f32 %v6206, %v3336
  %v6263 = vmul.f32 %v6208, %v3340
  %v6264 = vmul.f32 %v6247, %v3344
  %v6265 = vadd.f32 %v6254, %v6255
  %v6266 = vadd.f32 %v6265, %v6256
  %v6267 = vadd.f32 %v6266, %v6257
  %v6268 = vadd.f32 %v6267, %v6258
  %v6269 = vadd.f32 %v6268, %v6259
  %v6270 = vadd.f32 %v6269, %v6260
  %v6271 = vadd.f32 %v6270, %v6261
  %v6272 = vadd.f32 %v6271, %v6262
  %v6273 = vadd.f32 %v6272, %v6263
  %v6274 = vadd.f32 %v6273, %v6264
  %6275 = vadd.xlane.f32.xlu0 %v6274
  %v6276 = vpop.xlane.xlu0 %6275
  %v6277 = vmul.f32 %v6254, %v6042
  %v6278 = vmul.f32 %v6255, %v6044
  %v6279 = vmul.f32 %v6256, %v6083
  %v6280 = vmul.f32 %v6257, %v6085
  %v6281 = vmul.f32 %v6258, %v6124
  %v6282 = vmul.f32 %v6259, %v6126
  %v6283 = vmul.f32 %v6260, %v6165
  %v6284 = vmul.f32 %v6261, %v6167
  %v6285 = vmul.f32 %v6262, %v6206
  %v6286 = vmul.f32 %v6263, %v6208
  %v6287 = vmul.f32 %v6264, %v6247
  %v6288 = vadd.f32 %v6277, %v6278
  %v6289 = vadd.f32 %v6288, %v6279
  %v6290 = vadd.f32 %v6289, %v6280
  %v6291 = vadd.f32 %v6290, %v6281
  %v6292 = vadd.f32 %v6291, %v6282
  %v6293 = vadd.f32 %v6292, %v6283
  %v6294 = vadd.f32 %v6293, %v6284
  %v6295 = vadd.f32 %v6294, %v6285
  %v6296 = vadd.f32 %v6295, %v6286
  %v6297 = vadd.f32 %v6296, %v6287
  %6298 = vadd.xlane.f32.xlu0 %v6297
  %v6299 = vpop.xlane.xlu0 %6298
  %v6300 = vmul.f32 %v6276, 0.001953125
  %v6301 = vmul.f32 %v6299, 0.001953125
  %v6302 = vmul.f32 %v6300, %v6300
  %v6303 = vsub.f32 %v6301, %v6302
  %v6304 = vmax.f32 %v6303, 0.0
  %v6305 = vadd.f32 %v6304, 1e-05
  %v6306 = vrsqrt.pop %v6305
  %v6307 = vmul.f32 %v6252, %v6306
  %v6308 = vmul.f32 %v6300, %v6307
  %v6309 = vsub.f32 %v6253, %v6308
  %6311 = vset.pattern.permute.xlu0 0
  %6312 = vperm.xlu0 %6311, %v6307
  %v6313 = vpop.permute.xlu0 %6312
  %v6315 = vmul.f32 %v6042, %v6313
  %v6316 = vmul.f32 %v6044, %v6313
  %v6317 = vmul.f32 %v6083, %v6313
  %v6318 = vmul.f32 %v6085, %v6313
  %v6319 = vmul.f32 %v6124, %v6313
  %v6320 = vmul.f32 %v6126, %v6313
  %v6321 = vmul.f32 %v6165, %v6313
  %v6322 = vmul.f32 %v6167, %v6313
  %v6323 = vmul.f32 %v6206, %v6313
  %v6324 = vmul.f32 %v6208, %v6313
  %v6325 = vmul.f32 %v6247, %v6313
  %6327 = vset.pattern.permute.xlu0 0
  %6328 = vperm.xlu0 %6327, %v6309
  %v6329 = vpop.permute.xlu0 %6328
  %v6331 = vadd.f32 %v6315, %v6329
  %v6332 = vadd.f32 %v6316, %v6329
  %v6333 = vadd.f32 %v6317, %v6329
  %v6334 = vadd.f32 %v6318, %v6329
  %v6335 = vadd.f32 %v6319, %v6329
  %v6336 = vadd.f32 %v6320, %v6329
  %v6337 = vadd.f32 %v6321, %v6329
  %v6338 = vadd.f32 %v6322, %v6329
  %v6339 = vadd.f32 %v6323, %v6329
  %v6340 = vadd.f32 %v6324, %v6329
  %v6341 = vadd.f32 %v6325, %v6329
  %v6342 = vmax.f32 %v6331, 0.0
  %v6343 = vmax.f32 %v6332, 0.0
  %v6344 = vmax.f32 %v6333, 0.0
  %v6345 = vmax.f32 %v6334, 0.0
  %v6346 = vmax.f32 %v6335, 0.0
  %v6347 = vmax.f32 %v6336, 0.0
  %v6348 = vmax.f32 %v6337, 0.0
  %v6349 = vmax.f32 %v6338, 0.0
  %v6350 = vmax.f32 %v6339, 0.0
  %v6351 = vmax.f32 %v6340, 0.0
  %v6352 = vmax.f32 %v6341, 0.0
  %6353 = vst [vmem:[%s20] sm:$0xff] %v6342
  %6354 = vst [vmem:[%s20 + $0x8] sm:$0xff] %v6343
  %6355 = vst [vmem:[%s20 + $0x10] sm:$0xff] %v6344
  %6356 = vst [vmem:[%s20 + $0x18] sm:$0xff] %v6345
  %6357 = vst [vmem:[%s20 + $0x20] sm:$0xff] %v6346
  %6358 = vst [vmem:[%s20 + $0x28] sm:$0xff] %v6347
  %6359 = vst [vmem:[%s20 + $0x30] sm:$0xff] %v6348
  %6360 = vst [vmem:[%s20 + $0x38] sm:$0xff] %v6349
  %6361 = vst [vmem:[%s20 + $0x40] sm:$0xff] %v6350
  %6362 = vst [vmem:[%s20 + $0x48] sm:$0xff] %v6351
  %6363 = vst [vmem:[%s20 + $0x50] sm:$0xff] %v6352
  // Predicated region
  $region82: #{mscaf_forward.1} parent=0 // pred_check
    _
  $region83: #{mscaf_forward.1} parent=0 // pred_check_branch
    %6365 = sbr.rel (0) target = $region85
  $region84: #{mscaf_forward.1} parent=0 // pred_region
    _
  $region85: #{mscaf_forward.1} parent=0 // pred_fallthru
    _
  // Predicated region
  $region86: #{mscaf_forward.1} parent=0 // pred_check
    _
  $region87: #{mscaf_forward.1} parent=0 // pred_check_branch
    %6367 = sbr.rel (0) target = $region89
  $region88: #{mscaf_forward.1} parent=0 // pred_region
    _
  $region89: #{mscaf_forward.1} parent=0 // pred_fallthru
    _

</llo_original>
